<compile_context>
chip_gen: v7x
topology: tpu7x:2x2x1
jax: 0.10.0
libtpu: 0.0.40
codegen_flags: <defaults>
</compile_context>

<pallas_src>
import jax
import jax.numpy as jnp
from jax import lax
from jax.experimental import pallas as pl
from jax.experimental.pallas import tpu as pltpu

# ----- model sizes (small, consistent with the module's forward contract) -----
B = 8          # batch (full sublane group; must stay a power of 2 for the attention mask)
FEAT_DIM = 16  # Feat_Dim
T_ENC = 8      # Feats_Len (encoder time steps)
H = 32         # hidden size (encoder & decoder)
E = 32         # decoder embedding size
V = 32         # vocab size
DEC_T = 6      # decoder steps (= target_variable.shape[1] - 1)
LANES = 128

# Row offsets inside the packed bf16 weight slab. All offsets / lengths are multiples of
# 16 rows so every sub-array starts on a bf16 (16,128) tile boundary (free static slices).
_R_WIHE = 0      # [FEAT_DIM, 3H]   encoder input projection
_R_WHHE = 16     # [H, 3H]          encoder recurrent weights
_R_EMBP = 48     # [V, 3H]          emb @ W_ih_d + b_ih_d  (pre-folded)
_R_WHHD = 80     # [H, 3H]          decoder recurrent weights
_R_WCOMB = 112   # [2H, H]          fused attention-combine linear
_R_WO = 176      # [H, V]           output projection
_W_ROWS = 208


def _gru_from_gx(gx, h, w_hh_bf, b_hh_b):
    """GRU cell step given a precomputed input projection gx = x @ W_ih + b_ih (f32).

    PyTorch gate order (r, z, n):
      r = sigmoid(gx_r + gh_r); z = sigmoid(gx_z + gh_z)
      n = tanh(gx_n + r * gh_n)        (gh includes b_hh, matching PyTorch)
      h' = (1 - z) * n + z * h
    bf16 operands on the MXU dot, f32 accumulation, f32 elementwise gate math.
    """
    gh = jnp.dot(h.astype(jnp.bfloat16), w_hh_bf,
                 preferred_element_type=jnp.float32) + b_hh_b
    rz = jax.nn.sigmoid(gx[:, :2 * H] + gh[:, :2 * H])   # fused r/z: one EUP issue
    r = rz[:, :H]
    z = rz[:, H:]
    n = jnp.tanh(gx[:, 2 * H:] + r * gh[:, 2 * H:])
    return (1.0 - z) * n + z * h


def seq2seq_kernel(
    x2d_ref,        # [T_ENC*B, FEAT_DIM] bf16  encoder input, time-major, flattened
    sos_ref,        # [B, 1]              i32   SOS / first decoder input symbols
    wslab_ref,      # [_W_ROWS, 128]      bf16  packed weight slab
    bslab_ref,      # [8, 128]            f32   packed bias slab
    dec_out_ref,    # [DEC_T, B, V]       f32   log-softmax outputs, time-major
    sym_ref,        # [B, DEC_T]          i32   greedy symbols (final layout)
):
    # -------------------- encoder: single-layer GRU over time --------------------
    w_ihE = wslab_ref[_R_WIHE:_R_WIHE + FEAT_DIM, 0:3 * H]          # bf16 [F, 3H]
    whhE = wslab_ref[_R_WHHE:_R_WHHE + H, 0:3 * H]                  # bf16 [H, 3H]
    b_ihE = bslab_ref[0:1, 0:3 * H]                                 # f32  [1, 3H]
    bhhE_b = jnp.broadcast_to(bslab_ref[1:2, 0:3 * H], (B, 3 * H))  # hoisted broadcast

    # Hoisted input projection: one (T*B, F) @ (F, 3H) MXU push for all time steps.
    gx_all = jnp.dot(x2d_ref[...], w_ihE,
                     preferred_element_type=jnp.float32) + b_ihE    # [T*B, 3H] f32

    h = jnp.zeros((B, H), jnp.float32)
    enc_list = []
    for t in range(T_ENC):                                          # fully unrolled
        h = _gru_from_gx(gx_all[t * B:(t + 1) * B, :], h, whhE, bhhE_b)
        enc_list.append(h.astype(jnp.bfloat16))
    enc_flat = jnp.concatenate(enc_list, axis=0)                    # [T_ENC*B, H] bf16
    # TODO(synk): input_lengths-based masking of encoder outputs / attention not implemented.

    # -------------------- decoder: GRU + dot attention, greedy --------------------
    # Decoder-only loads / broadcasts placed AFTER the encoder loop (vreg pressure).
    embP = wslab_ref[_R_EMBP:_R_EMBP + V, 0:3 * H]                  # bf16 [V, 3H]
    whhD = wslab_ref[_R_WHHD:_R_WHHD + H, 0:3 * H]                  # bf16 [H, 3H]
    wC = wslab_ref[_R_WCOMB:_R_WCOMB + 2 * H, 0:H]                  # bf16 [2H, H]
    wO = wslab_ref[_R_WO:_R_WO + H, 0:V]                            # bf16 [H, V]
    bhhD_b = jnp.broadcast_to(bslab_ref[2:3, 0:3 * H], (B, 3 * H))
    bC_b = jnp.broadcast_to(bslab_ref[3:4, 0:H], (B, H))
    bO_b = jnp.broadcast_to(bslab_ref[4:5, 0:V], (B, V))

    vidx = lax.broadcasted_iota(jnp.int32, (B, V), 1)
    # Attention validity mask (hoisted): scores[b, t*B + b'] is valid iff b' == b.
    col = lax.broadcasted_iota(jnp.int32, (B, T_ENC * B), 1)
    row = lax.broadcasted_iota(jnp.int32, (B, T_ENC * B), 0)
    neg_mask = jnp.where(jnp.bitwise_and(col, B - 1) == row, 0.0, -1e30)  # B is 2^k

    dh = h                                       # decoder init = final encoder hidden
    sym = sos_ref[...]                           # [B, 1] int32 (SOS)
    sym_cols = []
    for t in range(DEC_T):                                           # fully unrolled
        # embedding + input projection fused: onehot @ (emb @ W_ih_d + b_ih_d)
        onehot = (vidx == sym).astype(jnp.bfloat16)                  # [B, V]
        gx_d = jnp.dot(onehot, embP, preferred_element_type=jnp.float32)  # [B, 3H]
        dh = _gru_from_gx(gx_d, dh, whhD, bhhD_b)

        # dot-product attention as two masked MXU dots (no XLU lane-reduction chain)
        scores = lax.dot_general(dh.astype(jnp.bfloat16), enc_flat,
                                 dimension_numbers=(((1,), (1,)), ((), ())),
                                 preferred_element_type=jnp.float32) + neg_mask  # [B, T*B]
        m_s = jnp.max(scores, axis=-1, keepdims=True)
        wexp = jnp.exp(scores - m_s)
        attn = wexp * pl.reciprocal(jnp.sum(wexp, axis=-1, keepdims=True), approx=True)
        ctx = jnp.dot(attn.astype(jnp.bfloat16), enc_flat,
                      preferred_element_type=jnp.float32)            # [B, H]

        # fused combine(context, hidden) -> tanh -> vocab logits -> log_softmax
        cat = jnp.concatenate([ctx, dh], axis=-1).astype(jnp.bfloat16)     # [B, 2H]
        comb = jnp.tanh(jnp.dot(cat, wC, preferred_element_type=jnp.float32) + bC_b)
        logits = jnp.dot(comb.astype(jnp.bfloat16), wO,
                         preferred_element_type=jnp.float32) + bO_b        # [B, V]

        m_l = jnp.max(logits, axis=-1, keepdims=True)
        zc = logits - m_l
        logp = zc - jnp.log(jnp.sum(jnp.exp(zc), axis=-1, keepdims=True))
        dec_out_ref[t] = logp                       # per-step store (frees 6 live vregs)

        # greedy symbol: first index attaining the max logit (== max log-prob)
        sym = jnp.min(jnp.where(logits >= m_l, vidx, V),
                      axis=-1, keepdims=True).astype(jnp.int32)            # [B, 1]
        sym_cols.append(sym)

    sym_ref[...] = jnp.concatenate(sym_cols, axis=1)                       # [B, DEC_T]


@jax.jit
def seq2seq_forward(input_variable, target_variable, w_slab, b_slab):
    """input_variable: [B, Feat_Dim, Feats_Len] f32 ; target_variable: [B, DEC_T+1] i32."""
    # NCW -> time-major, flattened for the hoisted encoder input projection; bf16 for MXU.
    x2d = jnp.transpose(input_variable, (2, 0, 1)).reshape(T_ENC * B, FEAT_DIM)
    x2d = x2d.astype(jnp.bfloat16)
    # only the SOS column is consumed (teacher_forcing_ratio = 0)
    sos = target_variable[:, :1].astype(jnp.int32)

    dec_out, syms = pl.pallas_call(
        seq2seq_kernel,
        out_shape=(
            jax.ShapeDtypeStruct((DEC_T, B, V), jnp.float32),
            jax.ShapeDtypeStruct((B, DEC_T), jnp.int32),
        ),
        compiler_params=pltpu.CompilerParams(vmem_limit_bytes=4 << 20),
    )(x2d, sos, w_slab, b_slab)

    # match torch.stack(decoder_outputs, dim=2) -> [B, V, DEC_T]
    final_dec_outputs = jnp.transpose(dec_out, (1, 2, 0))
    # match torch.stack(sequence_symbols, dim=1) -> [B, DEC_T] (already in that layout)
    return final_dec_outputs, syms


def _pad_rows_cols(w, rows):
    r, c = w.shape
    return jnp.pad(w, ((0, rows - r), (0, LANES - c)))


def pack_params(params):
    """One-time, weight-only pre-folding + packing into two lane-padded VMEM slabs."""
    (w_ih_e, w_hh_e, b_ih_e, b_hh_e, emb, w_ih_d, w_hh_d, b_ih_d, b_hh_d,
     w_c_ctx, w_c_hid, b_c, w_o, b_o) = params

    emb_proj = jnp.dot(emb, w_ih_d) + b_ih_d                 # [V, 3H]
    w_comb = jnp.concatenate([w_c_ctx, w_c_hid], axis=0)     # [2H, H]

    w_slab = jnp.concatenate([
        _pad_rows_cols(w_ih_e, 16),      # rows   0:16
        _pad_rows_cols(w_hh_e, 32),      # rows  16:48
        _pad_rows_cols(emb_proj, 32),    # rows  48:80
        _pad_rows_cols(w_hh_d, 32),      # rows  80:112
        _pad_rows_cols(w_comb, 64),      # rows 112:176
        _pad_rows_cols(w_o, 32),         # rows 176:208
    ], axis=0).astype(jnp.bfloat16)      # [_W_ROWS, 128] bf16

    b_slab = jnp.concatenate([
        _pad_rows_cols(b_ih_e, 1),       # row 0
        _pad_rows_cols(b_hh_e, 1),       # row 1
        _pad_rows_cols(b_hh_d, 1),       # row 2
        _pad_rows_cols(b_c, 1),          # row 3
        _pad_rows_cols(b_o, 1),          # row 4
        jnp.zeros((3, LANES), jnp.float32),
    ], axis=0)                           # [8, 128] f32
    assert w_slab.shape == (_W_ROWS, LANES)
    return w_slab, b_slab


def init_params(key):
    ks = jax.random.split(key, 14)
    s = 0.1
    w_ih_e = s * jax.random.normal(ks[0], (FEAT_DIM, 3 * H), jnp.float32)
    w_hh_e = s * jax.random.normal(ks[1], (H, 3 * H), jnp.float32)
    b_ih_e = s * jax.random.normal(ks[2], (1, 3 * H), jnp.float32)
    b_hh_e = s * jax.random.normal(ks[3], (1, 3 * H), jnp.float32)
    emb = s * jax.random.normal(ks[4], (V, E), jnp.float32)
    w_ih_d = s * jax.random.normal(ks[5], (E, 3 * H), jnp.float32)
    w_hh_d = s * jax.random.normal(ks[6], (H, 3 * H), jnp.float32)
    b_ih_d = s * jax.random.normal(ks[7], (1, 3 * H), jnp.float32)
    b_hh_d = s * jax.random.normal(ks[8], (1, 3 * H), jnp.float32)
    w_c_ctx = s * jax.random.normal(ks[9], (H, H), jnp.float32)
    w_c_hid = s * jax.random.normal(ks[10], (H, H), jnp.float32)
    b_c = s * jax.random.normal(ks[11], (1, H), jnp.float32)
    w_o = s * jax.random.normal(ks[12], (H, V), jnp.float32)
    b_o = s * jax.random.normal(ks[13], (1, V), jnp.float32)
    return (w_ih_e, w_hh_e, b_ih_e, b_hh_e, emb, w_ih_d, w_hh_d, b_ih_d, b_hh_d,
            w_c_ctx, w_c_hid, b_c, w_o, b_o)


if __name__ == "__main__":
    key = jax.random.PRNGKey(0)
    k_x, k_t, k_p = jax.random.split(key, 3)

    # input_variable: [B, Feat_Dim, Feats_Len]
    input_variable = jax.random.normal(k_x, (B, FEAT_DIM, T_ENC), jnp.float32)
    # target_variable: [B, Dec_T + 1] int ids (only the SOS column is consumed)
    target_variable = jax.random.randint(k_t, (B, DEC_T + 1), 0, V, jnp.int32)

    params = init_params(k_p)
    w_slab, b_slab = pack_params(params)   # one-time weight folding + slab packing

    final_dec_outputs, final_sequence_symbols = seq2seq_forward(
        input_variable, target_variable, w_slab, b_slab)
    jax.block_until_ready((final_dec_outputs, final_sequence_symbols))

    assert final_dec_outputs.shape == (B, V, DEC_T)
    assert final_sequence_symbols.shape == (B, DEC_T)
    # each decoder output column is a log-softmax distribution -> probs sum to 1
    probs_sum = jnp.exp(final_dec_outputs).sum(axis=1)
    assert bool(jnp.allclose(probs_sum, 1.0, atol=1e-4))
    # greedy symbols must be valid vocab ids
    assert bool(((final_sequence_symbols >= 0) & (final_sequence_symbols < V)).all())

    print("KERNEL_OK")
</pallas_src>

<mosaic_0001>
module attributes {stable_mosaic.version = 11 : i64} {
  func.func @seq2seq_kernel(%arg0: memref<64x16xbf16, #tpu.memory_space<vmem>>, %arg1: memref<8x1xi32, #tpu.memory_space<vmem>>, %arg2: memref<208x128xbf16, #tpu.memory_space<vmem>>, %arg3: memref<8x128xf32, #tpu.memory_space<vmem>>, %arg4: memref<6x8x32xf32, #tpu.memory_space<vmem>>, %arg5: memref<8x6xi32, #tpu.memory_space<vmem>>) attributes {dimension_semantics = [], scalar_prefetch = 0 : i64, scratch_operands = 0 : i64, tpu.core_type = #tpu.core_type<tc>} {
    %c0 = arith.constant 0 : index
    %c0_0 = arith.constant 0 : index
    %0 = vector.load %arg2[%c0, %c0_0] : memref<208x128xbf16, #tpu.memory_space<vmem>>, vector<16x96xbf16>
    %c16 = arith.constant 16 : index
    %c0_1 = arith.constant 0 : index
    %1 = vector.load %arg2[%c16, %c0_1] : memref<208x128xbf16, #tpu.memory_space<vmem>>, vector<32x96xbf16>
    %c0_2 = arith.constant 0 : index
    %c0_3 = arith.constant 0 : index
    %2 = vector.load %arg3[%c0_2, %c0_3] : memref<8x128xf32, #tpu.memory_space<vmem>>, vector<1x96xf32>
    %c1 = arith.constant 1 : index
    %c0_4 = arith.constant 0 : index
    %3 = vector.load %arg3[%c1, %c0_4] : memref<8x128xf32, #tpu.memory_space<vmem>>, vector<1x96xf32>
    %4 = vector.shape_cast %3 : vector<1x96xf32> to vector<1x96xf32>
    %5 = vector.broadcast %4 : vector<1x96xf32> to vector<8x96xf32>
    %c0_5 = arith.constant 0 : index
    %c0_6 = arith.constant 0 : index
    %6 = vector.load %arg0[%c0_5, %c0_6] : memref<64x16xbf16, #tpu.memory_space<vmem>>, vector<64x16xbf16>
    %cst = arith.constant dense<0.000000e+00> : vector<64x96xf32>
    %7 = tpu.matmul %6, %0, %cst {dimension_numbers = #tpu.dot_dimension_numbers<[1], [0], [0], [1], [0, 0, 1, 1], [], []>} : vector<64x16xbf16>, vector<16x96xbf16>, vector<64x96xf32> -> vector<64x96xf32>
    %8 = vector.broadcast %2 : vector<1x96xf32> to vector<64x96xf32>
    %9 = arith.addf %7, %8 : vector<64x96xf32>
    %cst_7 = arith.constant 0.000000e+00 : f32
    %10 = vector.broadcast %cst_7 : f32 to vector<8x32xf32>
    %11 = vector.extract_strided_slice %9 {offsets = [0, 0], sizes = [8, 96], strides = [1, 1]} : vector<64x96xf32> to vector<8x96xf32>
    %12 = arith.truncf %10 : vector<8x32xf32> to vector<8x32xbf16>
    %cst_8 = arith.constant dense<0.000000e+00> : vector<8x96xf32>
    %13 = tpu.matmul %12, %1, %cst_8 {dimension_numbers = #tpu.dot_dimension_numbers<[1], [0], [0], [1], [0, 0, 1, 1], [], []>} : vector<8x32xbf16>, vector<32x96xbf16>, vector<8x96xf32> -> vector<8x96xf32>
    %14 = arith.addf %13, %5 : vector<8x96xf32>
    %15 = vector.extract_strided_slice %11 {offsets = [0, 0], sizes = [8, 64], strides = [1, 1]} : vector<8x96xf32> to vector<8x64xf32>
    %16 = vector.extract_strided_slice %14 {offsets = [0, 0], sizes = [8, 64], strides = [1, 1]} : vector<8x96xf32> to vector<8x64xf32>
    %17 = arith.addf %15, %16 : vector<8x64xf32>
    %18 = arith.negf %17 : vector<8x64xf32>
    %19 = math.exp %18 : vector<8x64xf32>
    %cst_9 = arith.constant 1.000000e+00 : f32
    %20 = vector.broadcast %cst_9 : f32 to vector<8x64xf32>
    %21 = arith.addf %20, %19 : vector<8x64xf32>
    %22 = arith.divf %20, %21 : vector<8x64xf32>
    %23 = vector.extract_strided_slice %22 {offsets = [0, 0], sizes = [8, 32], strides = [1, 1]} : vector<8x64xf32> to vector<8x32xf32>
    %24 = vector.extract_strided_slice %22 {offsets = [0, 32], sizes = [8, 32], strides = [1, 1]} : vector<8x64xf32> to vector<8x32xf32>
    %25 = vector.extract_strided_slice %11 {offsets = [0, 64], sizes = [8, 32], strides = [1, 1]} : vector<8x96xf32> to vector<8x32xf32>
    %26 = vector.extract_strided_slice %14 {offsets = [0, 64], sizes = [8, 32], strides = [1, 1]} : vector<8x96xf32> to vector<8x32xf32>
    %27 = arith.mulf %23, %26 : vector<8x32xf32>
    %28 = arith.addf %25, %27 : vector<8x32xf32>
    %29 = math.tanh %28 : vector<8x32xf32>
    %cst_10 = arith.constant 1.000000e+00 : f32
    %30 = vector.broadcast %cst_10 : f32 to vector<8x32xf32>
    %31 = arith.subf %30, %24 : vector<8x32xf32>
    %32 = arith.mulf %31, %29 : vector<8x32xf32>
    %33 = arith.mulf %24, %10 : vector<8x32xf32>
    %34 = arith.addf %32, %33 : vector<8x32xf32>
    %35 = arith.truncf %34 : vector<8x32xf32> to vector<8x32xbf16>
    %36 = vector.extract_strided_slice %9 {offsets = [8, 0], sizes = [8, 96], strides = [1, 1]} : vector<64x96xf32> to vector<8x96xf32>
    %37 = arith.truncf %34 : vector<8x32xf32> to vector<8x32xbf16>
    %cst_11 = arith.constant dense<0.000000e+00> : vector<8x96xf32>
    %38 = tpu.matmul %37, %1, %cst_11 {dimension_numbers = #tpu.dot_dimension_numbers<[1], [0], [0], [1], [0, 0, 1, 1], [], []>} : vector<8x32xbf16>, vector<32x96xbf16>, vector<8x96xf32> -> vector<8x96xf32>
    %39 = arith.addf %38, %5 : vector<8x96xf32>
    %40 = vector.extract_strided_slice %36 {offsets = [0, 0], sizes = [8, 64], strides = [1, 1]} : vector<8x96xf32> to vector<8x64xf32>
    %41 = vector.extract_strided_slice %39 {offsets = [0, 0], sizes = [8, 64], strides = [1, 1]} : vector<8x96xf32> to vector<8x64xf32>
    %42 = arith.addf %40, %41 : vector<8x64xf32>
    %43 = arith.negf %42 : vector<8x64xf32>
    %44 = math.exp %43 : vector<8x64xf32>
    %cst_12 = arith.constant 1.000000e+00 : f32
    %45 = vector.broadcast %cst_12 : f32 to vector<8x64xf32>
    %46 = arith.addf %45, %44 : vector<8x64xf32>
    %47 = arith.divf %45, %46 : vector<8x64xf32>
    %48 = vector.extract_strided_slice %47 {offsets = [0, 0], sizes = [8, 32], strides = [1, 1]} : vector<8x64xf32> to vector<8x32xf32>
    %49 = vector.extract_strided_slice %47 {offsets = [0, 32], sizes = [8, 32], strides = [1, 1]} : vector<8x64xf32> to vector<8x32xf32>
    %50 = vector.extract_strided_slice %36 {offsets = [0, 64], sizes = [8, 32], strides = [1, 1]} : vector<8x96xf32> to vector<8x32xf32>
    %51 = vector.extract_strided_slice %39 {offsets = [0, 64], sizes = [8, 32], strides = [1, 1]} : vector<8x96xf32> to vector<8x32xf32>
    %52 = arith.mulf %48, %51 : vector<8x32xf32>
    %53 = arith.addf %50, %52 : vector<8x32xf32>
    %54 = math.tanh %53 : vector<8x32xf32>
    %cst_13 = arith.constant 1.000000e+00 : f32
    %55 = vector.broadcast %cst_13 : f32 to vector<8x32xf32>
    %56 = arith.subf %55, %49 : vector<8x32xf32>
    %57 = arith.mulf %56, %54 : vector<8x32xf32>
    %58 = arith.mulf %49, %34 : vector<8x32xf32>
    %59 = arith.addf %57, %58 : vector<8x32xf32>
    %60 = arith.truncf %59 : vector<8x32xf32> to vector<8x32xbf16>
    %61 = vector.extract_strided_slice %9 {offsets = [16, 0], sizes = [8, 96], strides = [1, 1]} : vector<64x96xf32> to vector<8x96xf32>
    %62 = arith.truncf %59 : vector<8x32xf32> to vector<8x32xbf16>
    %cst_14 = arith.constant dense<0.000000e+00> : vector<8x96xf32>
    %63 = tpu.matmul %62, %1, %cst_14 {dimension_numbers = #tpu.dot_dimension_numbers<[1], [0], [0], [1], [0, 0, 1, 1], [], []>} : vector<8x32xbf16>, vector<32x96xbf16>, vector<8x96xf32> -> vector<8x96xf32>
    %64 = arith.addf %63, %5 : vector<8x96xf32>
    %65 = vector.extract_strided_slice %61 {offsets = [0, 0], sizes = [8, 64], strides = [1, 1]} : vector<8x96xf32> to vector<8x64xf32>
    %66 = vector.extract_strided_slice %64 {offsets = [0, 0], sizes = [8, 64], strides = [1, 1]} : vector<8x96xf32> to vector<8x64xf32>
    %67 = arith.addf %65, %66 : vector<8x64xf32>
    %68 = arith.negf %67 : vector<8x64xf32>
    %69 = math.exp %68 : vector<8x64xf32>
    %cst_15 = arith.constant 1.000000e+00 : f32
    %70 = vector.broadcast %cst_15 : f32 to vector<8x64xf32>
    %71 = arith.addf %70, %69 : vector<8x64xf32>
    %72 = arith.divf %70, %71 : vector<8x64xf32>
    %73 = vector.extract_strided_slice %72 {offsets = [0, 0], sizes = [8, 32], strides = [1, 1]} : vector<8x64xf32> to vector<8x32xf32>
    %74 = vector.extract_strided_slice %72 {offsets = [0, 32], sizes = [8, 32], strides = [1, 1]} : vector<8x64xf32> to vector<8x32xf32>
    %75 = vector.extract_strided_slice %61 {offsets = [0, 64], sizes = [8, 32], strides = [1, 1]} : vector<8x96xf32> to vector<8x32xf32>
    %76 = vector.extract_strided_slice %64 {offsets = [0, 64], sizes = [8, 32], strides = [1, 1]} : vector<8x96xf32> to vector<8x32xf32>
    %77 = arith.mulf %73, %76 : vector<8x32xf32>
    %78 = arith.addf %75, %77 : vector<8x32xf32>
    %79 = math.tanh %78 : vector<8x32xf32>
    %cst_16 = arith.constant 1.000000e+00 : f32
    %80 = vector.broadcast %cst_16 : f32 to vector<8x32xf32>
    %81 = arith.subf %80, %74 : vector<8x32xf32>
    %82 = arith.mulf %81, %79 : vector<8x32xf32>
    %83 = arith.mulf %74, %59 : vector<8x32xf32>
    %84 = arith.addf %82, %83 : vector<8x32xf32>
    %85 = arith.truncf %84 : vector<8x32xf32> to vector<8x32xbf16>
    %86 = vector.extract_strided_slice %9 {offsets = [24, 0], sizes = [8, 96], strides = [1, 1]} : vector<64x96xf32> to vector<8x96xf32>
    %87 = arith.truncf %84 : vector<8x32xf32> to vector<8x32xbf16>
    %cst_17 = arith.constant dense<0.000000e+00> : vector<8x96xf32>
    %88 = tpu.matmul %87, %1, %cst_17 {dimension_numbers = #tpu.dot_dimension_numbers<[1], [0], [0], [1], [0, 0, 1, 1], [], []>} : vector<8x32xbf16>, vector<32x96xbf16>, vector<8x96xf32> -> vector<8x96xf32>
    %89 = arith.addf %88, %5 : vector<8x96xf32>
    %90 = vector.extract_strided_slice %86 {offsets = [0, 0], sizes = [8, 64], strides = [1, 1]} : vector<8x96xf32> to vector<8x64xf32>
    %91 = vector.extract_strided_slice %89 {offsets = [0, 0], sizes = [8, 64], strides = [1, 1]} : vector<8x96xf32> to vector<8x64xf32>
    %92 = arith.addf %90, %91 : vector<8x64xf32>
    %93 = arith.negf %92 : vector<8x64xf32>
    %94 = math.exp %93 : vector<8x64xf32>
    %cst_18 = arith.constant 1.000000e+00 : f32
    %95 = vector.broadcast %cst_18 : f32 to vector<8x64xf32>
    %96 = arith.addf %95, %94 : vector<8x64xf32>
    %97 = arith.divf %95, %96 : vector<8x64xf32>
    %98 = vector.extract_strided_slice %97 {offsets = [0, 0], sizes = [8, 32], strides = [1, 1]} : vector<8x64xf32> to vector<8x32xf32>
    %99 = vector.extract_strided_slice %97 {offsets = [0, 32], sizes = [8, 32], strides = [1, 1]} : vector<8x64xf32> to vector<8x32xf32>
    %100 = vector.extract_strided_slice %86 {offsets = [0, 64], sizes = [8, 32], strides = [1, 1]} : vector<8x96xf32> to vector<8x32xf32>
    %101 = vector.extract_strided_slice %89 {offsets = [0, 64], sizes = [8, 32], strides = [1, 1]} : vector<8x96xf32> to vector<8x32xf32>
    %102 = arith.mulf %98, %101 : vector<8x32xf32>
    %103 = arith.addf %100, %102 : vector<8x32xf32>
    %104 = math.tanh %103 : vector<8x32xf32>
    %cst_19 = arith.constant 1.000000e+00 : f32
    %105 = vector.broadcast %cst_19 : f32 to vector<8x32xf32>
    %106 = arith.subf %105, %99 : vector<8x32xf32>
    %107 = arith.mulf %106, %104 : vector<8x32xf32>
    %108 = arith.mulf %99, %84 : vector<8x32xf32>
    %109 = arith.addf %107, %108 : vector<8x32xf32>
    %110 = arith.truncf %109 : vector<8x32xf32> to vector<8x32xbf16>
    %111 = vector.extract_strided_slice %9 {offsets = [32, 0], sizes = [8, 96], strides = [1, 1]} : vector<64x96xf32> to vector<8x96xf32>
    %112 = arith.truncf %109 : vector<8x32xf32> to vector<8x32xbf16>
    %cst_20 = arith.constant dense<0.000000e+00> : vector<8x96xf32>
    %113 = tpu.matmul %112, %1, %cst_20 {dimension_numbers = #tpu.dot_dimension_numbers<[1], [0], [0], [1], [0, 0, 1, 1], [], []>} : vector<8x32xbf16>, vector<32x96xbf16>, vector<8x96xf32> -> vector<8x96xf32>
    %114 = arith.addf %113, %5 : vector<8x96xf32>
    %115 = vector.extract_strided_slice %111 {offsets = [0, 0], sizes = [8, 64], strides = [1, 1]} : vector<8x96xf32> to vector<8x64xf32>
    %116 = vector.extract_strided_slice %114 {offsets = [0, 0], sizes = [8, 64], strides = [1, 1]} : vector<8x96xf32> to vector<8x64xf32>
    %117 = arith.addf %115, %116 : vector<8x64xf32>
    %118 = arith.negf %117 : vector<8x64xf32>
    %119 = math.exp %118 : vector<8x64xf32>
    %cst_21 = arith.constant 1.000000e+00 : f32
    %120 = vector.broadcast %cst_21 : f32 to vector<8x64xf32>
    %121 = arith.addf %120, %119 : vector<8x64xf32>
    %122 = arith.divf %120, %121 : vector<8x64xf32>
    %123 = vector.extract_strided_slice %122 {offsets = [0, 0], sizes = [8, 32], strides = [1, 1]} : vector<8x64xf32> to vector<8x32xf32>
    %124 = vector.extract_strided_slice %122 {offsets = [0, 32], sizes = [8, 32], strides = [1, 1]} : vector<8x64xf32> to vector<8x32xf32>
    %125 = vector.extract_strided_slice %111 {offsets = [0, 64], sizes = [8, 32], strides = [1, 1]} : vector<8x96xf32> to vector<8x32xf32>
    %126 = vector.extract_strided_slice %114 {offsets = [0, 64], sizes = [8, 32], strides = [1, 1]} : vector<8x96xf32> to vector<8x32xf32>
    %127 = arith.mulf %123, %126 : vector<8x32xf32>
    %128 = arith.addf %125, %127 : vector<8x32xf32>
    %129 = math.tanh %128 : vector<8x32xf32>
    %cst_22 = arith.constant 1.000000e+00 : f32
    %130 = vector.broadcast %cst_22 : f32 to vector<8x32xf32>
    %131 = arith.subf %130, %124 : vector<8x32xf32>
    %132 = arith.mulf %131, %129 : vector<8x32xf32>
    %133 = arith.mulf %124, %109 : vector<8x32xf32>
    %134 = arith.addf %132, %133 : vector<8x32xf32>
    %135 = arith.truncf %134 : vector<8x32xf32> to vector<8x32xbf16>
    %136 = vector.extract_strided_slice %9 {offsets = [40, 0], sizes = [8, 96], strides = [1, 1]} : vector<64x96xf32> to vector<8x96xf32>
    %137 = arith.truncf %134 : vector<8x32xf32> to vector<8x32xbf16>
    %cst_23 = arith.constant dense<0.000000e+00> : vector<8x96xf32>
    %138 = tpu.matmul %137, %1, %cst_23 {dimension_numbers = #tpu.dot_dimension_numbers<[1], [0], [0], [1], [0, 0, 1, 1], [], []>} : vector<8x32xbf16>, vector<32x96xbf16>, vector<8x96xf32> -> vector<8x96xf32>
    %139 = arith.addf %138, %5 : vector<8x96xf32>
    %140 = vector.extract_strided_slice %136 {offsets = [0, 0], sizes = [8, 64], strides = [1, 1]} : vector<8x96xf32> to vector<8x64xf32>
    %141 = vector.extract_strided_slice %139 {offsets = [0, 0], sizes = [8, 64], strides = [1, 1]} : vector<8x96xf32> to vector<8x64xf32>
    %142 = arith.addf %140, %141 : vector<8x64xf32>
    %143 = arith.negf %142 : vector<8x64xf32>
    %144 = math.exp %143 : vector<8x64xf32>
    %cst_24 = arith.constant 1.000000e+00 : f32
    %145 = vector.broadcast %cst_24 : f32 to vector<8x64xf32>
    %146 = arith.addf %145, %144 : vector<8x64xf32>
    %147 = arith.divf %145, %146 : vector<8x64xf32>
    %148 = vector.extract_strided_slice %147 {offsets = [0, 0], sizes = [8, 32], strides = [1, 1]} : vector<8x64xf32> to vector<8x32xf32>
    %149 = vector.extract_strided_slice %147 {offsets = [0, 32], sizes = [8, 32], strides = [1, 1]} : vector<8x64xf32> to vector<8x32xf32>
    %150 = vector.extract_strided_slice %136 {offsets = [0, 64], sizes = [8, 32], strides = [1, 1]} : vector<8x96xf32> to vector<8x32xf32>
    %151 = vector.extract_strided_slice %139 {offsets = [0, 64], sizes = [8, 32], strides = [1, 1]} : vector<8x96xf32> to vector<8x32xf32>
    %152 = arith.mulf %148, %151 : vector<8x32xf32>
    %153 = arith.addf %150, %152 : vector<8x32xf32>
    %154 = math.tanh %153 : vector<8x32xf32>
    %cst_25 = arith.constant 1.000000e+00 : f32
    %155 = vector.broadcast %cst_25 : f32 to vector<8x32xf32>
    %156 = arith.subf %155, %149 : vector<8x32xf32>
    %157 = arith.mulf %156, %154 : vector<8x32xf32>
    %158 = arith.mulf %149, %134 : vector<8x32xf32>
    %159 = arith.addf %157, %158 : vector<8x32xf32>
    %160 = arith.truncf %159 : vector<8x32xf32> to vector<8x32xbf16>
    %161 = vector.extract_strided_slice %9 {offsets = [48, 0], sizes = [8, 96], strides = [1, 1]} : vector<64x96xf32> to vector<8x96xf32>
    %162 = arith.truncf %159 : vector<8x32xf32> to vector<8x32xbf16>
    %cst_26 = arith.constant dense<0.000000e+00> : vector<8x96xf32>
    %163 = tpu.matmul %162, %1, %cst_26 {dimension_numbers = #tpu.dot_dimension_numbers<[1], [0], [0], [1], [0, 0, 1, 1], [], []>} : vector<8x32xbf16>, vector<32x96xbf16>, vector<8x96xf32> -> vector<8x96xf32>
    %164 = arith.addf %163, %5 : vector<8x96xf32>
    %165 = vector.extract_strided_slice %161 {offsets = [0, 0], sizes = [8, 64], strides = [1, 1]} : vector<8x96xf32> to vector<8x64xf32>
    %166 = vector.extract_strided_slice %164 {offsets = [0, 0], sizes = [8, 64], strides = [1, 1]} : vector<8x96xf32> to vector<8x64xf32>
    %167 = arith.addf %165, %166 : vector<8x64xf32>
    %168 = arith.negf %167 : vector<8x64xf32>
    %169 = math.exp %168 : vector<8x64xf32>
    %cst_27 = arith.constant 1.000000e+00 : f32
    %170 = vector.broadcast %cst_27 : f32 to vector<8x64xf32>
    %171 = arith.addf %170, %169 : vector<8x64xf32>
    %172 = arith.divf %170, %171 : vector<8x64xf32>
    %173 = vector.extract_strided_slice %172 {offsets = [0, 0], sizes = [8, 32], strides = [1, 1]} : vector<8x64xf32> to vector<8x32xf32>
    %174 = vector.extract_strided_slice %172 {offsets = [0, 32], sizes = [8, 32], strides = [1, 1]} : vector<8x64xf32> to vector<8x32xf32>
    %175 = vector.extract_strided_slice %161 {offsets = [0, 64], sizes = [8, 32], strides = [1, 1]} : vector<8x96xf32> to vector<8x32xf32>
    %176 = vector.extract_strided_slice %164 {offsets = [0, 64], sizes = [8, 32], strides = [1, 1]} : vector<8x96xf32> to vector<8x32xf32>
    %177 = arith.mulf %173, %176 : vector<8x32xf32>
    %178 = arith.addf %175, %177 : vector<8x32xf32>
    %179 = math.tanh %178 : vector<8x32xf32>
    %cst_28 = arith.constant 1.000000e+00 : f32
    %180 = vector.broadcast %cst_28 : f32 to vector<8x32xf32>
    %181 = arith.subf %180, %174 : vector<8x32xf32>
    %182 = arith.mulf %181, %179 : vector<8x32xf32>
    %183 = arith.mulf %174, %159 : vector<8x32xf32>
    %184 = arith.addf %182, %183 : vector<8x32xf32>
    %185 = arith.truncf %184 : vector<8x32xf32> to vector<8x32xbf16>
    %186 = vector.extract_strided_slice %9 {offsets = [56, 0], sizes = [8, 96], strides = [1, 1]} : vector<64x96xf32> to vector<8x96xf32>
    %187 = arith.truncf %184 : vector<8x32xf32> to vector<8x32xbf16>
    %cst_29 = arith.constant dense<0.000000e+00> : vector<8x96xf32>
    %188 = tpu.matmul %187, %1, %cst_29 {dimension_numbers = #tpu.dot_dimension_numbers<[1], [0], [0], [1], [0, 0, 1, 1], [], []>} : vector<8x32xbf16>, vector<32x96xbf16>, vector<8x96xf32> -> vector<8x96xf32>
    %189 = arith.addf %188, %5 : vector<8x96xf32>
    %190 = vector.extract_strided_slice %186 {offsets = [0, 0], sizes = [8, 64], strides = [1, 1]} : vector<8x96xf32> to vector<8x64xf32>
    %191 = vector.extract_strided_slice %189 {offsets = [0, 0], sizes = [8, 64], strides = [1, 1]} : vector<8x96xf32> to vector<8x64xf32>
    %192 = arith.addf %190, %191 : vector<8x64xf32>
    %193 = arith.negf %192 : vector<8x64xf32>
    %194 = math.exp %193 : vector<8x64xf32>
    %cst_30 = arith.constant 1.000000e+00 : f32
    %195 = vector.broadcast %cst_30 : f32 to vector<8x64xf32>
    %196 = arith.addf %195, %194 : vector<8x64xf32>
    %197 = arith.divf %195, %196 : vector<8x64xf32>
    %198 = vector.extract_strided_slice %197 {offsets = [0, 0], sizes = [8, 32], strides = [1, 1]} : vector<8x64xf32> to vector<8x32xf32>
    %199 = vector.extract_strided_slice %197 {offsets = [0, 32], sizes = [8, 32], strides = [1, 1]} : vector<8x64xf32> to vector<8x32xf32>
    %200 = vector.extract_strided_slice %186 {offsets = [0, 64], sizes = [8, 32], strides = [1, 1]} : vector<8x96xf32> to vector<8x32xf32>
    %201 = vector.extract_strided_slice %189 {offsets = [0, 64], sizes = [8, 32], strides = [1, 1]} : vector<8x96xf32> to vector<8x32xf32>
    %202 = arith.mulf %198, %201 : vector<8x32xf32>
    %203 = arith.addf %200, %202 : vector<8x32xf32>
    %204 = math.tanh %203 : vector<8x32xf32>
    %cst_31 = arith.constant 1.000000e+00 : f32
    %205 = vector.broadcast %cst_31 : f32 to vector<8x32xf32>
    %206 = arith.subf %205, %199 : vector<8x32xf32>
    %207 = arith.mulf %206, %204 : vector<8x32xf32>
    %208 = arith.mulf %199, %184 : vector<8x32xf32>
    %209 = arith.addf %207, %208 : vector<8x32xf32>
    %210 = arith.truncf %209 : vector<8x32xf32> to vector<8x32xbf16>
    %211 = tpu.concatenate %35, %60, %85, %110, %135, %160, %185, %210 in 0 : vector<8x32xbf16>, vector<8x32xbf16>, vector<8x32xbf16>, vector<8x32xbf16>, vector<8x32xbf16>, vector<8x32xbf16>, vector<8x32xbf16>, vector<8x32xbf16> -> vector<64x32xbf16>
    %c48 = arith.constant 48 : index
    %c0_32 = arith.constant 0 : index
    %212 = vector.load %arg2[%c48, %c0_32] : memref<208x128xbf16, #tpu.memory_space<vmem>>, vector<32x96xbf16>
    %c80 = arith.constant 80 : index
    %c0_33 = arith.constant 0 : index
    %213 = vector.load %arg2[%c80, %c0_33] : memref<208x128xbf16, #tpu.memory_space<vmem>>, vector<32x96xbf16>
    %c112 = arith.constant 112 : index
    %c0_34 = arith.constant 0 : index
    %214 = vector.load %arg2[%c112, %c0_34] : memref<208x128xbf16, #tpu.memory_space<vmem>>, vector<64x32xbf16>
    %c176 = arith.constant 176 : index
    %c0_35 = arith.constant 0 : index
    %215 = vector.load %arg2[%c176, %c0_35] : memref<208x128xbf16, #tpu.memory_space<vmem>>, vector<32x32xbf16>
    %c2 = arith.constant 2 : index
    %c0_36 = arith.constant 0 : index
    %216 = vector.load %arg3[%c2, %c0_36] : memref<8x128xf32, #tpu.memory_space<vmem>>, vector<1x96xf32>
    %217 = vector.shape_cast %216 : vector<1x96xf32> to vector<1x96xf32>
    %218 = vector.broadcast %217 : vector<1x96xf32> to vector<8x96xf32>
    %c3 = arith.constant 3 : index
    %c0_37 = arith.constant 0 : index
    %219 = vector.load %arg3[%c3, %c0_37] : memref<8x128xf32, #tpu.memory_space<vmem>>, vector<1x32xf32>
    %220 = vector.shape_cast %219 : vector<1x32xf32> to vector<1x32xf32>
    %221 = vector.broadcast %220 : vector<1x32xf32> to vector<8x32xf32>
    %c4 = arith.constant 4 : index
    %c0_38 = arith.constant 0 : index
    %222 = vector.load %arg3[%c4, %c0_38] : memref<8x128xf32, #tpu.memory_space<vmem>>, vector<1x32xf32>
    %223 = vector.shape_cast %222 : vector<1x32xf32> to vector<1x32xf32>
    %224 = vector.broadcast %223 : vector<1x32xf32> to vector<8x32xf32>
    %225 = tpu.iota {dimensions = array<i32: 1>} : vector<8x32xi32>
    %226 = tpu.iota {dimensions = array<i32: 1>} : vector<8x64xi32>
    %227 = tpu.iota {dimensions = array<i32: 0>} : vector<8x64xi32>
    %c7_i32 = arith.constant 7 : i32
    %228 = vector.broadcast %c7_i32 : i32 to vector<8x64xi32>
    %229 = arith.andi %226, %228 : vector<8x64xi32>
    %230 = arith.cmpi eq, %229, %227 : vector<8x64xi32>
    %cst_39 = arith.constant 0.000000e+00 : f32
    %cst_40 = arith.constant -1.000000e+30 : f32
    %231 = vector.broadcast %cst_39 : f32 to vector<8x64xf32>
    %232 = vector.broadcast %cst_40 : f32 to vector<8x64xf32>
    %233 = arith.select %230, %231, %232 : vector<8x64xi1>, vector<8x64xf32>
    %c0_41 = arith.constant 0 : index
    %c0_42 = arith.constant 0 : index
    %234 = vector.load %arg1[%c0_41, %c0_42] : memref<8x1xi32, #tpu.memory_space<vmem>>, vector<8x1xi32>
    %235 = vector.broadcast %234 : vector<8x1xi32> to vector<8x32xi32>
    %236 = arith.cmpi eq, %225, %235 : vector<8x32xi32>
    %237 = arith.extui %236 : vector<8x32xi1> to vector<8x32xi32>
    %238 = arith.sitofp %237 : vector<8x32xi32> to vector<8x32xf32>
    %239 = arith.truncf %238 : vector<8x32xf32> to vector<8x32xbf16>
    %cst_43 = arith.constant dense<0.000000e+00> : vector<8x96xf32>
    %240 = tpu.matmul %239, %212, %cst_43 {dimension_numbers = #tpu.dot_dimension_numbers<[1], [0], [0], [1], [0, 0, 1, 1], [], []>} : vector<8x32xbf16>, vector<32x96xbf16>, vector<8x96xf32> -> vector<8x96xf32>
    %241 = arith.truncf %209 : vector<8x32xf32> to vector<8x32xbf16>
    %cst_44 = arith.constant dense<0.000000e+00> : vector<8x96xf32>
    %242 = tpu.matmul %241, %213, %cst_44 {dimension_numbers = #tpu.dot_dimension_numbers<[1], [0], [0], [1], [0, 0, 1, 1], [], []>} : vector<8x32xbf16>, vector<32x96xbf16>, vector<8x96xf32> -> vector<8x96xf32>
    %243 = arith.addf %242, %218 : vector<8x96xf32>
    %244 = vector.extract_strided_slice %240 {offsets = [0, 0], sizes = [8, 64], strides = [1, 1]} : vector<8x96xf32> to vector<8x64xf32>
    %245 = vector.extract_strided_slice %243 {offsets = [0, 0], sizes = [8, 64], strides = [1, 1]} : vector<8x96xf32> to vector<8x64xf32>
    %246 = arith.addf %244, %245 : vector<8x64xf32>
    %247 = arith.negf %246 : vector<8x64xf32>
    %248 = math.exp %247 : vector<8x64xf32>
    %cst_45 = arith.constant 1.000000e+00 : f32
    %249 = vector.broadcast %cst_45 : f32 to vector<8x64xf32>
    %250 = arith.addf %249, %248 : vector<8x64xf32>
    %251 = arith.divf %249, %250 : vector<8x64xf32>
    %252 = vector.extract_strided_slice %251 {offsets = [0, 0], sizes = [8, 32], strides = [1, 1]} : vector<8x64xf32> to vector<8x32xf32>
    %253 = vector.extract_strided_slice %251 {offsets = [0, 32], sizes = [8, 32], strides = [1, 1]} : vector<8x64xf32> to vector<8x32xf32>
    %254 = vector.extract_strided_slice %240 {offsets = [0, 64], sizes = [8, 32], strides = [1, 1]} : vector<8x96xf32> to vector<8x32xf32>
    %255 = vector.extract_strided_slice %243 {offsets = [0, 64], sizes = [8, 32], strides = [1, 1]} : vector<8x96xf32> to vector<8x32xf32>
    %256 = arith.mulf %252, %255 : vector<8x32xf32>
    %257 = arith.addf %254, %256 : vector<8x32xf32>
    %258 = math.tanh %257 : vector<8x32xf32>
    %cst_46 = arith.constant 1.000000e+00 : f32
    %259 = vector.broadcast %cst_46 : f32 to vector<8x32xf32>
    %260 = arith.subf %259, %253 : vector<8x32xf32>
    %261 = arith.mulf %260, %258 : vector<8x32xf32>
    %262 = arith.mulf %253, %209 : vector<8x32xf32>
    %263 = arith.addf %261, %262 : vector<8x32xf32>
    %264 = arith.truncf %263 : vector<8x32xf32> to vector<8x32xbf16>
    %cst_47 = arith.constant dense<0.000000e+00> : vector<8x64xf32>
    %265 = tpu.matmul %264, %211, %cst_47 {dimension_numbers = #tpu.dot_dimension_numbers<[1], [1], [0], [0], [0, 0, 1, 0], [], []>} : vector<8x32xbf16>, vector<64x32xbf16>, vector<8x64xf32> -> vector<8x64xf32>
    %266 = arith.addf %265, %233 : vector<8x64xf32>
    %cst_48 = arith.constant dense<0xFF800000> : vector<8xf32>
    %267 = vector.multi_reduction <maximumf>, %266, %cst_48 [1] : vector<8x64xf32> to vector<8xf32>
    %268 = vector.shape_cast %267 : vector<8xf32> to vector<8x1xf32>
    %269 = vector.broadcast %268 : vector<8x1xf32> to vector<8x64xf32>
    %270 = arith.subf %266, %269 : vector<8x64xf32>
    %271 = math.exp %270 : vector<8x64xf32>
    %cst_49 = arith.constant dense<0.000000e+00> : vector<8xf32>
    %272 = vector.multi_reduction <add>, %271, %cst_49 [1] : vector<8x64xf32> to vector<8xf32>
    %273 = vector.shape_cast %272 : vector<8xf32> to vector<8x1xf32>
    %274 = tpu.reciprocal %273 {approx = true} : vector<8x1xf32> -> vector<8x1xf32>
    %275 = vector.broadcast %274 : vector<8x1xf32> to vector<8x64xf32>
    %276 = arith.mulf %271, %275 : vector<8x64xf32>
    %277 = arith.truncf %276 : vector<8x64xf32> to vector<8x64xbf16>
    %cst_50 = arith.constant dense<0.000000e+00> : vector<8x32xf32>
    %278 = tpu.matmul %277, %211, %cst_50 {dimension_numbers = #tpu.dot_dimension_numbers<[1], [0], [0], [1], [0, 0, 1, 1], [], []>} : vector<8x64xbf16>, vector<64x32xbf16>, vector<8x32xf32> -> vector<8x32xf32>
    %279 = tpu.concatenate %278, %263 in 1 : vector<8x32xf32>, vector<8x32xf32> -> vector<8x64xf32>
    %280 = arith.truncf %279 : vector<8x64xf32> to vector<8x64xbf16>
    %cst_51 = arith.constant dense<0.000000e+00> : vector<8x32xf32>
    %281 = tpu.matmul %280, %214, %cst_51 {dimension_numbers = #tpu.dot_dimension_numbers<[1], [0], [0], [1], [0, 0, 1, 1], [], []>} : vector<8x64xbf16>, vector<64x32xbf16>, vector<8x32xf32> -> vector<8x32xf32>
    %282 = arith.addf %281, %221 : vector<8x32xf32>
    %283 = math.tanh %282 : vector<8x32xf32>
    %284 = arith.truncf %283 : vector<8x32xf32> to vector<8x32xbf16>
    %cst_52 = arith.constant dense<0.000000e+00> : vector<8x32xf32>
    %285 = tpu.matmul %284, %215, %cst_52 {dimension_numbers = #tpu.dot_dimension_numbers<[1], [0], [0], [1], [0, 0, 1, 1], [], []>} : vector<8x32xbf16>, vector<32x32xbf16>, vector<8x32xf32> -> vector<8x32xf32>
    %286 = arith.addf %285, %224 : vector<8x32xf32>
    %cst_53 = arith.constant dense<0xFF800000> : vector<8xf32>
    %287 = vector.multi_reduction <maximumf>, %286, %cst_53 [1] : vector<8x32xf32> to vector<8xf32>
    %288 = vector.shape_cast %287 : vector<8xf32> to vector<8x1xf32>
    %289 = vector.broadcast %288 : vector<8x1xf32> to vector<8x32xf32>
    %290 = arith.subf %286, %289 : vector<8x32xf32>
    %291 = math.exp %290 : vector<8x32xf32>
    %cst_54 = arith.constant dense<0.000000e+00> : vector<8xf32>
    %292 = vector.multi_reduction <add>, %291, %cst_54 [1] : vector<8x32xf32> to vector<8xf32>
    %293 = vector.shape_cast %292 : vector<8xf32> to vector<8x1xf32>
    %294 = math.log %293 : vector<8x1xf32>
    %295 = vector.broadcast %294 : vector<8x1xf32> to vector<8x32xf32>
    %296 = arith.subf %290, %295 : vector<8x32xf32>
    %c0_55 = arith.constant 0 : index
    %c0_56 = arith.constant 0 : index
    %c0_57 = arith.constant 0 : index
    %297 = vector.load %arg4[%c0_55, %c0_56, %c0_57] : memref<6x8x32xf32, #tpu.memory_space<vmem>>, vector<1x8x32xf32>
    %298 = vector.shape_cast %297 : vector<1x8x32xf32> to vector<8x32xf32>
    %299 = vector.shape_cast %296 : vector<8x32xf32> to vector<1x8x32xf32>
    tpu.vector_store %arg4[%c0_55, %c0_56, %c0_57], %299 {strides = array<i32>} : memref<6x8x32xf32, #tpu.memory_space<vmem>>, vector<1x8x32xf32>,
    %300 = vector.broadcast %288 : vector<8x1xf32> to vector<8x32xf32>
    %301 = arith.cmpf oge, %286, %300 : vector<8x32xf32>
    %c32_i32 = arith.constant 32 : i32
    %302 = vector.broadcast %c32_i32 : i32 to vector<8x32xi32>
    %303 = arith.select %301, %225, %302 : vector<8x32xi1>, vector<8x32xi32>
    %cst_58 = arith.constant dense<2147483647> : vector<8xi32>
    %304 = vector.multi_reduction <minsi>, %303, %cst_58 [1] : vector<8x32xi32> to vector<8xi32>
    %305 = vector.shape_cast %304 : vector<8xi32> to vector<8x1xi32>
    %306 = vector.broadcast %305 : vector<8x1xi32> to vector<8x32xi32>
    %307 = arith.cmpi eq, %225, %306 : vector<8x32xi32>
    %308 = arith.extui %307 : vector<8x32xi1> to vector<8x32xi32>
    %309 = arith.sitofp %308 : vector<8x32xi32> to vector<8x32xf32>
    %310 = arith.truncf %309 : vector<8x32xf32> to vector<8x32xbf16>
    %cst_59 = arith.constant dense<0.000000e+00> : vector<8x96xf32>
    %311 = tpu.matmul %310, %212, %cst_59 {dimension_numbers = #tpu.dot_dimension_numbers<[1], [0], [0], [1], [0, 0, 1, 1], [], []>} : vector<8x32xbf16>, vector<32x96xbf16>, vector<8x96xf32> -> vector<8x96xf32>
    %312 = arith.truncf %263 : vector<8x32xf32> to vector<8x32xbf16>
    %cst_60 = arith.constant dense<0.000000e+00> : vector<8x96xf32>
    %313 = tpu.matmul %312, %213, %cst_60 {dimension_numbers = #tpu.dot_dimension_numbers<[1], [0], [0], [1], [0, 0, 1, 1], [], []>} : vector<8x32xbf16>, vector<32x96xbf16>, vector<8x96xf32> -> vector<8x96xf32>
    %314 = arith.addf %313, %218 : vector<8x96xf32>
    %315 = vector.extract_strided_slice %311 {offsets = [0, 0], sizes = [8, 64], strides = [1, 1]} : vector<8x96xf32> to vector<8x64xf32>
    %316 = vector.extract_strided_slice %314 {offsets = [0, 0], sizes = [8, 64], strides = [1, 1]} : vector<8x96xf32> to vector<8x64xf32>
    %317 = arith.addf %315, %316 : vector<8x64xf32>
    %318 = arith.negf %317 : vector<8x64xf32>
    %319 = math.exp %318 : vector<8x64xf32>
    %cst_61 = arith.constant 1.000000e+00 : f32
    %320 = vector.broadcast %cst_61 : f32 to vector<8x64xf32>
    %321 = arith.addf %320, %319 : vector<8x64xf32>
    %322 = arith.divf %320, %321 : vector<8x64xf32>
    %323 = vector.extract_strided_slice %322 {offsets = [0, 0], sizes = [8, 32], strides = [1, 1]} : vector<8x64xf32> to vector<8x32xf32>
    %324 = vector.extract_strided_slice %322 {offsets = [0, 32], sizes = [8, 32], strides = [1, 1]} : vector<8x64xf32> to vector<8x32xf32>
    %325 = vector.extract_strided_slice %311 {offsets = [0, 64], sizes = [8, 32], strides = [1, 1]} : vector<8x96xf32> to vector<8x32xf32>
    %326 = vector.extract_strided_slice %314 {offsets = [0, 64], sizes = [8, 32], strides = [1, 1]} : vector<8x96xf32> to vector<8x32xf32>
    %327 = arith.mulf %323, %326 : vector<8x32xf32>
    %328 = arith.addf %325, %327 : vector<8x32xf32>
    %329 = math.tanh %328 : vector<8x32xf32>
    %cst_62 = arith.constant 1.000000e+00 : f32
    %330 = vector.broadcast %cst_62 : f32 to vector<8x32xf32>
    %331 = arith.subf %330, %324 : vector<8x32xf32>
    %332 = arith.mulf %331, %329 : vector<8x32xf32>
    %333 = arith.mulf %324, %263 : vector<8x32xf32>
    %334 = arith.addf %332, %333 : vector<8x32xf32>
    %335 = arith.truncf %334 : vector<8x32xf32> to vector<8x32xbf16>
    %cst_63 = arith.constant dense<0.000000e+00> : vector<8x64xf32>
    %336 = tpu.matmul %335, %211, %cst_63 {dimension_numbers = #tpu.dot_dimension_numbers<[1], [1], [0], [0], [0, 0, 1, 0], [], []>} : vector<8x32xbf16>, vector<64x32xbf16>, vector<8x64xf32> -> vector<8x64xf32>
    %337 = arith.addf %336, %233 : vector<8x64xf32>
    %cst_64 = arith.constant dense<0xFF800000> : vector<8xf32>
    %338 = vector.multi_reduction <maximumf>, %337, %cst_64 [1] : vector<8x64xf32> to vector<8xf32>
    %339 = vector.shape_cast %338 : vector<8xf32> to vector<8x1xf32>
    %340 = vector.broadcast %339 : vector<8x1xf32> to vector<8x64xf32>
    %341 = arith.subf %337, %340 : vector<8x64xf32>
    %342 = math.exp %341 : vector<8x64xf32>
    %cst_65 = arith.constant dense<0.000000e+00> : vector<8xf32>
    %343 = vector.multi_reduction <add>, %342, %cst_65 [1] : vector<8x64xf32> to vector<8xf32>
    %344 = vector.shape_cast %343 : vector<8xf32> to vector<8x1xf32>
    %345 = tpu.reciprocal %344 {approx = true} : vector<8x1xf32> -> vector<8x1xf32>
    %346 = vector.broadcast %345 : vector<8x1xf32> to vector<8x64xf32>
    %347 = arith.mulf %342, %346 : vector<8x64xf32>
    %348 = arith.truncf %347 : vector<8x64xf32> to vector<8x64xbf16>
    %cst_66 = arith.constant dense<0.000000e+00> : vector<8x32xf32>
    %349 = tpu.matmul %348, %211, %cst_66 {dimension_numbers = #tpu.dot_dimension_numbers<[1], [0], [0], [1], [0, 0, 1, 1], [], []>} : vector<8x64xbf16>, vector<64x32xbf16>, vector<8x32xf32> -> vector<8x32xf32>
    %350 = tpu.concatenate %349, %334 in 1 : vector<8x32xf32>, vector<8x32xf32> -> vector<8x64xf32>
    %351 = arith.truncf %350 : vector<8x64xf32> to vector<8x64xbf16>
    %cst_67 = arith.constant dense<0.000000e+00> : vector<8x32xf32>
    %352 = tpu.matmul %351, %214, %cst_67 {dimension_numbers = #tpu.dot_dimension_numbers<[1], [0], [0], [1], [0, 0, 1, 1], [], []>} : vector<8x64xbf16>, vector<64x32xbf16>, vector<8x32xf32> -> vector<8x32xf32>
    %353 = arith.addf %352, %221 : vector<8x32xf32>
    %354 = math.tanh %353 : vector<8x32xf32>
    %355 = arith.truncf %354 : vector<8x32xf32> to vector<8x32xbf16>
    %cst_68 = arith.constant dense<0.000000e+00> : vector<8x32xf32>
    %356 = tpu.matmul %355, %215, %cst_68 {dimension_numbers = #tpu.dot_dimension_numbers<[1], [0], [0], [1], [0, 0, 1, 1], [], []>} : vector<8x32xbf16>, vector<32x32xbf16>, vector<8x32xf32> -> vector<8x32xf32>
    %357 = arith.addf %356, %224 : vector<8x32xf32>
    %cst_69 = arith.constant dense<0xFF800000> : vector<8xf32>
    %358 = vector.multi_reduction <maximumf>, %357, %cst_69 [1] : vector<8x32xf32> to vector<8xf32>
    %359 = vector.shape_cast %358 : vector<8xf32> to vector<8x1xf32>
    %360 = vector.broadcast %359 : vector<8x1xf32> to vector<8x32xf32>
    %361 = arith.subf %357, %360 : vector<8x32xf32>
    %362 = math.exp %361 : vector<8x32xf32>
    %cst_70 = arith.constant dense<0.000000e+00> : vector<8xf32>
    %363 = vector.multi_reduction <add>, %362, %cst_70 [1] : vector<8x32xf32> to vector<8xf32>
    %364 = vector.shape_cast %363 : vector<8xf32> to vector<8x1xf32>
    %365 = math.log %364 : vector<8x1xf32>
    %366 = vector.broadcast %365 : vector<8x1xf32> to vector<8x32xf32>
    %367 = arith.subf %361, %366 : vector<8x32xf32>
    %c1_71 = arith.constant 1 : index
    %c0_72 = arith.constant 0 : index
    %c0_73 = arith.constant 0 : index
    %368 = vector.load %arg4[%c1_71, %c0_72, %c0_73] : memref<6x8x32xf32, #tpu.memory_space<vmem>>, vector<1x8x32xf32>
    %369 = vector.shape_cast %368 : vector<1x8x32xf32> to vector<8x32xf32>
    %370 = vector.shape_cast %367 : vector<8x32xf32> to vector<1x8x32xf32>
    tpu.vector_store %arg4[%c1_71, %c0_72, %c0_73], %370 {strides = array<i32>} : memref<6x8x32xf32, #tpu.memory_space<vmem>>, vector<1x8x32xf32>,
    %371 = vector.broadcast %359 : vector<8x1xf32> to vector<8x32xf32>
    %372 = arith.cmpf oge, %357, %371 : vector<8x32xf32>
    %c32_i32_74 = arith.constant 32 : i32
    %373 = vector.broadcast %c32_i32_74 : i32 to vector<8x32xi32>
    %374 = arith.select %372, %225, %373 : vector<8x32xi1>, vector<8x32xi32>
    %cst_75 = arith.constant dense<2147483647> : vector<8xi32>
    %375 = vector.multi_reduction <minsi>, %374, %cst_75 [1] : vector<8x32xi32> to vector<8xi32>
    %376 = vector.shape_cast %375 : vector<8xi32> to vector<8x1xi32>
    %377 = vector.broadcast %376 : vector<8x1xi32> to vector<8x32xi32>
    %378 = arith.cmpi eq, %225, %377 : vector<8x32xi32>
    %379 = arith.extui %378 : vector<8x32xi1> to vector<8x32xi32>
    %380 = arith.sitofp %379 : vector<8x32xi32> to vector<8x32xf32>
    %381 = arith.truncf %380 : vector<8x32xf32> to vector<8x32xbf16>
    %cst_76 = arith.constant dense<0.000000e+00> : vector<8x96xf32>
    %382 = tpu.matmul %381, %212, %cst_76 {dimension_numbers = #tpu.dot_dimension_numbers<[1], [0], [0], [1], [0, 0, 1, 1], [], []>} : vector<8x32xbf16>, vector<32x96xbf16>, vector<8x96xf32> -> vector<8x96xf32>
    %383 = arith.truncf %334 : vector<8x32xf32> to vector<8x32xbf16>
    %cst_77 = arith.constant dense<0.000000e+00> : vector<8x96xf32>
    %384 = tpu.matmul %383, %213, %cst_77 {dimension_numbers = #tpu.dot_dimension_numbers<[1], [0], [0], [1], [0, 0, 1, 1], [], []>} : vector<8x32xbf16>, vector<32x96xbf16>, vector<8x96xf32> -> vector<8x96xf32>
    %385 = arith.addf %384, %218 : vector<8x96xf32>
    %386 = vector.extract_strided_slice %382 {offsets = [0, 0], sizes = [8, 64], strides = [1, 1]} : vector<8x96xf32> to vector<8x64xf32>
    %387 = vector.extract_strided_slice %385 {offsets = [0, 0], sizes = [8, 64], strides = [1, 1]} : vector<8x96xf32> to vector<8x64xf32>
    %388 = arith.addf %386, %387 : vector<8x64xf32>
    %389 = arith.negf %388 : vector<8x64xf32>
    %390 = math.exp %389 : vector<8x64xf32>
    %cst_78 = arith.constant 1.000000e+00 : f32
    %391 = vector.broadcast %cst_78 : f32 to vector<8x64xf32>
    %392 = arith.addf %391, %390 : vector<8x64xf32>
    %393 = arith.divf %391, %392 : vector<8x64xf32>
    %394 = vector.extract_strided_slice %393 {offsets = [0, 0], sizes = [8, 32], strides = [1, 1]} : vector<8x64xf32> to vector<8x32xf32>
    %395 = vector.extract_strided_slice %393 {offsets = [0, 32], sizes = [8, 32], strides = [1, 1]} : vector<8x64xf32> to vector<8x32xf32>
    %396 = vector.extract_strided_slice %382 {offsets = [0, 64], sizes = [8, 32], strides = [1, 1]} : vector<8x96xf32> to vector<8x32xf32>
    %397 = vector.extract_strided_slice %385 {offsets = [0, 64], sizes = [8, 32], strides = [1, 1]} : vector<8x96xf32> to vector<8x32xf32>
    %398 = arith.mulf %394, %397 : vector<8x32xf32>
    %399 = arith.addf %396, %398 : vector<8x32xf32>
    %400 = math.tanh %399 : vector<8x32xf32>
    %cst_79 = arith.constant 1.000000e+00 : f32
    %401 = vector.broadcast %cst_79 : f32 to vector<8x32xf32>
    %402 = arith.subf %401, %395 : vector<8x32xf32>
    %403 = arith.mulf %402, %400 : vector<8x32xf32>
    %404 = arith.mulf %395, %334 : vector<8x32xf32>
    %405 = arith.addf %403, %404 : vector<8x32xf32>
    %406 = arith.truncf %405 : vector<8x32xf32> to vector<8x32xbf16>
    %cst_80 = arith.constant dense<0.000000e+00> : vector<8x64xf32>
    %407 = tpu.matmul %406, %211, %cst_80 {dimension_numbers = #tpu.dot_dimension_numbers<[1], [1], [0], [0], [0, 0, 1, 0], [], []>} : vector<8x32xbf16>, vector<64x32xbf16>, vector<8x64xf32> -> vector<8x64xf32>
    %408 = arith.addf %407, %233 : vector<8x64xf32>
    %cst_81 = arith.constant dense<0xFF800000> : vector<8xf32>
    %409 = vector.multi_reduction <maximumf>, %408, %cst_81 [1] : vector<8x64xf32> to vector<8xf32>
    %410 = vector.shape_cast %409 : vector<8xf32> to vector<8x1xf32>
    %411 = vector.broadcast %410 : vector<8x1xf32> to vector<8x64xf32>
    %412 = arith.subf %408, %411 : vector<8x64xf32>
    %413 = math.exp %412 : vector<8x64xf32>
    %cst_82 = arith.constant dense<0.000000e+00> : vector<8xf32>
    %414 = vector.multi_reduction <add>, %413, %cst_82 [1] : vector<8x64xf32> to vector<8xf32>
    %415 = vector.shape_cast %414 : vector<8xf32> to vector<8x1xf32>
    %416 = tpu.reciprocal %415 {approx = true} : vector<8x1xf32> -> vector<8x1xf32>
    %417 = vector.broadcast %416 : vector<8x1xf32> to vector<8x64xf32>
    %418 = arith.mulf %413, %417 : vector<8x64xf32>
    %419 = arith.truncf %418 : vector<8x64xf32> to vector<8x64xbf16>
    %cst_83 = arith.constant dense<0.000000e+00> : vector<8x32xf32>
    %420 = tpu.matmul %419, %211, %cst_83 {dimension_numbers = #tpu.dot_dimension_numbers<[1], [0], [0], [1], [0, 0, 1, 1], [], []>} : vector<8x64xbf16>, vector<64x32xbf16>, vector<8x32xf32> -> vector<8x32xf32>
    %421 = tpu.concatenate %420, %405 in 1 : vector<8x32xf32>, vector<8x32xf32> -> vector<8x64xf32>
    %422 = arith.truncf %421 : vector<8x64xf32> to vector<8x64xbf16>
    %cst_84 = arith.constant dense<0.000000e+00> : vector<8x32xf32>
    %423 = tpu.matmul %422, %214, %cst_84 {dimension_numbers = #tpu.dot_dimension_numbers<[1], [0], [0], [1], [0, 0, 1, 1], [], []>} : vector<8x64xbf16>, vector<64x32xbf16>, vector<8x32xf32> -> vector<8x32xf32>
    %424 = arith.addf %423, %221 : vector<8x32xf32>
    %425 = math.tanh %424 : vector<8x32xf32>
    %426 = arith.truncf %425 : vector<8x32xf32> to vector<8x32xbf16>
    %cst_85 = arith.constant dense<0.000000e+00> : vector<8x32xf32>
    %427 = tpu.matmul %426, %215, %cst_85 {dimension_numbers = #tpu.dot_dimension_numbers<[1], [0], [0], [1], [0, 0, 1, 1], [], []>} : vector<8x32xbf16>, vector<32x32xbf16>, vector<8x32xf32> -> vector<8x32xf32>
    %428 = arith.addf %427, %224 : vector<8x32xf32>
    %cst_86 = arith.constant dense<0xFF800000> : vector<8xf32>
    %429 = vector.multi_reduction <maximumf>, %428, %cst_86 [1] : vector<8x32xf32> to vector<8xf32>
    %430 = vector.shape_cast %429 : vector<8xf32> to vector<8x1xf32>
    %431 = vector.broadcast %430 : vector<8x1xf32> to vector<8x32xf32>
    %432 = arith.subf %428, %431 : vector<8x32xf32>
    %433 = math.exp %432 : vector<8x32xf32>
    %cst_87 = arith.constant dense<0.000000e+00> : vector<8xf32>
    %434 = vector.multi_reduction <add>, %433, %cst_87 [1] : vector<8x32xf32> to vector<8xf32>
    %435 = vector.shape_cast %434 : vector<8xf32> to vector<8x1xf32>
    %436 = math.log %435 : vector<8x1xf32>
    %437 = vector.broadcast %436 : vector<8x1xf32> to vector<8x32xf32>
    %438 = arith.subf %432, %437 : vector<8x32xf32>
    %c2_88 = arith.constant 2 : index
    %c0_89 = arith.constant 0 : index
    %c0_90 = arith.constant 0 : index
    %439 = vector.load %arg4[%c2_88, %c0_89, %c0_90] : memref<6x8x32xf32, #tpu.memory_space<vmem>>, vector<1x8x32xf32>
    %440 = vector.shape_cast %439 : vector<1x8x32xf32> to vector<8x32xf32>
    %441 = vector.shape_cast %438 : vector<8x32xf32> to vector<1x8x32xf32>
    tpu.vector_store %arg4[%c2_88, %c0_89, %c0_90], %441 {strides = array<i32>} : memref<6x8x32xf32, #tpu.memory_space<vmem>>, vector<1x8x32xf32>,
    %442 = vector.broadcast %430 : vector<8x1xf32> to vector<8x32xf32>
    %443 = arith.cmpf oge, %428, %442 : vector<8x32xf32>
    %c32_i32_91 = arith.constant 32 : i32
    %444 = vector.broadcast %c32_i32_91 : i32 to vector<8x32xi32>
    %445 = arith.select %443, %225, %444 : vector<8x32xi1>, vector<8x32xi32>
    %cst_92 = arith.constant dense<2147483647> : vector<8xi32>
    %446 = vector.multi_reduction <minsi>, %445, %cst_92 [1] : vector<8x32xi32> to vector<8xi32>
    %447 = vector.shape_cast %446 : vector<8xi32> to vector<8x1xi32>
    %448 = vector.broadcast %447 : vector<8x1xi32> to vector<8x32xi32>
    %449 = arith.cmpi eq, %225, %448 : vector<8x32xi32>
    %450 = arith.extui %449 : vector<8x32xi1> to vector<8x32xi32>
    %451 = arith.sitofp %450 : vector<8x32xi32> to vector<8x32xf32>
    %452 = arith.truncf %451 : vector<8x32xf32> to vector<8x32xbf16>
    %cst_93 = arith.constant dense<0.000000e+00> : vector<8x96xf32>
    %453 = tpu.matmul %452, %212, %cst_93 {dimension_numbers = #tpu.dot_dimension_numbers<[1], [0], [0], [1], [0, 0, 1, 1], [], []>} : vector<8x32xbf16>, vector<32x96xbf16>, vector<8x96xf32> -> vector<8x96xf32>
    %454 = arith.truncf %405 : vector<8x32xf32> to vector<8x32xbf16>
    %cst_94 = arith.constant dense<0.000000e+00> : vector<8x96xf32>
    %455 = tpu.matmul %454, %213, %cst_94 {dimension_numbers = #tpu.dot_dimension_numbers<[1], [0], [0], [1], [0, 0, 1, 1], [], []>} : vector<8x32xbf16>, vector<32x96xbf16>, vector<8x96xf32> -> vector<8x96xf32>
    %456 = arith.addf %455, %218 : vector<8x96xf32>
    %457 = vector.extract_strided_slice %453 {offsets = [0, 0], sizes = [8, 64], strides = [1, 1]} : vector<8x96xf32> to vector<8x64xf32>
    %458 = vector.extract_strided_slice %456 {offsets = [0, 0], sizes = [8, 64], strides = [1, 1]} : vector<8x96xf32> to vector<8x64xf32>
    %459 = arith.addf %457, %458 : vector<8x64xf32>
    %460 = arith.negf %459 : vector<8x64xf32>
    %461 = math.exp %460 : vector<8x64xf32>
    %cst_95 = arith.constant 1.000000e+00 : f32
    %462 = vector.broadcast %cst_95 : f32 to vector<8x64xf32>
    %463 = arith.addf %462, %461 : vector<8x64xf32>
    %464 = arith.divf %462, %463 : vector<8x64xf32>
    %465 = vector.extract_strided_slice %464 {offsets = [0, 0], sizes = [8, 32], strides = [1, 1]} : vector<8x64xf32> to vector<8x32xf32>
    %466 = vector.extract_strided_slice %464 {offsets = [0, 32], sizes = [8, 32], strides = [1, 1]} : vector<8x64xf32> to vector<8x32xf32>
    %467 = vector.extract_strided_slice %453 {offsets = [0, 64], sizes = [8, 32], strides = [1, 1]} : vector<8x96xf32> to vector<8x32xf32>
    %468 = vector.extract_strided_slice %456 {offsets = [0, 64], sizes = [8, 32], strides = [1, 1]} : vector<8x96xf32> to vector<8x32xf32>
    %469 = arith.mulf %465, %468 : vector<8x32xf32>
    %470 = arith.addf %467, %469 : vector<8x32xf32>
    %471 = math.tanh %470 : vector<8x32xf32>
    %cst_96 = arith.constant 1.000000e+00 : f32
    %472 = vector.broadcast %cst_96 : f32 to vector<8x32xf32>
    %473 = arith.subf %472, %466 : vector<8x32xf32>
    %474 = arith.mulf %473, %471 : vector<8x32xf32>
    %475 = arith.mulf %466, %405 : vector<8x32xf32>
    %476 = arith.addf %474, %475 : vector<8x32xf32>
    %477 = arith.truncf %476 : vector<8x32xf32> to vector<8x32xbf16>
    %cst_97 = arith.constant dense<0.000000e+00> : vector<8x64xf32>
    %478 = tpu.matmul %477, %211, %cst_97 {dimension_numbers = #tpu.dot_dimension_numbers<[1], [1], [0], [0], [0, 0, 1, 0], [], []>} : vector<8x32xbf16>, vector<64x32xbf16>, vector<8x64xf32> -> vector<8x64xf32>
    %479 = arith.addf %478, %233 : vector<8x64xf32>
    %cst_98 = arith.constant dense<0xFF800000> : vector<8xf32>
    %480 = vector.multi_reduction <maximumf>, %479, %cst_98 [1] : vector<8x64xf32> to vector<8xf32>
    %481 = vector.shape_cast %480 : vector<8xf32> to vector<8x1xf32>
    %482 = vector.broadcast %481 : vector<8x1xf32> to vector<8x64xf32>
    %483 = arith.subf %479, %482 : vector<8x64xf32>
    %484 = math.exp %483 : vector<8x64xf32>
    %cst_99 = arith.constant dense<0.000000e+00> : vector<8xf32>
    %485 = vector.multi_reduction <add>, %484, %cst_99 [1] : vector<8x64xf32> to vector<8xf32>
    %486 = vector.shape_cast %485 : vector<8xf32> to vector<8x1xf32>
    %487 = tpu.reciprocal %486 {approx = true} : vector<8x1xf32> -> vector<8x1xf32>
    %488 = vector.broadcast %487 : vector<8x1xf32> to vector<8x64xf32>
    %489 = arith.mulf %484, %488 : vector<8x64xf32>
    %490 = arith.truncf %489 : vector<8x64xf32> to vector<8x64xbf16>
    %cst_100 = arith.constant dense<0.000000e+00> : vector<8x32xf32>
    %491 = tpu.matmul %490, %211, %cst_100 {dimension_numbers = #tpu.dot_dimension_numbers<[1], [0], [0], [1], [0, 0, 1, 1], [], []>} : vector<8x64xbf16>, vector<64x32xbf16>, vector<8x32xf32> -> vector<8x32xf32>
    %492 = tpu.concatenate %491, %476 in 1 : vector<8x32xf32>, vector<8x32xf32> -> vector<8x64xf32>
    %493 = arith.truncf %492 : vector<8x64xf32> to vector<8x64xbf16>
    %cst_101 = arith.constant dense<0.000000e+00> : vector<8x32xf32>
    %494 = tpu.matmul %493, %214, %cst_101 {dimension_numbers = #tpu.dot_dimension_numbers<[1], [0], [0], [1], [0, 0, 1, 1], [], []>} : vector<8x64xbf16>, vector<64x32xbf16>, vector<8x32xf32> -> vector<8x32xf32>
    %495 = arith.addf %494, %221 : vector<8x32xf32>
    %496 = math.tanh %495 : vector<8x32xf32>
    %497 = arith.truncf %496 : vector<8x32xf32> to vector<8x32xbf16>
    %cst_102 = arith.constant dense<0.000000e+00> : vector<8x32xf32>
    %498 = tpu.matmul %497, %215, %cst_102 {dimension_numbers = #tpu.dot_dimension_numbers<[1], [0], [0], [1], [0, 0, 1, 1], [], []>} : vector<8x32xbf16>, vector<32x32xbf16>, vector<8x32xf32> -> vector<8x32xf32>
    %499 = arith.addf %498, %224 : vector<8x32xf32>
    %cst_103 = arith.constant dense<0xFF800000> : vector<8xf32>
    %500 = vector.multi_reduction <maximumf>, %499, %cst_103 [1] : vector<8x32xf32> to vector<8xf32>
    %501 = vector.shape_cast %500 : vector<8xf32> to vector<8x1xf32>
    %502 = vector.broadcast %501 : vector<8x1xf32> to vector<8x32xf32>
    %503 = arith.subf %499, %502 : vector<8x32xf32>
    %504 = math.exp %503 : vector<8x32xf32>
    %cst_104 = arith.constant dense<0.000000e+00> : vector<8xf32>
    %505 = vector.multi_reduction <add>, %504, %cst_104 [1] : vector<8x32xf32> to vector<8xf32>
    %506 = vector.shape_cast %505 : vector<8xf32> to vector<8x1xf32>
    %507 = math.log %506 : vector<8x1xf32>
    %508 = vector.broadcast %507 : vector<8x1xf32> to vector<8x32xf32>
    %509 = arith.subf %503, %508 : vector<8x32xf32>
    %c3_105 = arith.constant 3 : index
    %c0_106 = arith.constant 0 : index
    %c0_107 = arith.constant 0 : index
    %510 = vector.load %arg4[%c3_105, %c0_106, %c0_107] : memref<6x8x32xf32, #tpu.memory_space<vmem>>, vector<1x8x32xf32>
    %511 = vector.shape_cast %510 : vector<1x8x32xf32> to vector<8x32xf32>
    %512 = vector.shape_cast %509 : vector<8x32xf32> to vector<1x8x32xf32>
    tpu.vector_store %arg4[%c3_105, %c0_106, %c0_107], %512 {strides = array<i32>} : memref<6x8x32xf32, #tpu.memory_space<vmem>>, vector<1x8x32xf32>,
    %513 = vector.broadcast %501 : vector<8x1xf32> to vector<8x32xf32>
    %514 = arith.cmpf oge, %499, %513 : vector<8x32xf32>
    %c32_i32_108 = arith.constant 32 : i32
    %515 = vector.broadcast %c32_i32_108 : i32 to vector<8x32xi32>
    %516 = arith.select %514, %225, %515 : vector<8x32xi1>, vector<8x32xi32>
    %cst_109 = arith.constant dense<2147483647> : vector<8xi32>
    %517 = vector.multi_reduction <minsi>, %516, %cst_109 [1] : vector<8x32xi32> to vector<8xi32>
    %518 = vector.shape_cast %517 : vector<8xi32> to vector<8x1xi32>
    %519 = vector.broadcast %518 : vector<8x1xi32> to vector<8x32xi32>
    %520 = arith.cmpi eq, %225, %519 : vector<8x32xi32>
    %521 = arith.extui %520 : vector<8x32xi1> to vector<8x32xi32>
    %522 = arith.sitofp %521 : vector<8x32xi32> to vector<8x32xf32>
    %523 = arith.truncf %522 : vector<8x32xf32> to vector<8x32xbf16>
    %cst_110 = arith.constant dense<0.000000e+00> : vector<8x96xf32>
    %524 = tpu.matmul %523, %212, %cst_110 {dimension_numbers = #tpu.dot_dimension_numbers<[1], [0], [0], [1], [0, 0, 1, 1], [], []>} : vector<8x32xbf16>, vector<32x96xbf16>, vector<8x96xf32> -> vector<8x96xf32>
    %525 = arith.truncf %476 : vector<8x32xf32> to vector<8x32xbf16>
    %cst_111 = arith.constant dense<0.000000e+00> : vector<8x96xf32>
    %526 = tpu.matmul %525, %213, %cst_111 {dimension_numbers = #tpu.dot_dimension_numbers<[1], [0], [0], [1], [0, 0, 1, 1], [], []>} : vector<8x32xbf16>, vector<32x96xbf16>, vector<8x96xf32> -> vector<8x96xf32>
    %527 = arith.addf %526, %218 : vector<8x96xf32>
    %528 = vector.extract_strided_slice %524 {offsets = [0, 0], sizes = [8, 64], strides = [1, 1]} : vector<8x96xf32> to vector<8x64xf32>
    %529 = vector.extract_strided_slice %527 {offsets = [0, 0], sizes = [8, 64], strides = [1, 1]} : vector<8x96xf32> to vector<8x64xf32>
    %530 = arith.addf %528, %529 : vector<8x64xf32>
    %531 = arith.negf %530 : vector<8x64xf32>
    %532 = math.exp %531 : vector<8x64xf32>
    %cst_112 = arith.constant 1.000000e+00 : f32
    %533 = vector.broadcast %cst_112 : f32 to vector<8x64xf32>
    %534 = arith.addf %533, %532 : vector<8x64xf32>
    %535 = arith.divf %533, %534 : vector<8x64xf32>
    %536 = vector.extract_strided_slice %535 {offsets = [0, 0], sizes = [8, 32], strides = [1, 1]} : vector<8x64xf32> to vector<8x32xf32>
    %537 = vector.extract_strided_slice %535 {offsets = [0, 32], sizes = [8, 32], strides = [1, 1]} : vector<8x64xf32> to vector<8x32xf32>
    %538 = vector.extract_strided_slice %524 {offsets = [0, 64], sizes = [8, 32], strides = [1, 1]} : vector<8x96xf32> to vector<8x32xf32>
    %539 = vector.extract_strided_slice %527 {offsets = [0, 64], sizes = [8, 32], strides = [1, 1]} : vector<8x96xf32> to vector<8x32xf32>
    %540 = arith.mulf %536, %539 : vector<8x32xf32>
    %541 = arith.addf %538, %540 : vector<8x32xf32>
    %542 = math.tanh %541 : vector<8x32xf32>
    %cst_113 = arith.constant 1.000000e+00 : f32
    %543 = vector.broadcast %cst_113 : f32 to vector<8x32xf32>
    %544 = arith.subf %543, %537 : vector<8x32xf32>
    %545 = arith.mulf %544, %542 : vector<8x32xf32>
    %546 = arith.mulf %537, %476 : vector<8x32xf32>
    %547 = arith.addf %545, %546 : vector<8x32xf32>
    %548 = arith.truncf %547 : vector<8x32xf32> to vector<8x32xbf16>
    %cst_114 = arith.constant dense<0.000000e+00> : vector<8x64xf32>
    %549 = tpu.matmul %548, %211, %cst_114 {dimension_numbers = #tpu.dot_dimension_numbers<[1], [1], [0], [0], [0, 0, 1, 0], [], []>} : vector<8x32xbf16>, vector<64x32xbf16>, vector<8x64xf32> -> vector<8x64xf32>
    %550 = arith.addf %549, %233 : vector<8x64xf32>
    %cst_115 = arith.constant dense<0xFF800000> : vector<8xf32>
    %551 = vector.multi_reduction <maximumf>, %550, %cst_115 [1] : vector<8x64xf32> to vector<8xf32>
    %552 = vector.shape_cast %551 : vector<8xf32> to vector<8x1xf32>
    %553 = vector.broadcast %552 : vector<8x1xf32> to vector<8x64xf32>
    %554 = arith.subf %550, %553 : vector<8x64xf32>
    %555 = math.exp %554 : vector<8x64xf32>
    %cst_116 = arith.constant dense<0.000000e+00> : vector<8xf32>
    %556 = vector.multi_reduction <add>, %555, %cst_116 [1] : vector<8x64xf32> to vector<8xf32>
    %557 = vector.shape_cast %556 : vector<8xf32> to vector<8x1xf32>
    %558 = tpu.reciprocal %557 {approx = true} : vector<8x1xf32> -> vector<8x1xf32>
    %559 = vector.broadcast %558 : vector<8x1xf32> to vector<8x64xf32>
    %560 = arith.mulf %555, %559 : vector<8x64xf32>
    %561 = arith.truncf %560 : vector<8x64xf32> to vector<8x64xbf16>
    %cst_117 = arith.constant dense<0.000000e+00> : vector<8x32xf32>
    %562 = tpu.matmul %561, %211, %cst_117 {dimension_numbers = #tpu.dot_dimension_numbers<[1], [0], [0], [1], [0, 0, 1, 1], [], []>} : vector<8x64xbf16>, vector<64x32xbf16>, vector<8x32xf32> -> vector<8x32xf32>
    %563 = tpu.concatenate %562, %547 in 1 : vector<8x32xf32>, vector<8x32xf32> -> vector<8x64xf32>
    %564 = arith.truncf %563 : vector<8x64xf32> to vector<8x64xbf16>
    %cst_118 = arith.constant dense<0.000000e+00> : vector<8x32xf32>
    %565 = tpu.matmul %564, %214, %cst_118 {dimension_numbers = #tpu.dot_dimension_numbers<[1], [0], [0], [1], [0, 0, 1, 1], [], []>} : vector<8x64xbf16>, vector<64x32xbf16>, vector<8x32xf32> -> vector<8x32xf32>
    %566 = arith.addf %565, %221 : vector<8x32xf32>
    %567 = math.tanh %566 : vector<8x32xf32>
    %568 = arith.truncf %567 : vector<8x32xf32> to vector<8x32xbf16>
    %cst_119 = arith.constant dense<0.000000e+00> : vector<8x32xf32>
    %569 = tpu.matmul %568, %215, %cst_119 {dimension_numbers = #tpu.dot_dimension_numbers<[1], [0], [0], [1], [0, 0, 1, 1], [], []>} : vector<8x32xbf16>, vector<32x32xbf16>, vector<8x32xf32> -> vector<8x32xf32>
    %570 = arith.addf %569, %224 : vector<8x32xf32>
    %cst_120 = arith.constant dense<0xFF800000> : vector<8xf32>
    %571 = vector.multi_reduction <maximumf>, %570, %cst_120 [1] : vector<8x32xf32> to vector<8xf32>
    %572 = vector.shape_cast %571 : vector<8xf32> to vector<8x1xf32>
    %573 = vector.broadcast %572 : vector<8x1xf32> to vector<8x32xf32>
    %574 = arith.subf %570, %573 : vector<8x32xf32>
    %575 = math.exp %574 : vector<8x32xf32>
    %cst_121 = arith.constant dense<0.000000e+00> : vector<8xf32>
    %576 = vector.multi_reduction <add>, %575, %cst_121 [1] : vector<8x32xf32> to vector<8xf32>
    %577 = vector.shape_cast %576 : vector<8xf32> to vector<8x1xf32>
    %578 = math.log %577 : vector<8x1xf32>
    %579 = vector.broadcast %578 : vector<8x1xf32> to vector<8x32xf32>
    %580 = arith.subf %574, %579 : vector<8x32xf32>
    %c4_122 = arith.constant 4 : index
    %c0_123 = arith.constant 0 : index
    %c0_124 = arith.constant 0 : index
    %581 = vector.load %arg4[%c4_122, %c0_123, %c0_124] : memref<6x8x32xf32, #tpu.memory_space<vmem>>, vector<1x8x32xf32>
    %582 = vector.shape_cast %581 : vector<1x8x32xf32> to vector<8x32xf32>
    %583 = vector.shape_cast %580 : vector<8x32xf32> to vector<1x8x32xf32>
    tpu.vector_store %arg4[%c4_122, %c0_123, %c0_124], %583 {strides = array<i32>} : memref<6x8x32xf32, #tpu.memory_space<vmem>>, vector<1x8x32xf32>,
    %584 = vector.broadcast %572 : vector<8x1xf32> to vector<8x32xf32>
    %585 = arith.cmpf oge, %570, %584 : vector<8x32xf32>
    %c32_i32_125 = arith.constant 32 : i32
    %586 = vector.broadcast %c32_i32_125 : i32 to vector<8x32xi32>
    %587 = arith.select %585, %225, %586 : vector<8x32xi1>, vector<8x32xi32>
    %cst_126 = arith.constant dense<2147483647> : vector<8xi32>
    %588 = vector.multi_reduction <minsi>, %587, %cst_126 [1] : vector<8x32xi32> to vector<8xi32>
    %589 = vector.shape_cast %588 : vector<8xi32> to vector<8x1xi32>
    %590 = vector.broadcast %589 : vector<8x1xi32> to vector<8x32xi32>
    %591 = arith.cmpi eq, %225, %590 : vector<8x32xi32>
    %592 = arith.extui %591 : vector<8x32xi1> to vector<8x32xi32>
    %593 = arith.sitofp %592 : vector<8x32xi32> to vector<8x32xf32>
    %594 = arith.truncf %593 : vector<8x32xf32> to vector<8x32xbf16>
    %cst_127 = arith.constant dense<0.000000e+00> : vector<8x96xf32>
    %595 = tpu.matmul %594, %212, %cst_127 {dimension_numbers = #tpu.dot_dimension_numbers<[1], [0], [0], [1], [0, 0, 1, 1], [], []>} : vector<8x32xbf16>, vector<32x96xbf16>, vector<8x96xf32> -> vector<8x96xf32>
    %596 = arith.truncf %547 : vector<8x32xf32> to vector<8x32xbf16>
    %cst_128 = arith.constant dense<0.000000e+00> : vector<8x96xf32>
    %597 = tpu.matmul %596, %213, %cst_128 {dimension_numbers = #tpu.dot_dimension_numbers<[1], [0], [0], [1], [0, 0, 1, 1], [], []>} : vector<8x32xbf16>, vector<32x96xbf16>, vector<8x96xf32> -> vector<8x96xf32>
    %598 = arith.addf %597, %218 : vector<8x96xf32>
    %599 = vector.extract_strided_slice %595 {offsets = [0, 0], sizes = [8, 64], strides = [1, 1]} : vector<8x96xf32> to vector<8x64xf32>
    %600 = vector.extract_strided_slice %598 {offsets = [0, 0], sizes = [8, 64], strides = [1, 1]} : vector<8x96xf32> to vector<8x64xf32>
    %601 = arith.addf %599, %600 : vector<8x64xf32>
    %602 = arith.negf %601 : vector<8x64xf32>
    %603 = math.exp %602 : vector<8x64xf32>
    %cst_129 = arith.constant 1.000000e+00 : f32
    %604 = vector.broadcast %cst_129 : f32 to vector<8x64xf32>
    %605 = arith.addf %604, %603 : vector<8x64xf32>
    %606 = arith.divf %604, %605 : vector<8x64xf32>
    %607 = vector.extract_strided_slice %606 {offsets = [0, 0], sizes = [8, 32], strides = [1, 1]} : vector<8x64xf32> to vector<8x32xf32>
    %608 = vector.extract_strided_slice %606 {offsets = [0, 32], sizes = [8, 32], strides = [1, 1]} : vector<8x64xf32> to vector<8x32xf32>
    %609 = vector.extract_strided_slice %595 {offsets = [0, 64], sizes = [8, 32], strides = [1, 1]} : vector<8x96xf32> to vector<8x32xf32>
    %610 = vector.extract_strided_slice %598 {offsets = [0, 64], sizes = [8, 32], strides = [1, 1]} : vector<8x96xf32> to vector<8x32xf32>
    %611 = arith.mulf %607, %610 : vector<8x32xf32>
    %612 = arith.addf %609, %611 : vector<8x32xf32>
    %613 = math.tanh %612 : vector<8x32xf32>
    %cst_130 = arith.constant 1.000000e+00 : f32
    %614 = vector.broadcast %cst_130 : f32 to vector<8x32xf32>
    %615 = arith.subf %614, %608 : vector<8x32xf32>
    %616 = arith.mulf %615, %613 : vector<8x32xf32>
    %617 = arith.mulf %608, %547 : vector<8x32xf32>
    %618 = arith.addf %616, %617 : vector<8x32xf32>
    %619 = arith.truncf %618 : vector<8x32xf32> to vector<8x32xbf16>
    %cst_131 = arith.constant dense<0.000000e+00> : vector<8x64xf32>
    %620 = tpu.matmul %619, %211, %cst_131 {dimension_numbers = #tpu.dot_dimension_numbers<[1], [1], [0], [0], [0, 0, 1, 0], [], []>} : vector<8x32xbf16>, vector<64x32xbf16>, vector<8x64xf32> -> vector<8x64xf32>
    %621 = arith.addf %620, %233 : vector<8x64xf32>
    %cst_132 = arith.constant dense<0xFF800000> : vector<8xf32>
    %622 = vector.multi_reduction <maximumf>, %621, %cst_132 [1] : vector<8x64xf32> to vector<8xf32>
    %623 = vector.shape_cast %622 : vector<8xf32> to vector<8x1xf32>
    %624 = vector.broadcast %623 : vector<8x1xf32> to vector<8x64xf32>
    %625 = arith.subf %621, %624 : vector<8x64xf32>
    %626 = math.exp %625 : vector<8x64xf32>
    %cst_133 = arith.constant dense<0.000000e+00> : vector<8xf32>
    %627 = vector.multi_reduction <add>, %626, %cst_133 [1] : vector<8x64xf32> to vector<8xf32>
    %628 = vector.shape_cast %627 : vector<8xf32> to vector<8x1xf32>
    %629 = tpu.reciprocal %628 {approx = true} : vector<8x1xf32> -> vector<8x1xf32>
    %630 = vector.broadcast %629 : vector<8x1xf32> to vector<8x64xf32>
    %631 = arith.mulf %626, %630 : vector<8x64xf32>
    %632 = arith.truncf %631 : vector<8x64xf32> to vector<8x64xbf16>
    %cst_134 = arith.constant dense<0.000000e+00> : vector<8x32xf32>
    %633 = tpu.matmul %632, %211, %cst_134 {dimension_numbers = #tpu.dot_dimension_numbers<[1], [0], [0], [1], [0, 0, 1, 1], [], []>} : vector<8x64xbf16>, vector<64x32xbf16>, vector<8x32xf32> -> vector<8x32xf32>
    %634 = tpu.concatenate %633, %618 in 1 : vector<8x32xf32>, vector<8x32xf32> -> vector<8x64xf32>
    %635 = arith.truncf %634 : vector<8x64xf32> to vector<8x64xbf16>
    %cst_135 = arith.constant dense<0.000000e+00> : vector<8x32xf32>
    %636 = tpu.matmul %635, %214, %cst_135 {dimension_numbers = #tpu.dot_dimension_numbers<[1], [0], [0], [1], [0, 0, 1, 1], [], []>} : vector<8x64xbf16>, vector<64x32xbf16>, vector<8x32xf32> -> vector<8x32xf32>
    %637 = arith.addf %636, %221 : vector<8x32xf32>
    %638 = math.tanh %637 : vector<8x32xf32>
    %639 = arith.truncf %638 : vector<8x32xf32> to vector<8x32xbf16>
    %cst_136 = arith.constant dense<0.000000e+00> : vector<8x32xf32>
    %640 = tpu.matmul %639, %215, %cst_136 {dimension_numbers = #tpu.dot_dimension_numbers<[1], [0], [0], [1], [0, 0, 1, 1], [], []>} : vector<8x32xbf16>, vector<32x32xbf16>, vector<8x32xf32> -> vector<8x32xf32>
    %641 = arith.addf %640, %224 : vector<8x32xf32>
    %cst_137 = arith.constant dense<0xFF800000> : vector<8xf32>
    %642 = vector.multi_reduction <maximumf>, %641, %cst_137 [1] : vector<8x32xf32> to vector<8xf32>
    %643 = vector.shape_cast %642 : vector<8xf32> to vector<8x1xf32>
    %644 = vector.broadcast %643 : vector<8x1xf32> to vector<8x32xf32>
    %645 = arith.subf %641, %644 : vector<8x32xf32>
    %646 = math.exp %645 : vector<8x32xf32>
    %cst_138 = arith.constant dense<0.000000e+00> : vector<8xf32>
    %647 = vector.multi_reduction <add>, %646, %cst_138 [1] : vector<8x32xf32> to vector<8xf32>
    %648 = vector.shape_cast %647 : vector<8xf32> to vector<8x1xf32>
    %649 = math.log %648 : vector<8x1xf32>
    %650 = vector.broadcast %649 : vector<8x1xf32> to vector<8x32xf32>
    %651 = arith.subf %645, %650 : vector<8x32xf32>
    %c5 = arith.constant 5 : index
    %c0_139 = arith.constant 0 : index
    %c0_140 = arith.constant 0 : index
    %652 = vector.load %arg4[%c5, %c0_139, %c0_140] : memref<6x8x32xf32, #tpu.memory_space<vmem>>, vector<1x8x32xf32>
    %653 = vector.shape_cast %652 : vector<1x8x32xf32> to vector<8x32xf32>
    %654 = vector.shape_cast %651 : vector<8x32xf32> to vector<1x8x32xf32>
    tpu.vector_store %arg4[%c5, %c0_139, %c0_140], %654 {strides = array<i32>} : memref<6x8x32xf32, #tpu.memory_space<vmem>>, vector<1x8x32xf32>,
    %655 = vector.broadcast %643 : vector<8x1xf32> to vector<8x32xf32>
    %656 = arith.cmpf oge, %641, %655 : vector<8x32xf32>
    %c32_i32_141 = arith.constant 32 : i32
    %657 = vector.broadcast %c32_i32_141 : i32 to vector<8x32xi32>
    %658 = arith.select %656, %225, %657 : vector<8x32xi1>, vector<8x32xi32>
    %cst_142 = arith.constant dense<2147483647> : vector<8xi32>
    %659 = vector.multi_reduction <minsi>, %658, %cst_142 [1] : vector<8x32xi32> to vector<8xi32>
    %660 = vector.shape_cast %659 : vector<8xi32> to vector<8x1xi32>
    %661 = tpu.concatenate %305, %376, %447, %518, %589, %660 in 1 : vector<8x1xi32>, vector<8x1xi32>, vector<8x1xi32>, vector<8x1xi32>, vector<8x1xi32>, vector<8x1xi32> -> vector<8x6xi32>
    %c0_143 = arith.constant 0 : index
    %c0_144 = arith.constant 0 : index
    %662 = vector.load %arg5[%c0_143, %c0_144] : memref<8x6xi32, #tpu.memory_space<vmem>>, vector<8x6xi32>
    tpu.vector_store %arg5[%c0_143, %c0_144], %661 {strides = array<i32>} : memref<8x6xi32, #tpu.memory_space<vmem>>, vector<8x6xi32>,
    return
  }
}

</mosaic_0001>

<llo_original>
// kernel: seq2seq_forward.1
$region0: #{seq2seq_forward.1}
  #allocation0 [shape = 'u32[]', space=smem, size = 0x4, offset = 0x4, fixed_abs, tag = 'smem constant byte address 0x4 - core index']
  #allocation1 [shape = 'u32[144,128]{1,0:T(1,128)}', space=vmem, size = 0x12000, scoped, tag = 'internal scratch']
  %s0 = inlined_call_operand.vmem [shape: bf16[64,16], index: 0, kind: input, shape index: {}]
  %s1 = inlined_call_operand.vmem [shape: s32[8,1], index: 1, kind: input, shape index: {}]
  %s2 = inlined_call_operand.vmem [shape: bf16[208,128], index: 2, kind: input, shape index: {}]
  %s3 = inlined_call_operand.vmem [shape: f32[8,128], index: 3, kind: input, shape index: {}]
  %s4 = inlined_call_operand.hbm [shape: f32[6,8,32], index: 4, kind: output, shape index: {0}]
  %s5 = inlined_call_operand.hbm [shape: s32[8,6], index: 5, kind: output, shape index: {1}]
  %6 = xla_tuple %s4, %s5
  %s7 = sld [smem:[#allocation0]]
  $region34: #{seq2seq_forward.1} parent=0
    _
  %s9 = ssub.s32 1, %s7
  %s10 = scalar_select 0, %s9, %s7
  $region1: #{seq2seq_forward.1} parent=0
    #allocation2 [shape = 'u8[24576]{0}', space=vmem, size = 0x6000, scoped, tag = 'output window, operand 0, single buffered']
    #allocation3 [shape = 's32[1]{0}', space=sflag, size = 0x4, scoped, tag = 'scoped memory for seq2seq_forward.1']
    #allocation4 [shape = 'u8[4096]{0}', space=vmem, size = 0x1000, scoped, tag = 'output window, operand 1, single buffered']
    #allocation5 [shape = 's32[1]{0}', space=sflag, size = 0x4, scoped, tag = 'scoped memory for seq2seq_forward.1']
    %11 = vsyncpa [#allocation3], 0
    %12 = vsyncpa [#allocation5], 0
    // Predicated region
    $region2: #{seq2seq_forward.1} parent=1 // pred_check
      _
    $region3: #{seq2seq_forward.1} parent=1 // pred_check_branch
      %14 = sbr.rel (0) target = $region5
    $region4: #{seq2seq_forward.1} parent=1 // pred_region
      _
    $region5: #{seq2seq_forward.1} parent=1 // pred_fallthru
      _
    // Predicated region
    $region6: #{seq2seq_forward.1} parent=1 // pred_check
      _
    $region7: #{seq2seq_forward.1} parent=1 // pred_check_branch
      %16 = sbr.rel (0) target = $region9
    $region8: #{seq2seq_forward.1} parent=1 // pred_region
      _
    $region9: #{seq2seq_forward.1} parent=1 // pred_fallthru
      _
    // Predicated region
    $region10: #{seq2seq_forward.1} parent=1 // pred_check
      _
    $region11: #{seq2seq_forward.1} parent=1 // pred_check_branch
      %18 = sbr.rel (0) target = $region13
    $region12: #{seq2seq_forward.1} parent=1 // pred_region
      _
    $region13: #{seq2seq_forward.1} parent=1 // pred_fallthru
      _
    // Predicated region
    $region14: #{seq2seq_forward.1} parent=1 // pred_check
      _
    $region15: #{seq2seq_forward.1} parent=1 // pred_check_branch
      %20 = sbr.rel (0) target = $region17
    $region16: #{seq2seq_forward.1} parent=1 // pred_region
      _
    $region17: #{seq2seq_forward.1} parent=1 // pred_fallthru
      _
    %v22 = vld [vmem:[%s2] sm:$0xf]
    %v23 = vld [vmem:[%s2 + $0x4] sm:$0xf]
    %v24 = vld [vmem:[%s2 + $0x8] sm:$0xf]
    %v25 = vld [vmem:[%s2 + $0xc] sm:$0xf]
    %v26 = vld [vmem:[%s2 + $0x10] sm:$0xf]
    %v27 = vld [vmem:[%s2 + $0x14] sm:$0xf]
    %v28 = vld [vmem:[%s3] sm:$0x1]
    %v29 = vld [vmem:[%s3 + $0x1] sm:$0x1]
    %v30 = vlaneseq
    %v31 = vshrl.u32 %v30, 7
    %v32 = vsub.s32 0, %v31
    %v33 = vrot.slane %v29, %v32
    %v34 = vld [vmem:[%s0] sm:$0xf]
    %v35 = vld [vmem:[%s0 + $0x4] sm:$0xf]
    %v36 = vld [vmem:[%s0 + $0x8] sm:$0xf]
    %v37 = vld [vmem:[%s0 + $0xc] sm:$0xf]
    %v38 = vld [vmem:[%s0 + $0x10] sm:$0xf]
    %v39 = vld [vmem:[%s0 + $0x14] sm:$0xf]
    %v40 = vld [vmem:[%s0 + $0x18] sm:$0xf]
    %v41 = vld [vmem:[%s0 + $0x1c] sm:$0xf]
    %v42 = vlaneseq
    %v43 = vshrl.u32 %v42, 7
    %v44 = vsub.s32 0, %v43
    %v45 = vrot.slane %v28, %v44
    %v54 = vunpack.c.l.b16 %v34
    %v55 = vunpack.c.l.b16 %v35
    %v56 = vunpack.c.l.b16 %v36
    %v57 = vunpack.c.l.b16 %v37
    %v58 = vunpack.c.l.b16 %v38
    %v59 = vunpack.c.l.b16 %v39
    %v60 = vunpack.c.l.b16 %v40
    %v61 = vunpack.c.l.b16 %v41
    %v62 = vpack.c.b16 %v55, %v54
    %v63 = vpack.c.b16 %v57, %v56
    %v64 = vpack.c.b16 %v59, %v58
    %v65 = vpack.c.b16 %v61, %v60
    %v68 = vunpack.c.l.b16 %v22
    %v69 = vunpack.c.l.b16 %v23
    %v70 = vpack.c.b16 %v69, %v68
    %vm72 = vcmask 130048
    %v74 = vsel %vm72, %v62, 0
    %v77 = vsel %vm72, %v63, 0
    %v80 = vsel %vm72, %v64, 0
    %v83 = vsel %vm72, %v65, 0
    %85 = vmatprep.subr.bf16.mxu0 0
    %86 = vmatpush1.bf16.msra.mxu0 %v70
    %87 = vmatprep.subr.bf16.mxu0 0
    %88 = vmatpush1.bf16.msra.mxu0 0
    %89 = vmatprep.subr.bf16.mxu0 0
    %90 = vmatpush1.bf16.msra.mxu0 0
    %91 = vmatprep.subr.bf16.mxu0 0
    %92 = vmatpush1.bf16.msra.mxu0 0
    %93 = vmatprep.subr.bf16.mxu0 0
    %94 = vmatpush1.bf16.msra.mxu0 0
    %95 = vmatprep.subr.bf16.mxu0 0
    %96 = vmatpush1.bf16.msra.mxu0 0
    %97 = vmatprep.subr.bf16.mxu0 0
    %98 = vmatpush1.bf16.msra.mxu0 0
    %99 = vmatprep.subr.bf16.mxu0 0
    %100 = vmatpush1.bf16.msra.mxu0 0
    %101 = vmatprep.subr.bf16.mxu0 0
    %102 = vmatpush1.bf16.msra.mxu0 0
    %103 = vmatprep.subr.bf16.mxu0 0
    %104 = vmatpush1.bf16.msra.mxu0 0
    %105 = vmatprep.subr.bf16.mxu0 0
    %106 = vmatpush1.bf16.msra.mxu0 0
    %107 = vmatprep.subr.bf16.mxu0 0
    %108 = vmatpush1.bf16.msra.mxu0 0
    %109 = vmatprep.subr.bf16.mxu0 0
    %110 = vmatpush1.bf16.msra.mxu0 0
    %111 = vmatprep.subr.bf16.mxu0 0
    %112 = vmatpush1.bf16.msra.mxu0 0
    %113 = vmatprep.subr.bf16.mxu0 0
    %114 = vmatpush1.bf16.msra.mxu0 0
    %115 = vmatprep.subr.bf16.mxu0 0
    %116 = vmatpush1.bf16.msra.mxu0 0
    %117 = vmatprep.mubr.bf16.mxu0 0
    %118 = vmatmul.mubr.bf16.gmra.mrb[0].mxu0 %v74
    %v119 = vpop.f32.mrb[0].mxu0
    %v120 = vadd.f32 %v45, %v119
    %v121 = vpop.f32.mrb[0].mxu0
    %v122 = vpop.f32.mrb[0].mxu0
    %v123 = vadd.f32 %v45, %v122
    %v124 = vpop.f32.mrb[0].mxu0
    %125 = vmatprep.mubr.bf16.mxu0 0
    %126 = vmatmul.mubr.bf16.gmra.mrb[0].mxu0 %v77
    %v127 = vpop.f32.mrb[0].mxu0
    %v128 = vadd.f32 %v45, %v127
    %v129 = vpop.f32.mrb[0].mxu0
    %v130 = vpop.f32.mrb[0].mxu0
    %v131 = vadd.f32 %v45, %v130
    %v132 = vpop.f32.mrb[0].mxu0
    %133 = vmatprep.mubr.bf16.mxu0 0
    %134 = vmatmul.mubr.bf16.gmra.mrb[0].mxu0 %v80
    %v135 = vpop.f32.mrb[0].mxu0
    %v136 = vadd.f32 %v45, %v135
    %v137 = vpop.f32.mrb[0].mxu0
    %v138 = vpop.f32.mrb[0].mxu0
    %v139 = vadd.f32 %v45, %v138
    %v140 = vpop.f32.mrb[0].mxu0
    %141 = vmatprep.mubr.bf16.mxu0 0
    %142 = vmatmul.mubr.bf16.gmra.mrb[0].mxu0 %v83
    %v143 = vpop.f32.mrb[0].mxu0
    %v144 = vadd.f32 %v45, %v143
    %v145 = vpop.f32.mrb[0].mxu0
    %v146 = vpop.f32.mrb[0].mxu0
    %v147 = vadd.f32 %v45, %v146
    %v148 = vpop.f32.mrb[0].mxu0
    %149 = vdwg.mxu0
    %v154 = vunpack.c.l.b16 %v24
    %v155 = vunpack.c.l.b16 %v25
    %v156 = vunpack.c.l.b16 %v26
    %v157 = vunpack.c.l.b16 %v27
    %v158 = vpack.c.b16 %v155, %v154
    %v159 = vpack.c.b16 %v157, %v156
    %vm162 = vcmask 261120
    %v164 = vsel %vm162, 0, 0
    %166 = vmatprep.subr.bf16.mxu0 0
    %167 = vmatpush1.bf16.msra.mxu0 %v158
    %168 = vmatprep.subr.bf16.mxu0 0
    %169 = vmatpush1.bf16.msra.mxu0 %v159
    %170 = vmatprep.subr.bf16.mxu0 0
    %171 = vmatpush1.bf16.msra.mxu0 0
    %172 = vmatprep.subr.bf16.mxu0 0
    %173 = vmatpush1.bf16.msra.mxu0 0
    %174 = vmatprep.subr.bf16.mxu0 0
    %175 = vmatpush1.bf16.msra.mxu0 0
    %176 = vmatprep.subr.bf16.mxu0 0
    %177 = vmatpush1.bf16.msra.mxu0 0
    %178 = vmatprep.subr.bf16.mxu0 0
    %179 = vmatpush1.bf16.msra.mxu0 0
    %180 = vmatprep.subr.bf16.mxu0 0
    %181 = vmatpush1.bf16.msra.mxu0 0
    %182 = vmatprep.subr.bf16.mxu0 0
    %183 = vmatpush1.bf16.msra.mxu0 0
    %184 = vmatprep.subr.bf16.mxu0 0
    %185 = vmatpush1.bf16.msra.mxu0 0
    %186 = vmatprep.subr.bf16.mxu0 0
    %187 = vmatpush1.bf16.msra.mxu0 0
    %188 = vmatprep.subr.bf16.mxu0 0
    %189 = vmatpush1.bf16.msra.mxu0 0
    %190 = vmatprep.subr.bf16.mxu0 0
    %191 = vmatpush1.bf16.msra.mxu0 0
    %192 = vmatprep.subr.bf16.mxu0 0
    %193 = vmatpush1.bf16.msra.mxu0 0
    %194 = vmatprep.subr.bf16.mxu0 0
    %195 = vmatpush1.bf16.msra.mxu0 0
    %196 = vmatprep.subr.bf16.mxu0 0
    %197 = vmatpush1.bf16.msra.mxu0 0
    %198 = vmatprep.mubr.bf16.mxu0 0
    %199 = vmatmul.mubr.bf16.gmra.mrb[0].mxu0 %v164
    %v200 = vpop.f32.mrb[0].mxu0
    %v201 = vadd.f32 %v33, %v200
    %v202 = vpop.f32.mrb[0].mxu0
    %v203 = vpop.f32.mrb[0].mxu0
    %v204 = vpop.f32.mrb[0].mxu0
    %205 = vdwg.mxu0
    %v206 = vadd.f32 %v120, %v201
    %v207 = vxor.u32 %v206, 2147483648
    %v208 = vmul.f32 %v207, 1.442695
    %v209 = vpow.pop %v208
    %v210 = vadd.f32 %v209, 1.0
    %v211 = vrcp.pop %v210
    %v212 = vmul.f32 1.0, %v211
    %214 = vrot.lane.b32.xlu0 %v201, 64
    %v215 = vpop.permute.xlu0 %214
    %v217 = vmul.f32 %v212, %v215
    %219 = vrot.lane.b32.xlu0 %v217, 64
    %v220 = vpop.permute.xlu0 %219
    %v222 = vadd.f32 %v120, %v220
    %v223 = vtanh.pop %v222
    %v224 = vsub.f32 1.0, %v212
    %226 = vrot.lane.b32.xlu0 %v223, 96
    %v227 = vpop.permute.xlu0 %226
    %v229 = vmul.f32 %v224, %v227
    %v230 = vmul.f32 %v212, 0.0
    %v231 = vadd.f32 %v229, %v230
    %v232 = vpack.c.bf16 %v231, %v231
    %234 = vrot.lane.b32.xlu0 %v232, 96
    %v235 = vpop.permute.xlu0 %234
    %v237 = vsel %vm162, %v235, 0
    %239 = vmatprep.subr.bf16.mxu0 0
    %240 = vmatpush1.bf16.msra.mxu0 %v158
    %241 = vmatprep.subr.bf16.mxu0 0
    %242 = vmatpush1.bf16.msra.mxu0 %v159
    %243 = vmatprep.subr.bf16.mxu0 0
    %244 = vmatpush1.bf16.msra.mxu0 0
    %245 = vmatprep.subr.bf16.mxu0 0
    %246 = vmatpush1.bf16.msra.mxu0 0
    %247 = vmatprep.subr.bf16.mxu0 0
    %248 = vmatpush1.bf16.msra.mxu0 0
    %249 = vmatprep.subr.bf16.mxu0 0
    %250 = vmatpush1.bf16.msra.mxu0 0
    %251 = vmatprep.subr.bf16.mxu0 0
    %252 = vmatpush1.bf16.msra.mxu0 0
    %253 = vmatprep.subr.bf16.mxu0 0
    %254 = vmatpush1.bf16.msra.mxu0 0
    %255 = vmatprep.subr.bf16.mxu0 0
    %256 = vmatpush1.bf16.msra.mxu0 0
    %257 = vmatprep.subr.bf16.mxu0 0
    %258 = vmatpush1.bf16.msra.mxu0 0
    %259 = vmatprep.subr.bf16.mxu0 0
    %260 = vmatpush1.bf16.msra.mxu0 0
    %261 = vmatprep.subr.bf16.mxu0 0
    %262 = vmatpush1.bf16.msra.mxu0 0
    %263 = vmatprep.subr.bf16.mxu0 0
    %264 = vmatpush1.bf16.msra.mxu0 0
    %265 = vmatprep.subr.bf16.mxu0 0
    %266 = vmatpush1.bf16.msra.mxu0 0
    %267 = vmatprep.subr.bf16.mxu0 0
    %268 = vmatpush1.bf16.msra.mxu0 0
    %269 = vmatprep.subr.bf16.mxu0 0
    %270 = vmatpush1.bf16.msra.mxu0 0
    %271 = vmatprep.mubr.bf16.mxu0 0
    %272 = vmatmul.mubr.bf16.gmra.mrb[0].mxu0 %v237
    %v273 = vpop.f32.mrb[0].mxu0
    %v274 = vadd.f32 %v33, %v273
    %v275 = vpop.f32.mrb[0].mxu0
    %v276 = vpop.f32.mrb[0].mxu0
    %v277 = vpop.f32.mrb[0].mxu0
    %278 = vdwg.mxu0
    %v279 = vadd.f32 %v123, %v274
    %v280 = vxor.u32 %v279, 2147483648
    %v281 = vmul.f32 %v280, 1.442695
    %v282 = vpow.pop %v281
    %v283 = vadd.f32 %v282, 1.0
    %v284 = vrcp.pop %v283
    %v285 = vmul.f32 1.0, %v284
    %287 = vrot.lane.b32.xlu0 %v274, 64
    %v288 = vpop.permute.xlu0 %287
    %v290 = vmul.f32 %v285, %v288
    %292 = vrot.lane.b32.xlu0 %v290, 64
    %v293 = vpop.permute.xlu0 %292
    %v295 = vadd.f32 %v123, %v293
    %v296 = vtanh.pop %v295
    %v297 = vsub.f32 1.0, %v285
    %299 = vrot.lane.b32.xlu0 %v296, 96
    %v300 = vpop.permute.xlu0 %299
    %v302 = vmul.f32 %v297, %v300
    %v303 = vmul.f32 %v285, %v231
    %v304 = vadd.f32 %v302, %v303
    %v305 = vpack.c.bf16 %v304, %v304
    %307 = vrot.lane.b32.xlu0 %v305, 96
    %v308 = vpop.permute.xlu0 %307
    %v310 = vsel %vm162, %v308, 0
    %312 = vmatprep.subr.bf16.mxu0 0
    %313 = vmatpush1.bf16.msra.mxu0 %v158
    %314 = vmatprep.subr.bf16.mxu0 0
    %315 = vmatpush1.bf16.msra.mxu0 %v159
    %316 = vmatprep.subr.bf16.mxu0 0
    %317 = vmatpush1.bf16.msra.mxu0 0
    %318 = vmatprep.subr.bf16.mxu0 0
    %319 = vmatpush1.bf16.msra.mxu0 0
    %320 = vmatprep.subr.bf16.mxu0 0
    %321 = vmatpush1.bf16.msra.mxu0 0
    %322 = vmatprep.subr.bf16.mxu0 0
    %323 = vmatpush1.bf16.msra.mxu0 0
    %324 = vmatprep.subr.bf16.mxu0 0
    %325 = vmatpush1.bf16.msra.mxu0 0
    %326 = vmatprep.subr.bf16.mxu0 0
    %327 = vmatpush1.bf16.msra.mxu0 0
    %328 = vmatprep.subr.bf16.mxu0 0
    %329 = vmatpush1.bf16.msra.mxu0 0
    %330 = vmatprep.subr.bf16.mxu0 0
    %331 = vmatpush1.bf16.msra.mxu0 0
    %332 = vmatprep.subr.bf16.mxu0 0
    %333 = vmatpush1.bf16.msra.mxu0 0
    %334 = vmatprep.subr.bf16.mxu0 0
    %335 = vmatpush1.bf16.msra.mxu0 0
    %336 = vmatprep.subr.bf16.mxu0 0
    %337 = vmatpush1.bf16.msra.mxu0 0
    %338 = vmatprep.subr.bf16.mxu0 0
    %339 = vmatpush1.bf16.msra.mxu0 0
    %340 = vmatprep.subr.bf16.mxu0 0
    %341 = vmatpush1.bf16.msra.mxu0 0
    %342 = vmatprep.subr.bf16.mxu0 0
    %343 = vmatpush1.bf16.msra.mxu0 0
    %344 = vmatprep.mubr.bf16.mxu0 0
    %345 = vmatmul.mubr.bf16.gmra.mrb[0].mxu0 %v310
    %v346 = vpop.f32.mrb[0].mxu0
    %v347 = vadd.f32 %v33, %v346
    %v348 = vpop.f32.mrb[0].mxu0
    %v349 = vpop.f32.mrb[0].mxu0
    %v350 = vpop.f32.mrb[0].mxu0
    %351 = vdwg.mxu0
    %v352 = vadd.f32 %v128, %v347
    %v353 = vxor.u32 %v352, 2147483648
    %v354 = vmul.f32 %v353, 1.442695
    %v355 = vpow.pop %v354
    %v356 = vadd.f32 %v355, 1.0
    %v357 = vrcp.pop %v356
    %v358 = vmul.f32 1.0, %v357
    %360 = vrot.lane.b32.xlu0 %v347, 64
    %v361 = vpop.permute.xlu0 %360
    %v363 = vmul.f32 %v358, %v361
    %365 = vrot.lane.b32.xlu0 %v363, 64
    %v366 = vpop.permute.xlu0 %365
    %v368 = vadd.f32 %v128, %v366
    %v369 = vtanh.pop %v368
    %v370 = vsub.f32 1.0, %v358
    %372 = vrot.lane.b32.xlu0 %v369, 96
    %v373 = vpop.permute.xlu0 %372
    %v375 = vmul.f32 %v370, %v373
    %v376 = vmul.f32 %v358, %v304
    %v377 = vadd.f32 %v375, %v376
    %v378 = vpack.c.bf16 %v377, %v377
    %380 = vrot.lane.b32.xlu0 %v378, 96
    %v381 = vpop.permute.xlu0 %380
    %v383 = vsel %vm162, %v381, 0
    %385 = vmatprep.subr.bf16.mxu0 0
    %386 = vmatpush1.bf16.msra.mxu0 %v158
    %387 = vmatprep.subr.bf16.mxu0 0
    %388 = vmatpush1.bf16.msra.mxu0 %v159
    %389 = vmatprep.subr.bf16.mxu0 0
    %390 = vmatpush1.bf16.msra.mxu0 0
    %391 = vmatprep.subr.bf16.mxu0 0
    %392 = vmatpush1.bf16.msra.mxu0 0
    %393 = vmatprep.subr.bf16.mxu0 0
    %394 = vmatpush1.bf16.msra.mxu0 0
    %395 = vmatprep.subr.bf16.mxu0 0
    %396 = vmatpush1.bf16.msra.mxu0 0
    %397 = vmatprep.subr.bf16.mxu0 0
    %398 = vmatpush1.bf16.msra.mxu0 0
    %399 = vmatprep.subr.bf16.mxu0 0
    %400 = vmatpush1.bf16.msra.mxu0 0
    %401 = vmatprep.subr.bf16.mxu0 0
    %402 = vmatpush1.bf16.msra.mxu0 0
    %403 = vmatprep.subr.bf16.mxu0 0
    %404 = vmatpush1.bf16.msra.mxu0 0
    %405 = vmatprep.subr.bf16.mxu0 0
    %406 = vmatpush1.bf16.msra.mxu0 0
    %407 = vmatprep.subr.bf16.mxu0 0
    %408 = vmatpush1.bf16.msra.mxu0 0
    %409 = vmatprep.subr.bf16.mxu0 0
    %410 = vmatpush1.bf16.msra.mxu0 0
    %411 = vmatprep.subr.bf16.mxu0 0
    %412 = vmatpush1.bf16.msra.mxu0 0
    %413 = vmatprep.subr.bf16.mxu0 0
    %414 = vmatpush1.bf16.msra.mxu0 0
    %415 = vmatprep.subr.bf16.mxu0 0
    %416 = vmatpush1.bf16.msra.mxu0 0
    %417 = vmatprep.mubr.bf16.mxu0 0
    %418 = vmatmul.mubr.bf16.gmra.mrb[0].mxu0 %v383
    %v419 = vpop.f32.mrb[0].mxu0
    %v420 = vadd.f32 %v33, %v419
    %v421 = vpop.f32.mrb[0].mxu0
    %v422 = vpop.f32.mrb[0].mxu0
    %v423 = vpop.f32.mrb[0].mxu0
    %424 = vdwg.mxu0
    %v425 = vadd.f32 %v131, %v420
    %v426 = vxor.u32 %v425, 2147483648
    %v427 = vmul.f32 %v426, 1.442695
    %v428 = vpow.pop %v427
    %v429 = vadd.f32 %v428, 1.0
    %v430 = vrcp.pop %v429
    %v431 = vmul.f32 1.0, %v430
    %433 = vrot.lane.b32.xlu0 %v420, 64
    %v434 = vpop.permute.xlu0 %433
    %v436 = vmul.f32 %v431, %v434
    %438 = vrot.lane.b32.xlu0 %v436, 64
    %v439 = vpop.permute.xlu0 %438
    %v441 = vadd.f32 %v131, %v439
    %v442 = vtanh.pop %v441
    %v443 = vsub.f32 1.0, %v431
    %445 = vrot.lane.b32.xlu0 %v442, 96
    %v446 = vpop.permute.xlu0 %445
    %v448 = vmul.f32 %v443, %v446
    %v449 = vmul.f32 %v431, %v377
    %v450 = vadd.f32 %v448, %v449
    %v451 = vpack.c.bf16 %v450, %v450
    %453 = vrot.lane.b32.xlu0 %v451, 96
    %v454 = vpop.permute.xlu0 %453
    %v456 = vsel %vm162, %v454, 0
    %458 = vmatprep.subr.bf16.mxu0 0
    %459 = vmatpush1.bf16.msra.mxu0 %v158
    %460 = vmatprep.subr.bf16.mxu0 0
    %461 = vmatpush1.bf16.msra.mxu0 %v159
    %462 = vmatprep.subr.bf16.mxu0 0
    %463 = vmatpush1.bf16.msra.mxu0 0
    %464 = vmatprep.subr.bf16.mxu0 0
    %465 = vmatpush1.bf16.msra.mxu0 0
    %466 = vmatprep.subr.bf16.mxu0 0
    %467 = vmatpush1.bf16.msra.mxu0 0
    %468 = vmatprep.subr.bf16.mxu0 0
    %469 = vmatpush1.bf16.msra.mxu0 0
    %470 = vmatprep.subr.bf16.mxu0 0
    %471 = vmatpush1.bf16.msra.mxu0 0
    %472 = vmatprep.subr.bf16.mxu0 0
    %473 = vmatpush1.bf16.msra.mxu0 0
    %474 = vmatprep.subr.bf16.mxu0 0
    %475 = vmatpush1.bf16.msra.mxu0 0
    %476 = vmatprep.subr.bf16.mxu0 0
    %477 = vmatpush1.bf16.msra.mxu0 0
    %478 = vmatprep.subr.bf16.mxu0 0
    %479 = vmatpush1.bf16.msra.mxu0 0
    %480 = vmatprep.subr.bf16.mxu0 0
    %481 = vmatpush1.bf16.msra.mxu0 0
    %482 = vmatprep.subr.bf16.mxu0 0
    %483 = vmatpush1.bf16.msra.mxu0 0
    %484 = vmatprep.subr.bf16.mxu0 0
    %485 = vmatpush1.bf16.msra.mxu0 0
    %486 = vmatprep.subr.bf16.mxu0 0
    %487 = vmatpush1.bf16.msra.mxu0 0
    %488 = vmatprep.subr.bf16.mxu0 0
    %489 = vmatpush1.bf16.msra.mxu0 0
    %490 = vmatprep.mubr.bf16.mxu0 0
    %491 = vmatmul.mubr.bf16.gmra.mrb[0].mxu0 %v456
    %v492 = vpop.f32.mrb[0].mxu0
    %v493 = vadd.f32 %v33, %v492
    %v494 = vpop.f32.mrb[0].mxu0
    %v495 = vpop.f32.mrb[0].mxu0
    %v496 = vpop.f32.mrb[0].mxu0
    %497 = vdwg.mxu0
    %v498 = vadd.f32 %v136, %v493
    %v499 = vxor.u32 %v498, 2147483648
    %v500 = vmul.f32 %v499, 1.442695
    %v501 = vpow.pop %v500
    %v502 = vadd.f32 %v501, 1.0
    %v503 = vrcp.pop %v502
    %v504 = vmul.f32 1.0, %v503
    %506 = vrot.lane.b32.xlu0 %v493, 64
    %v507 = vpop.permute.xlu0 %506
    %v509 = vmul.f32 %v504, %v507
    %511 = vrot.lane.b32.xlu0 %v509, 64
    %v512 = vpop.permute.xlu0 %511
    %v514 = vadd.f32 %v136, %v512
    %v515 = vtanh.pop %v514
    %v516 = vsub.f32 1.0, %v504
    %518 = vrot.lane.b32.xlu0 %v515, 96
    %v519 = vpop.permute.xlu0 %518
    %v521 = vmul.f32 %v516, %v519
    %v522 = vmul.f32 %v504, %v450
    %v523 = vadd.f32 %v521, %v522
    %v524 = vpack.c.bf16 %v523, %v523
    %526 = vrot.lane.b32.xlu0 %v524, 96
    %v527 = vpop.permute.xlu0 %526
    %v529 = vsel %vm162, %v527, 0
    %531 = vmatprep.subr.bf16.mxu0 0
    %532 = vmatpush1.bf16.msra.mxu0 %v158
    %533 = vmatprep.subr.bf16.mxu0 0
    %534 = vmatpush1.bf16.msra.mxu0 %v159
    %535 = vmatprep.subr.bf16.mxu0 0
    %536 = vmatpush1.bf16.msra.mxu0 0
    %537 = vmatprep.subr.bf16.mxu0 0
    %538 = vmatpush1.bf16.msra.mxu0 0
    %539 = vmatprep.subr.bf16.mxu0 0
    %540 = vmatpush1.bf16.msra.mxu0 0
    %541 = vmatprep.subr.bf16.mxu0 0
    %542 = vmatpush1.bf16.msra.mxu0 0
    %543 = vmatprep.subr.bf16.mxu0 0
    %544 = vmatpush1.bf16.msra.mxu0 0
    %545 = vmatprep.subr.bf16.mxu0 0
    %546 = vmatpush1.bf16.msra.mxu0 0
    %547 = vmatprep.subr.bf16.mxu0 0
    %548 = vmatpush1.bf16.msra.mxu0 0
    %549 = vmatprep.subr.bf16.mxu0 0
    %550 = vmatpush1.bf16.msra.mxu0 0
    %551 = vmatprep.subr.bf16.mxu0 0
    %552 = vmatpush1.bf16.msra.mxu0 0
    %553 = vmatprep.subr.bf16.mxu0 0
    %554 = vmatpush1.bf16.msra.mxu0 0
    %555 = vmatprep.subr.bf16.mxu0 0
    %556 = vmatpush1.bf16.msra.mxu0 0
    %557 = vmatprep.subr.bf16.mxu0 0
    %558 = vmatpush1.bf16.msra.mxu0 0
    %559 = vmatprep.subr.bf16.mxu0 0
    %560 = vmatpush1.bf16.msra.mxu0 0
    %561 = vmatprep.subr.bf16.mxu0 0
    %562 = vmatpush1.bf16.msra.mxu0 0
    %563 = vmatprep.mubr.bf16.mxu0 0
    %564 = vmatmul.mubr.bf16.gmra.mrb[0].mxu0 %v529
    %v565 = vpop.f32.mrb[0].mxu0
    %v566 = vadd.f32 %v33, %v565
    %v567 = vpop.f32.mrb[0].mxu0
    %v568 = vpop.f32.mrb[0].mxu0
    %v569 = vpop.f32.mrb[0].mxu0
    %570 = vdwg.mxu0
    %v571 = vadd.f32 %v139, %v566
    %v572 = vxor.u32 %v571, 2147483648
    %v573 = vmul.f32 %v572, 1.442695
    %v574 = vpow.pop %v573
    %v575 = vadd.f32 %v574, 1.0
    %v576 = vrcp.pop %v575
    %v577 = vmul.f32 1.0, %v576
    %579 = vrot.lane.b32.xlu0 %v566, 64
    %v580 = vpop.permute.xlu0 %579
    %v582 = vmul.f32 %v577, %v580
    %584 = vrot.lane.b32.xlu0 %v582, 64
    %v585 = vpop.permute.xlu0 %584
    %v587 = vadd.f32 %v139, %v585
    %v588 = vtanh.pop %v587
    %v589 = vsub.f32 1.0, %v577
    %591 = vrot.lane.b32.xlu0 %v588, 96
    %v592 = vpop.permute.xlu0 %591
    %v594 = vmul.f32 %v589, %v592
    %v595 = vmul.f32 %v577, %v523
    %v596 = vadd.f32 %v594, %v595
    %v597 = vpack.c.bf16 %v596, %v596
    %599 = vrot.lane.b32.xlu0 %v597, 96
    %v600 = vpop.permute.xlu0 %599
    %v602 = vsel %vm162, %v600, 0
    %604 = vmatprep.subr.bf16.mxu0 0
    %605 = vmatpush1.bf16.msra.mxu0 %v158
    %606 = vmatprep.subr.bf16.mxu0 0
    %607 = vmatpush1.bf16.msra.mxu0 %v159
    %608 = vmatprep.subr.bf16.mxu0 0
    %609 = vmatpush1.bf16.msra.mxu0 0
    %610 = vmatprep.subr.bf16.mxu0 0
    %611 = vmatpush1.bf16.msra.mxu0 0
    %612 = vmatprep.subr.bf16.mxu0 0
    %613 = vmatpush1.bf16.msra.mxu0 0
    %614 = vmatprep.subr.bf16.mxu0 0
    %615 = vmatpush1.bf16.msra.mxu0 0
    %616 = vmatprep.subr.bf16.mxu0 0
    %617 = vmatpush1.bf16.msra.mxu0 0
    %618 = vmatprep.subr.bf16.mxu0 0
    %619 = vmatpush1.bf16.msra.mxu0 0
    %620 = vmatprep.subr.bf16.mxu0 0
    %621 = vmatpush1.bf16.msra.mxu0 0
    %622 = vmatprep.subr.bf16.mxu0 0
    %623 = vmatpush1.bf16.msra.mxu0 0
    %624 = vmatprep.subr.bf16.mxu0 0
    %625 = vmatpush1.bf16.msra.mxu0 0
    %626 = vmatprep.subr.bf16.mxu0 0
    %627 = vmatpush1.bf16.msra.mxu0 0
    %628 = vmatprep.subr.bf16.mxu0 0
    %629 = vmatpush1.bf16.msra.mxu0 0
    %630 = vmatprep.subr.bf16.mxu0 0
    %631 = vmatpush1.bf16.msra.mxu0 0
    %632 = vmatprep.subr.bf16.mxu0 0
    %633 = vmatpush1.bf16.msra.mxu0 0
    %634 = vmatprep.subr.bf16.mxu0 0
    %635 = vmatpush1.bf16.msra.mxu0 0
    %636 = vmatprep.mubr.bf16.mxu0 0
    %637 = vmatmul.mubr.bf16.gmra.mrb[0].mxu0 %v602
    %v638 = vpop.f32.mrb[0].mxu0
    %v639 = vadd.f32 %v33, %v638
    %v640 = vpop.f32.mrb[0].mxu0
    %v641 = vpop.f32.mrb[0].mxu0
    %v642 = vpop.f32.mrb[0].mxu0
    %643 = vdwg.mxu0
    %v644 = vadd.f32 %v144, %v639
    %v645 = vxor.u32 %v644, 2147483648
    %v646 = vmul.f32 %v645, 1.442695
    %v647 = vpow.pop %v646
    %v648 = vadd.f32 %v647, 1.0
    %v649 = vrcp.pop %v648
    %v650 = vmul.f32 1.0, %v649
    %652 = vrot.lane.b32.xlu0 %v639, 64
    %v653 = vpop.permute.xlu0 %652
    %v655 = vmul.f32 %v650, %v653
    %657 = vrot.lane.b32.xlu0 %v655, 64
    %v658 = vpop.permute.xlu0 %657
    %v660 = vadd.f32 %v144, %v658
    %v661 = vtanh.pop %v660
    %v662 = vsub.f32 1.0, %v650
    %664 = vrot.lane.b32.xlu0 %v661, 96
    %v665 = vpop.permute.xlu0 %664
    %v667 = vmul.f32 %v662, %v665
    %v668 = vmul.f32 %v650, %v596
    %v669 = vadd.f32 %v667, %v668
    %v670 = vpack.c.bf16 %v669, %v669
    %672 = vrot.lane.b32.xlu0 %v670, 96
    %v673 = vpop.permute.xlu0 %672
    %v675 = vsel %vm162, %v673, 0
    %677 = vmatprep.subr.bf16.mxu0 0
    %678 = vmatpush1.bf16.msra.mxu0 %v158
    %679 = vmatprep.subr.bf16.mxu0 0
    %680 = vmatpush1.bf16.msra.mxu0 %v159
    %681 = vmatprep.subr.bf16.mxu0 0
    %682 = vmatpush1.bf16.msra.mxu0 0
    %683 = vmatprep.subr.bf16.mxu0 0
    %684 = vmatpush1.bf16.msra.mxu0 0
    %685 = vmatprep.subr.bf16.mxu0 0
    %686 = vmatpush1.bf16.msra.mxu0 0
    %687 = vmatprep.subr.bf16.mxu0 0
    %688 = vmatpush1.bf16.msra.mxu0 0
    %689 = vmatprep.subr.bf16.mxu0 0
    %690 = vmatpush1.bf16.msra.mxu0 0
    %691 = vmatprep.subr.bf16.mxu0 0
    %692 = vmatpush1.bf16.msra.mxu0 0
    %693 = vmatprep.subr.bf16.mxu0 0
    %694 = vmatpush1.bf16.msra.mxu0 0
    %695 = vmatprep.subr.bf16.mxu0 0
    %696 = vmatpush1.bf16.msra.mxu0 0
    %697 = vmatprep.subr.bf16.mxu0 0
    %698 = vmatpush1.bf16.msra.mxu0 0
    %699 = vmatprep.subr.bf16.mxu0 0
    %700 = vmatpush1.bf16.msra.mxu0 0
    %701 = vmatprep.subr.bf16.mxu0 0
    %702 = vmatpush1.bf16.msra.mxu0 0
    %703 = vmatprep.subr.bf16.mxu0 0
    %704 = vmatpush1.bf16.msra.mxu0 0
    %705 = vmatprep.subr.bf16.mxu0 0
    %706 = vmatpush1.bf16.msra.mxu0 0
    %707 = vmatprep.subr.bf16.mxu0 0
    %708 = vmatpush1.bf16.msra.mxu0 0
    %709 = vmatprep.mubr.bf16.mxu0 0
    %710 = vmatmul.mubr.bf16.gmra.mrb[0].mxu0 %v675
    %v711 = vpop.f32.mrb[0].mxu0
    %v712 = vadd.f32 %v33, %v711
    %v713 = vpop.f32.mrb[0].mxu0
    %v714 = vpop.f32.mrb[0].mxu0
    %v715 = vpop.f32.mrb[0].mxu0
    %716 = vdwg.mxu0
    %v717 = vadd.f32 %v147, %v712
    %v718 = vxor.u32 %v717, 2147483648
    %v719 = vmul.f32 %v718, 1.442695
    %v720 = vpow.pop %v719
    %v721 = vadd.f32 %v720, 1.0
    %v722 = vrcp.pop %v721
    %v723 = vmul.f32 1.0, %v722
    %725 = vrot.lane.b32.xlu0 %v712, 64
    %v726 = vpop.permute.xlu0 %725
    %v728 = vmul.f32 %v723, %v726
    %730 = vrot.lane.b32.xlu0 %v728, 64
    %v731 = vpop.permute.xlu0 %730
    %v733 = vadd.f32 %v147, %v731
    %v734 = vtanh.pop %v733
    %v735 = vsub.f32 1.0, %v723
    %737 = vrot.lane.b32.xlu0 %v734, 96
    %v738 = vpop.permute.xlu0 %737
    %v740 = vmul.f32 %v735, %v738
    %v741 = vmul.f32 %v723, %v669
    %v742 = vadd.f32 %v740, %v741
    %v743 = vpack.c.bf16 %v742, %v742
    %v744 = vrot.slane %v305, 4
    %v745 = vrot.slane %v451, 4
    %v746 = vrot.slane %v597, 4
    %v748 = vrot.slane %v743, 4
    %vm749 = vcmask 1043456
    %v752 = vsel %vm749, %v232, %v744
    %v755 = vsel %vm749, %v378, %v745
    %v758 = vsel %vm749, %v524, %v746
    %v761 = vsel %vm749, %v670, %v748
    %v762 = vld [vmem:[%s2 + $0x18] sm:$0xf]
    %v763 = vld [vmem:[%s2 + $0x1c] sm:$0xf]
    %v764 = vld [vmem:[%s2 + $0x20] sm:$0xf]
    %v765 = vld [vmem:[%s2 + $0x24] sm:$0xf]
    %v766 = vld [vmem:[%s2 + $0x28] sm:$0xf]
    %v767 = vld [vmem:[%s2 + $0x2c] sm:$0xf]
    %v768 = vld [vmem:[%s2 + $0x30] sm:$0xf]
    %v769 = vld [vmem:[%s2 + $0x34] sm:$0xf]
    %v770 = vld [vmem:[%s2 + $0x38] sm:$0xf]
    %v771 = vld [vmem:[%s2 + $0x3c] sm:$0xf]
    %v772 = vld [vmem:[%s2 + $0x40] sm:$0xf]
    %v773 = vld [vmem:[%s2 + $0x44] sm:$0xf]
    %v774 = vld [vmem:[%s2 + $0x48] sm:$0xf]
    %v775 = vld [vmem:[%s2 + $0x4c] sm:$0xf]
    %v776 = vld [vmem:[%s2 + $0x50] sm:$0xf]
    %v777 = vld [vmem:[%s2 + $0x54] sm:$0xf]
    %v778 = vld [vmem:[%s2 + $0x58] sm:$0xf]
    %v779 = vld [vmem:[%s2 + $0x5c] sm:$0xf]
    %v780 = vld [vmem:[%s2 + $0x60] sm:$0xf]
    %v781 = vld [vmem:[%s2 + $0x64] sm:$0xf]
    %v782 = vld [vmem:[%s3 + $0x2] sm:$0x1]
    %v783 = vlaneseq
    %v784 = vshrl.u32 %v783, 7
    %v785 = vsub.s32 0, %v784
    %v786 = vrot.slane %v782, %v785
    %v787 = vld [vmem:[%s3 + $0x3] sm:$0x1]
    %v788 = vlaneseq
    %v789 = vshrl.u32 %v788, 7
    %v790 = vsub.s32 0, %v789
    %v791 = vrot.slane %v787, %v790
    %v792 = vld [vmem:[%s3 + $0x4] sm:$0x1]
    %v793 = vlaneseq
    %v794 = vshrl.u32 %v793, 7
    %v795 = vsub.s32 0, %v794
    %v796 = vrot.slane %v792, %v795
    %v797 = vlaneseq
    %v798 = vand.u32 %v797, 127
    %v799 = vlaneseq
    %v800 = vshrl.u32 %v799, 7
    %v801 = vand.u32 %v798, 7
    %vm802 = vcmp.eq.s32.totalorder %v801, %v800
    %v803 = vsel %vm802, 0.0, -1e+30
    %v804 = vld [vmem:[%s1] sm:$0xff]
    %805 = vset.pattern.permute.xlu0 0
    %806 = vperm.xlu0 %805, %v804
    %v807 = vpop.permute.xlu0 %806
    %vm808 = vcmp.eq.s32.totalorder %v798, %v807
    %v809 = vsel %vm808, 1, 0
    %v810 = vcvt.s32.f32 %v809
    %v811 = vpack.c.bf16 %v810, %v810
    %v816 = vunpack.c.l.b16 %v762
    %v817 = vunpack.c.l.b16 %v763
    %v818 = vunpack.c.l.b16 %v764
    %v819 = vunpack.c.l.b16 %v765
    %v820 = vpack.c.b16 %v817, %v816
    %v821 = vpack.c.b16 %v819, %v818
    %v825 = vsel %vm162, %v811, 0
    %827 = vmatprep.subr.bf16.mxu0 0
    %828 = vmatpush1.bf16.msra.mxu0 %v820
    %829 = vmatprep.subr.bf16.mxu0 0
    %830 = vmatpush1.bf16.msra.mxu0 %v821
    %831 = vmatprep.subr.bf16.mxu0 0
    %832 = vmatpush1.bf16.msra.mxu0 0
    %833 = vmatprep.subr.bf16.mxu0 0
    %834 = vmatpush1.bf16.msra.mxu0 0
    %835 = vmatprep.subr.bf16.mxu0 0
    %836 = vmatpush1.bf16.msra.mxu0 0
    %837 = vmatprep.subr.bf16.mxu0 0
    %838 = vmatpush1.bf16.msra.mxu0 0
    %839 = vmatprep.subr.bf16.mxu0 0
    %840 = vmatpush1.bf16.msra.mxu0 0
    %841 = vmatprep.subr.bf16.mxu0 0
    %842 = vmatpush1.bf16.msra.mxu0 0
    %843 = vmatprep.subr.bf16.mxu0 0
    %844 = vmatpush1.bf16.msra.mxu0 0
    %845 = vmatprep.subr.bf16.mxu0 0
    %846 = vmatpush1.bf16.msra.mxu0 0
    %847 = vmatprep.subr.bf16.mxu0 0
    %848 = vmatpush1.bf16.msra.mxu0 0
    %849 = vmatprep.subr.bf16.mxu0 0
    %850 = vmatpush1.bf16.msra.mxu0 0
    %851 = vmatprep.subr.bf16.mxu0 0
    %852 = vmatpush1.bf16.msra.mxu0 0
    %853 = vmatprep.subr.bf16.mxu0 0
    %854 = vmatpush1.bf16.msra.mxu0 0
    %855 = vmatprep.subr.bf16.mxu0 0
    %856 = vmatpush1.bf16.msra.mxu0 0
    %857 = vmatprep.subr.bf16.mxu0 0
    %858 = vmatpush1.bf16.msra.mxu0 0
    %859 = vmatprep.mubr.bf16.mxu0 0
    %860 = vmatmul.mubr.bf16.gmra.mrb[0].mxu0 %v825
    %v861 = vpop.f32.mrb[0].mxu0
    %v862 = vadd.f32 0.0, %v861
    %v863 = vpop.f32.mrb[0].mxu0
    %v864 = vpop.f32.mrb[0].mxu0
    %v865 = vpop.f32.mrb[0].mxu0
    %866 = vdwg.mxu0
    %867 = vrot.lane.b32.xlu0 %v743, 96
    %v868 = vpop.permute.xlu0 %867
    %v873 = vunpack.c.l.b16 %v766
    %v874 = vunpack.c.l.b16 %v767
    %v875 = vunpack.c.l.b16 %v768
    %v876 = vunpack.c.l.b16 %v769
    %v877 = vpack.c.b16 %v874, %v873
    %v878 = vpack.c.b16 %v876, %v875
    %v882 = vsel %vm162, %v868, 0
    %884 = vmatprep.subr.bf16.mxu0 0
    %885 = vmatpush1.bf16.msra.mxu0 %v877
    %886 = vmatprep.subr.bf16.mxu0 0
    %887 = vmatpush1.bf16.msra.mxu0 %v878
    %888 = vmatprep.subr.bf16.mxu0 0
    %889 = vmatpush1.bf16.msra.mxu0 0
    %890 = vmatprep.subr.bf16.mxu0 0
    %891 = vmatpush1.bf16.msra.mxu0 0
    %892 = vmatprep.subr.bf16.mxu0 0
    %893 = vmatpush1.bf16.msra.mxu0 0
    %894 = vmatprep.subr.bf16.mxu0 0
    %895 = vmatpush1.bf16.msra.mxu0 0
    %896 = vmatprep.subr.bf16.mxu0 0
    %897 = vmatpush1.bf16.msra.mxu0 0
    %898 = vmatprep.subr.bf16.mxu0 0
    %899 = vmatpush1.bf16.msra.mxu0 0
    %900 = vmatprep.subr.bf16.mxu0 0
    %901 = vmatpush1.bf16.msra.mxu0 0
    %902 = vmatprep.subr.bf16.mxu0 0
    %903 = vmatpush1.bf16.msra.mxu0 0
    %904 = vmatprep.subr.bf16.mxu0 0
    %905 = vmatpush1.bf16.msra.mxu0 0
    %906 = vmatprep.subr.bf16.mxu0 0
    %907 = vmatpush1.bf16.msra.mxu0 0
    %908 = vmatprep.subr.bf16.mxu0 0
    %909 = vmatpush1.bf16.msra.mxu0 0
    %910 = vmatprep.subr.bf16.mxu0 0
    %911 = vmatpush1.bf16.msra.mxu0 0
    %912 = vmatprep.subr.bf16.mxu0 0
    %913 = vmatpush1.bf16.msra.mxu0 0
    %914 = vmatprep.subr.bf16.mxu0 0
    %915 = vmatpush1.bf16.msra.mxu0 0
    %916 = vmatprep.mubr.bf16.mxu0 0
    %917 = vmatmul.mubr.bf16.gmra.mrb[0].mxu0 %v882
    %v918 = vpop.f32.mrb[0].mxu0
    %v919 = vadd.f32 %v786, %v918
    %v920 = vpop.f32.mrb[0].mxu0
    %v921 = vpop.f32.mrb[0].mxu0
    %v922 = vpop.f32.mrb[0].mxu0
    %923 = vdwg.mxu0
    %v924 = vadd.f32 %v862, %v919
    %v925 = vxor.u32 %v924, 2147483648
    %v926 = vmul.f32 %v925, 1.442695
    %v927 = vpow.pop %v926
    %v928 = vadd.f32 %v927, 1.0
    %v929 = vrcp.pop %v928
    %v930 = vmul.f32 1.0, %v929
    %932 = vrot.lane.b32.xlu0 %v919, 64
    %v933 = vpop.permute.xlu0 %932
    %v935 = vmul.f32 %v930, %v933
    %937 = vrot.lane.b32.xlu0 %v935, 64
    %v938 = vpop.permute.xlu0 %937
    %v940 = vadd.f32 %v862, %v938
    %v941 = vtanh.pop %v940
    %v942 = vsub.f32 1.0, %v930
    %944 = vrot.lane.b32.xlu0 %v941, 96
    %v945 = vpop.permute.xlu0 %944
    %v947 = vmul.f32 %v942, %v945
    %v948 = vmul.f32 %v930, %v742
    %v949 = vadd.f32 %v947, %v948
    %v950 = vpack.c.bf16 %v949, %v949
    %952 = vrot.lane.b32.xlu0 %v950, 96
    %v953 = vpop.permute.xlu0 %952
    %958 = vrot.lane.b32.xlu0 %v752, 96
    %v959 = vpop.permute.xlu0 %958
    %960 = vrot.lane.b32.xlu0 %v755, 96
    %v961 = vpop.permute.xlu0 %960
    %962 = vrot.lane.b32.xlu0 %v758, 96
    %v963 = vpop.permute.xlu0 %962
    %964 = vrot.lane.b32.xlu0 %v761, 96
    %v965 = vpop.permute.xlu0 %964
    %v967 = vsel %vm162, %v953, 0
    %v970 = vsel %vm162, %v959, 0
    %v973 = vsel %vm162, %v961, 0
    %v976 = vsel %vm162, %v963, 0
    %v979 = vsel %vm162, %v965, 0
    %981 = vmatprep.subr.bf16.mxu0 0
    %982 = vmatpush1.bf16.xpose.msra.mxu0 %v970
    %983 = vmatprep.subr.bf16.mxu0 0
    %984 = vmatpush1.bf16.xpose.msra.mxu0 %v973
    %985 = vmatprep.subr.bf16.mxu0 0
    %986 = vmatpush1.bf16.xpose.msra.mxu0 %v976
    %987 = vmatprep.subr.bf16.mxu0 0
    %988 = vmatpush1.bf16.xpose.msra.mxu0 %v979
    %989 = vmatprep.subr.bf16.mxu0 0
    %990 = vmatpush1.bf16.xpose.msra.mxu0 0
    %991 = vmatprep.subr.bf16.mxu0 0
    %992 = vmatpush1.bf16.xpose.msra.mxu0 0
    %993 = vmatprep.subr.bf16.mxu0 0
    %994 = vmatpush1.bf16.xpose.msra.mxu0 0
    %995 = vmatprep.subr.bf16.mxu0 0
    %996 = vmatpush1.bf16.xpose.msra.mxu0 0
    %997 = vmatprep.subr.bf16.mxu0 0
    %998 = vmatpush1.bf16.xpose.msra.mxu0 0
    %999 = vmatprep.subr.bf16.mxu0 0
    %1000 = vmatpush1.bf16.xpose.msra.mxu0 0
    %1001 = vmatprep.subr.bf16.mxu0 0
    %1002 = vmatpush1.bf16.xpose.msra.mxu0 0
    %1003 = vmatprep.subr.bf16.mxu0 0
    %1004 = vmatpush1.bf16.xpose.msra.mxu0 0
    %1005 = vmatprep.subr.bf16.mxu0 0
    %1006 = vmatpush1.bf16.xpose.msra.mxu0 0
    %1007 = vmatprep.subr.bf16.mxu0 0
    %1008 = vmatpush1.bf16.xpose.msra.mxu0 0
    %1009 = vmatprep.subr.bf16.mxu0 0
    %1010 = vmatpush1.bf16.xpose.msra.mxu0 0
    %1011 = vmatprep.subr.bf16.mxu0 0
    %1012 = vmatpush1.bf16.xpose.msra.mxu0 0
    %1013 = vmatprep.mubr.bf16.mxu0 0
    %1014 = vmatmul.mubr.bf16.gmra.mrb[0].mxu0 %v967
    %v1015 = vpop.f32.mrb[0].mxu0
    %v1016 = vadd.f32 %v803, %v1015
    %v1017 = vpop.f32.mrb[0].mxu0
    %v1018 = vpop.f32.mrb[0].mxu0
    %v1019 = vpop.f32.mrb[0].mxu0
    %1020 = vdwg.mxu0
    %vm1021 = vcmask 523264
    %v1022 = vsel %vm1021, %v1016, -inf
    %1023 = vmax.xlane.f32.xlu0 %v1022
    %v1024 = vpop.xlane.xlu0 %1023
    %v1025 = vsub.f32 %v1016, %v1024
    %v1026 = vmul.f32 %v1025, 1.442695
    %v1027 = vpow.pop %v1026
    %v1028 = vsel %vm1021, %v1027, 0.0
    %1029 = vadd.xlane.f32.xlu0 %v1028
    %v1030 = vpop.xlane.xlu0 %1029
    %v1031 = vrcp.pop %v1030
    %v1032 = vmul.f32 %v1027, %v1031
    %v1033 = vpack.c.bf16 %v1032, %v1032
    %v1039 = vsel %vm1021, %v1033, 0
    %1041 = vmatprep.subr.bf16.mxu0 0
    %1042 = vmatpush1.bf16.msra.mxu0 %v959
    %1043 = vmatprep.subr.bf16.mxu0 0
    %1044 = vmatpush1.bf16.msra.mxu0 %v961
    %1045 = vmatprep.subr.bf16.mxu0 0
    %1046 = vmatpush1.bf16.msra.mxu0 %v963
    %1047 = vmatprep.subr.bf16.mxu0 0
    %1048 = vmatpush1.bf16.msra.mxu0 %v965
    %1049 = vmatprep.subr.bf16.mxu0 0
    %1050 = vmatpush1.bf16.msra.mxu0 0
    %1051 = vmatprep.subr.bf16.mxu0 0
    %1052 = vmatpush1.bf16.msra.mxu0 0
    %1053 = vmatprep.subr.bf16.mxu0 0
    %1054 = vmatpush1.bf16.msra.mxu0 0
    %1055 = vmatprep.subr.bf16.mxu0 0
    %1056 = vmatpush1.bf16.msra.mxu0 0
    %1057 = vmatprep.subr.bf16.mxu0 0
    %1058 = vmatpush1.bf16.msra.mxu0 0
    %1059 = vmatprep.subr.bf16.mxu0 0
    %1060 = vmatpush1.bf16.msra.mxu0 0
    %1061 = vmatprep.subr.bf16.mxu0 0
    %1062 = vmatpush1.bf16.msra.mxu0 0
    %1063 = vmatprep.subr.bf16.mxu0 0
    %1064 = vmatpush1.bf16.msra.mxu0 0
    %1065 = vmatprep.subr.bf16.mxu0 0
    %1066 = vmatpush1.bf16.msra.mxu0 0
    %1067 = vmatprep.subr.bf16.mxu0 0
    %1068 = vmatpush1.bf16.msra.mxu0 0
    %1069 = vmatprep.subr.bf16.mxu0 0
    %1070 = vmatpush1.bf16.msra.mxu0 0
    %1071 = vmatprep.subr.bf16.mxu0 0
    %1072 = vmatpush1.bf16.msra.mxu0 0
    %1073 = vmatprep.mubr.bf16.mxu0 0
    %1074 = vmatmul.mubr.bf16.gmra.mrb[0].mxu0 %v1039
    %v1075 = vpop.f32.mrb[0].mxu0
    %v1076 = vadd.f32 0.0, %v1075
    %v1077 = vpop.f32.mrb[0].mxu0
    %v1078 = vpop.f32.mrb[0].mxu0
    %v1079 = vpop.f32.mrb[0].mxu0
    %1080 = vdwg.mxu0
    %v1081 = vsel %vm162, %v1076, %v949
    %v1082 = vpack.c.bf16 %v1081, %v1081
    %v1091 = vunpack.c.l.b16 %v770
    %v1092 = vunpack.c.l.b16 %v771
    %v1093 = vunpack.c.l.b16 %v772
    %v1094 = vunpack.c.l.b16 %v773
    %v1095 = vunpack.c.l.b16 %v774
    %v1096 = vunpack.c.l.b16 %v775
    %v1097 = vunpack.c.l.b16 %v776
    %v1098 = vunpack.c.l.b16 %v777
    %v1099 = vpack.c.b16 %v1092, %v1091
    %v1100 = vpack.c.b16 %v1094, %v1093
    %v1101 = vpack.c.b16 %v1096, %v1095
    %v1102 = vpack.c.b16 %v1098, %v1097
    %v1108 = vsel %vm1021, %v1082, 0
    %1110 = vmatprep.subr.bf16.mxu0 0
    %1111 = vmatpush1.bf16.msra.mxu0 %v1099
    %1112 = vmatprep.subr.bf16.mxu0 0
    %1113 = vmatpush1.bf16.msra.mxu0 %v1100
    %1114 = vmatprep.subr.bf16.mxu0 0
    %1115 = vmatpush1.bf16.msra.mxu0 %v1101
    %1116 = vmatprep.subr.bf16.mxu0 0
    %1117 = vmatpush1.bf16.msra.mxu0 %v1102
    %1118 = vmatprep.subr.bf16.mxu0 0
    %1119 = vmatpush1.bf16.msra.mxu0 0
    %1120 = vmatprep.subr.bf16.mxu0 0
    %1121 = vmatpush1.bf16.msra.mxu0 0
    %1122 = vmatprep.subr.bf16.mxu0 0
    %1123 = vmatpush1.bf16.msra.mxu0 0
    %1124 = vmatprep.subr.bf16.mxu0 0
    %1125 = vmatpush1.bf16.msra.mxu0 0
    %1126 = vmatprep.subr.bf16.mxu0 0
    %1127 = vmatpush1.bf16.msra.mxu0 0
    %1128 = vmatprep.subr.bf16.mxu0 0
    %1129 = vmatpush1.bf16.msra.mxu0 0
    %1130 = vmatprep.subr.bf16.mxu0 0
    %1131 = vmatpush1.bf16.msra.mxu0 0
    %1132 = vmatprep.subr.bf16.mxu0 0
    %1133 = vmatpush1.bf16.msra.mxu0 0
    %1134 = vmatprep.subr.bf16.mxu0 0
    %1135 = vmatpush1.bf16.msra.mxu0 0
    %1136 = vmatprep.subr.bf16.mxu0 0
    %1137 = vmatpush1.bf16.msra.mxu0 0
    %1138 = vmatprep.subr.bf16.mxu0 0
    %1139 = vmatpush1.bf16.msra.mxu0 0
    %1140 = vmatprep.subr.bf16.mxu0 0
    %1141 = vmatpush1.bf16.msra.mxu0 0
    %1142 = vmatprep.mubr.bf16.mxu0 0
    %1143 = vmatmul.mubr.bf16.gmra.mrb[0].mxu0 %v1108
    %v1144 = vpop.f32.mrb[0].mxu0
    %v1145 = vadd.f32 %v791, %v1144
    %v1146 = vpop.f32.mrb[0].mxu0
    %v1147 = vpop.f32.mrb[0].mxu0
    %v1148 = vpop.f32.mrb[0].mxu0
    %1149 = vdwg.mxu0
    %v1150 = vtanh.pop %v1145
    %v1151 = vpack.c.bf16 %v1150, %v1150
    %v1156 = vunpack.c.l.b16 %v778
    %v1157 = vunpack.c.l.b16 %v779
    %v1158 = vunpack.c.l.b16 %v780
    %v1159 = vunpack.c.l.b16 %v781
    %v1160 = vpack.c.b16 %v1157, %v1156
    %v1161 = vpack.c.b16 %v1159, %v1158
    %v1165 = vsel %vm162, %v1151, 0
    %1167 = vmatprep.subr.bf16.mxu0 0
    %1168 = vmatpush1.bf16.msra.mxu0 %v1160
    %1169 = vmatprep.subr.bf16.mxu0 0
    %1170 = vmatpush1.bf16.msra.mxu0 %v1161
    %1171 = vmatprep.subr.bf16.mxu0 0
    %1172 = vmatpush1.bf16.msra.mxu0 0
    %1173 = vmatprep.subr.bf16.mxu0 0
    %1174 = vmatpush1.bf16.msra.mxu0 0
    %1175 = vmatprep.subr.bf16.mxu0 0
    %1176 = vmatpush1.bf16.msra.mxu0 0
    %1177 = vmatprep.subr.bf16.mxu0 0
    %1178 = vmatpush1.bf16.msra.mxu0 0
    %1179 = vmatprep.subr.bf16.mxu0 0
    %1180 = vmatpush1.bf16.msra.mxu0 0
    %1181 = vmatprep.subr.bf16.mxu0 0
    %1182 = vmatpush1.bf16.msra.mxu0 0
    %1183 = vmatprep.subr.bf16.mxu0 0
    %1184 = vmatpush1.bf16.msra.mxu0 0
    %1185 = vmatprep.subr.bf16.mxu0 0
    %1186 = vmatpush1.bf16.msra.mxu0 0
    %1187 = vmatprep.subr.bf16.mxu0 0
    %1188 = vmatpush1.bf16.msra.mxu0 0
    %1189 = vmatprep.subr.bf16.mxu0 0
    %1190 = vmatpush1.bf16.msra.mxu0 0
    %1191 = vmatprep.subr.bf16.mxu0 0
    %1192 = vmatpush1.bf16.msra.mxu0 0
    %1193 = vmatprep.subr.bf16.mxu0 0
    %1194 = vmatpush1.bf16.msra.mxu0 0
    %1195 = vmatprep.subr.bf16.mxu0 0
    %1196 = vmatpush1.bf16.msra.mxu0 0
    %1197 = vmatprep.subr.bf16.mxu0 0
    %1198 = vmatpush1.bf16.msra.mxu0 0
    %1199 = vmatprep.mubr.bf16.mxu0 0
    %1200 = vmatmul.mubr.bf16.gmra.mrb[0].mxu0 %v1165
    %v1201 = vpop.f32.mrb[0].mxu0
    %v1202 = vadd.f32 %v796, %v1201
    %v1203 = vpop.f32.mrb[0].mxu0
    %v1204 = vpop.f32.mrb[0].mxu0
    %v1205 = vpop.f32.mrb[0].mxu0
    %1206 = vdwg.mxu0
    %v1207 = vsel %vm162, %v1202, -inf
    %1208 = vmax.xlane.f32.xlu0 %v1207
    %v1209 = vpop.xlane.xlu0 %1208
    %v1210 = vsub.f32 %v1202, %v1209
    %v1211 = vmul.f32 %v1210, 1.442695
    %v1212 = vpow.pop %v1211
    %v1213 = vsel %vm162, %v1212, 0.0
    %1214 = vadd.xlane.f32.xlu0 %v1213
    %v1215 = vpop.xlane.xlu0 %1214
    %v1216 = vlog2.pop %v1215
    %v1217 = vmul.f32 %v1216, 0.6931472
    %v1218 = vsub.f32 %v1210, %v1217
    %1219 = vst.msk [vmem:[#allocation2] sm:$0xff] %vm162, %v1218
    %vm1220 = vcmp.ge.f32.partialorder %v1202, %v1209
    %v1221 = vsel %vm1220, %v798, 32
    %v1222 = vsel %vm162, %v1221, 2147483647
    %v1223 = vand.u32 %v1222, 65535
    %v1224 = vshra.s32 %v1222, 16
    %v1225 = vcvt.s32.f32 %v1223
    %v1226 = vcvt.s32.f32 %v1224
    %1227 = vmin.xlane.f32.xlu0 %v1226
    %v1228 = vpop.xlane.xlu0 %1227
    %vm1229 = vcmp.eq.f32.partialorder %v1226, %v1228
    %v1230 = vsel %vm1229, %v1225, inf
    %1231 = vmin.xlane.f32.xlu0 %v1230
    %v1232 = vpop.xlane.xlu0 %1231
    %v1233 = vcvt.f32.s32 %v1232
    %v1234 = vcvt.f32.s32 %v1228
    %v1235 = vshll.u32 %v1234, 16
    %v1236 = vadd.s32 %v1235, %v1233
    %vm1237 = vcmp.eq.s32.totalorder %v798, %v1236
    %v1238 = vsel %vm1237, 1, 0
    %v1239 = vcvt.s32.f32 %v1238
    %v1240 = vpack.c.bf16 %v1239, %v1239
    %v1242 = vsel %vm162, %v1240, 0
    %1244 = vmatprep.subr.bf16.mxu0 0
    %1245 = vmatpush1.bf16.msra.mxu0 %v820
    %1246 = vmatprep.subr.bf16.mxu0 0
    %1247 = vmatpush1.bf16.msra.mxu0 %v821
    %1248 = vmatprep.subr.bf16.mxu0 0
    %1249 = vmatpush1.bf16.msra.mxu0 0
    %1250 = vmatprep.subr.bf16.mxu0 0
    %1251 = vmatpush1.bf16.msra.mxu0 0
    %1252 = vmatprep.subr.bf16.mxu0 0
    %1253 = vmatpush1.bf16.msra.mxu0 0
    %1254 = vmatprep.subr.bf16.mxu0 0
    %1255 = vmatpush1.bf16.msra.mxu0 0
    %1256 = vmatprep.subr.bf16.mxu0 0
    %1257 = vmatpush1.bf16.msra.mxu0 0
    %1258 = vmatprep.subr.bf16.mxu0 0
    %1259 = vmatpush1.bf16.msra.mxu0 0
    %1260 = vmatprep.subr.bf16.mxu0 0
    %1261 = vmatpush1.bf16.msra.mxu0 0
    %1262 = vmatprep.subr.bf16.mxu0 0
    %1263 = vmatpush1.bf16.msra.mxu0 0
    %1264 = vmatprep.subr.bf16.mxu0 0
    %1265 = vmatpush1.bf16.msra.mxu0 0
    %1266 = vmatprep.subr.bf16.mxu0 0
    %1267 = vmatpush1.bf16.msra.mxu0 0
    %1268 = vmatprep.subr.bf16.mxu0 0
    %1269 = vmatpush1.bf16.msra.mxu0 0
    %1270 = vmatprep.subr.bf16.mxu0 0
    %1271 = vmatpush1.bf16.msra.mxu0 0
    %1272 = vmatprep.subr.bf16.mxu0 0
    %1273 = vmatpush1.bf16.msra.mxu0 0
    %1274 = vmatprep.subr.bf16.mxu0 0
    %1275 = vmatpush1.bf16.msra.mxu0 0
    %1276 = vmatprep.mubr.bf16.mxu0 0
    %1277 = vmatmul.mubr.bf16.gmra.mrb[0].mxu0 %v1242
    %v1278 = vpop.f32.mrb[0].mxu0
    %v1279 = vadd.f32 0.0, %v1278
    %v1280 = vpop.f32.mrb[0].mxu0
    %v1281 = vpop.f32.mrb[0].mxu0
    %v1282 = vpop.f32.mrb[0].mxu0
    %1283 = vdwg.mxu0
    %1284 = vmatprep.subr.bf16.mxu0 0
    %1285 = vmatpush1.bf16.msra.mxu0 %v877
    %1286 = vmatprep.subr.bf16.mxu0 0
    %1287 = vmatpush1.bf16.msra.mxu0 %v878
    %1288 = vmatprep.subr.bf16.mxu0 0
    %1289 = vmatpush1.bf16.msra.mxu0 0
    %1290 = vmatprep.subr.bf16.mxu0 0
    %1291 = vmatpush1.bf16.msra.mxu0 0
    %1292 = vmatprep.subr.bf16.mxu0 0
    %1293 = vmatpush1.bf16.msra.mxu0 0
    %1294 = vmatprep.subr.bf16.mxu0 0
    %1295 = vmatpush1.bf16.msra.mxu0 0
    %1296 = vmatprep.subr.bf16.mxu0 0
    %1297 = vmatpush1.bf16.msra.mxu0 0
    %1298 = vmatprep.subr.bf16.mxu0 0
    %1299 = vmatpush1.bf16.msra.mxu0 0
    %1300 = vmatprep.subr.bf16.mxu0 0
    %1301 = vmatpush1.bf16.msra.mxu0 0
    %1302 = vmatprep.subr.bf16.mxu0 0
    %1303 = vmatpush1.bf16.msra.mxu0 0
    %1304 = vmatprep.subr.bf16.mxu0 0
    %1305 = vmatpush1.bf16.msra.mxu0 0
    %1306 = vmatprep.subr.bf16.mxu0 0
    %1307 = vmatpush1.bf16.msra.mxu0 0
    %1308 = vmatprep.subr.bf16.mxu0 0
    %1309 = vmatpush1.bf16.msra.mxu0 0
    %1310 = vmatprep.subr.bf16.mxu0 0
    %1311 = vmatpush1.bf16.msra.mxu0 0
    %1312 = vmatprep.subr.bf16.mxu0 0
    %1313 = vmatpush1.bf16.msra.mxu0 0
    %1314 = vmatprep.subr.bf16.mxu0 0
    %1315 = vmatpush1.bf16.msra.mxu0 0
    %1316 = vmatprep.mubr.bf16.mxu0 0
    %1317 = vmatmul.mubr.bf16.gmra.mrb[0].mxu0 %v967
    %v1318 = vpop.f32.mrb[0].mxu0
    %v1319 = vadd.f32 %v786, %v1318
    %v1320 = vpop.f32.mrb[0].mxu0
    %v1321 = vpop.f32.mrb[0].mxu0
    %v1322 = vpop.f32.mrb[0].mxu0
    %1323 = vdwg.mxu0
    %v1324 = vadd.f32 %v1279, %v1319
    %v1325 = vxor.u32 %v1324, 2147483648
    %v1326 = vmul.f32 %v1325, 1.442695
    %v1327 = vpow.pop %v1326
    %v1328 = vadd.f32 %v1327, 1.0
    %v1329 = vrcp.pop %v1328
    %v1330 = vmul.f32 1.0, %v1329
    %1332 = vrot.lane.b32.xlu0 %v1319, 64
    %v1333 = vpop.permute.xlu0 %1332
    %v1335 = vmul.f32 %v1330, %v1333
    %1337 = vrot.lane.b32.xlu0 %v1335, 64
    %v1338 = vpop.permute.xlu0 %1337
    %v1340 = vadd.f32 %v1279, %v1338
    %v1341 = vtanh.pop %v1340
    %v1342 = vsub.f32 1.0, %v1330
    %1344 = vrot.lane.b32.xlu0 %v1341, 96
    %v1345 = vpop.permute.xlu0 %1344
    %v1347 = vmul.f32 %v1342, %v1345
    %v1348 = vmul.f32 %v1330, %v949
    %v1349 = vadd.f32 %v1347, %v1348
    %v1350 = vpack.c.bf16 %v1349, %v1349
    %1352 = vrot.lane.b32.xlu0 %v1350, 96
    %v1353 = vpop.permute.xlu0 %1352
    %v1355 = vsel %vm162, %v1353, 0
    %1357 = vmatprep.subr.bf16.mxu0 0
    %1358 = vmatpush1.bf16.xpose.msra.mxu0 %v970
    %1359 = vmatprep.subr.bf16.mxu0 0
    %1360 = vmatpush1.bf16.xpose.msra.mxu0 %v973
    %1361 = vmatprep.subr.bf16.mxu0 0
    %1362 = vmatpush1.bf16.xpose.msra.mxu0 %v976
    %1363 = vmatprep.subr.bf16.mxu0 0
    %1364 = vmatpush1.bf16.xpose.msra.mxu0 %v979
    %1365 = vmatprep.subr.bf16.mxu0 0
    %1366 = vmatpush1.bf16.xpose.msra.mxu0 0
    %1367 = vmatprep.subr.bf16.mxu0 0
    %1368 = vmatpush1.bf16.xpose.msra.mxu0 0
    %1369 = vmatprep.subr.bf16.mxu0 0
    %1370 = vmatpush1.bf16.xpose.msra.mxu0 0
    %1371 = vmatprep.subr.bf16.mxu0 0
    %1372 = vmatpush1.bf16.xpose.msra.mxu0 0
    %1373 = vmatprep.subr.bf16.mxu0 0
    %1374 = vmatpush1.bf16.xpose.msra.mxu0 0
    %1375 = vmatprep.subr.bf16.mxu0 0
    %1376 = vmatpush1.bf16.xpose.msra.mxu0 0
    %1377 = vmatprep.subr.bf16.mxu0 0
    %1378 = vmatpush1.bf16.xpose.msra.mxu0 0
    %1379 = vmatprep.subr.bf16.mxu0 0
    %1380 = vmatpush1.bf16.xpose.msra.mxu0 0
    %1381 = vmatprep.subr.bf16.mxu0 0
    %1382 = vmatpush1.bf16.xpose.msra.mxu0 0
    %1383 = vmatprep.subr.bf16.mxu0 0
    %1384 = vmatpush1.bf16.xpose.msra.mxu0 0
    %1385 = vmatprep.subr.bf16.mxu0 0
    %1386 = vmatpush1.bf16.xpose.msra.mxu0 0
    %1387 = vmatprep.subr.bf16.mxu0 0
    %1388 = vmatpush1.bf16.xpose.msra.mxu0 0
    %1389 = vmatprep.mubr.bf16.mxu0 0
    %1390 = vmatmul.mubr.bf16.gmra.mrb[0].mxu0 %v1355
    %v1391 = vpop.f32.mrb[0].mxu0
    %v1392 = vadd.f32 %v803, %v1391
    %v1393 = vpop.f32.mrb[0].mxu0
    %v1394 = vpop.f32.mrb[0].mxu0
    %v1395 = vpop.f32.mrb[0].mxu0
    %1396 = vdwg.mxu0
    %v1397 = vsel %vm1021, %v1392, -inf
    %1398 = vmax.xlane.f32.xlu0 %v1397
    %v1399 = vpop.xlane.xlu0 %1398
    %v1400 = vsub.f32 %v1392, %v1399
    %v1401 = vmul.f32 %v1400, 1.442695
    %v1402 = vpow.pop %v1401
    %v1403 = vsel %vm1021, %v1402, 0.0
    %1404 = vadd.xlane.f32.xlu0 %v1403
    %v1405 = vpop.xlane.xlu0 %1404
    %v1406 = vrcp.pop %v1405
    %v1407 = vmul.f32 %v1402, %v1406
    %v1408 = vpack.c.bf16 %v1407, %v1407
    %v1410 = vsel %vm1021, %v1408, 0
    %1412 = vmatprep.subr.bf16.mxu0 0
    %1413 = vmatpush1.bf16.msra.mxu0 %v959
    %1414 = vmatprep.subr.bf16.mxu0 0
    %1415 = vmatpush1.bf16.msra.mxu0 %v961
    %1416 = vmatprep.subr.bf16.mxu0 0
    %1417 = vmatpush1.bf16.msra.mxu0 %v963
    %1418 = vmatprep.subr.bf16.mxu0 0
    %1419 = vmatpush1.bf16.msra.mxu0 %v965
    %1420 = vmatprep.subr.bf16.mxu0 0
    %1421 = vmatpush1.bf16.msra.mxu0 0
    %1422 = vmatprep.subr.bf16.mxu0 0
    %1423 = vmatpush1.bf16.msra.mxu0 0
    %1424 = vmatprep.subr.bf16.mxu0 0
    %1425 = vmatpush1.bf16.msra.mxu0 0
    %1426 = vmatprep.subr.bf16.mxu0 0
    %1427 = vmatpush1.bf16.msra.mxu0 0
    %1428 = vmatprep.subr.bf16.mxu0 0
    %1429 = vmatpush1.bf16.msra.mxu0 0
    %1430 = vmatprep.subr.bf16.mxu0 0
    %1431 = vmatpush1.bf16.msra.mxu0 0
    %1432 = vmatprep.subr.bf16.mxu0 0
    %1433 = vmatpush1.bf16.msra.mxu0 0
    %1434 = vmatprep.subr.bf16.mxu0 0
    %1435 = vmatpush1.bf16.msra.mxu0 0
    %1436 = vmatprep.subr.bf16.mxu0 0
    %1437 = vmatpush1.bf16.msra.mxu0 0
    %1438 = vmatprep.subr.bf16.mxu0 0
    %1439 = vmatpush1.bf16.msra.mxu0 0
    %1440 = vmatprep.subr.bf16.mxu0 0
    %1441 = vmatpush1.bf16.msra.mxu0 0
    %1442 = vmatprep.subr.bf16.mxu0 0
    %1443 = vmatpush1.bf16.msra.mxu0 0
    %1444 = vmatprep.mubr.bf16.mxu0 0
    %1445 = vmatmul.mubr.bf16.gmra.mrb[0].mxu0 %v1410
    %v1446 = vpop.f32.mrb[0].mxu0
    %v1447 = vadd.f32 0.0, %v1446
    %v1448 = vpop.f32.mrb[0].mxu0
    %v1449 = vpop.f32.mrb[0].mxu0
    %v1450 = vpop.f32.mrb[0].mxu0
    %1451 = vdwg.mxu0
    %v1452 = vsel %vm162, %v1447, %v1349
    %v1453 = vpack.c.bf16 %v1452, %v1452
    %v1455 = vsel %vm1021, %v1453, 0
    %1457 = vmatprep.subr.bf16.mxu0 0
    %1458 = vmatpush1.bf16.msra.mxu0 %v1099
    %1459 = vmatprep.subr.bf16.mxu0 0
    %1460 = vmatpush1.bf16.msra.mxu0 %v1100
    %1461 = vmatprep.subr.bf16.mxu0 0
    %1462 = vmatpush1.bf16.msra.mxu0 %v1101
    %1463 = vmatprep.subr.bf16.mxu0 0
    %1464 = vmatpush1.bf16.msra.mxu0 %v1102
    %1465 = vmatprep.subr.bf16.mxu0 0
    %1466 = vmatpush1.bf16.msra.mxu0 0
    %1467 = vmatprep.subr.bf16.mxu0 0
    %1468 = vmatpush1.bf16.msra.mxu0 0
    %1469 = vmatprep.subr.bf16.mxu0 0
    %1470 = vmatpush1.bf16.msra.mxu0 0
    %1471 = vmatprep.subr.bf16.mxu0 0
    %1472 = vmatpush1.bf16.msra.mxu0 0
    %1473 = vmatprep.subr.bf16.mxu0 0
    %1474 = vmatpush1.bf16.msra.mxu0 0
    %1475 = vmatprep.subr.bf16.mxu0 0
    %1476 = vmatpush1.bf16.msra.mxu0 0
    %1477 = vmatprep.subr.bf16.mxu0 0
    %1478 = vmatpush1.bf16.msra.mxu0 0
    %1479 = vmatprep.subr.bf16.mxu0 0
    %1480 = vmatpush1.bf16.msra.mxu0 0
    %1481 = vmatprep.subr.bf16.mxu0 0
    %1482 = vmatpush1.bf16.msra.mxu0 0
    %1483 = vmatprep.subr.bf16.mxu0 0
    %1484 = vmatpush1.bf16.msra.mxu0 0
    %1485 = vmatprep.subr.bf16.mxu0 0
    %1486 = vmatpush1.bf16.msra.mxu0 0
    %1487 = vmatprep.subr.bf16.mxu0 0
    %1488 = vmatpush1.bf16.msra.mxu0 0
    %1489 = vmatprep.mubr.bf16.mxu0 0
    %1490 = vmatmul.mubr.bf16.gmra.mrb[0].mxu0 %v1455
    %v1491 = vpop.f32.mrb[0].mxu0
    %v1492 = vadd.f32 %v791, %v1491
    %v1493 = vpop.f32.mrb[0].mxu0
    %v1494 = vpop.f32.mrb[0].mxu0
    %v1495 = vpop.f32.mrb[0].mxu0
    %1496 = vdwg.mxu0
    %v1497 = vtanh.pop %v1492
    %v1498 = vpack.c.bf16 %v1497, %v1497
    %v1500 = vsel %vm162, %v1498, 0
    %1502 = vmatprep.subr.bf16.mxu0 0
    %1503 = vmatpush1.bf16.msra.mxu0 %v1160
    %1504 = vmatprep.subr.bf16.mxu0 0
    %1505 = vmatpush1.bf16.msra.mxu0 %v1161
    %1506 = vmatprep.subr.bf16.mxu0 0
    %1507 = vmatpush1.bf16.msra.mxu0 0
    %1508 = vmatprep.subr.bf16.mxu0 0
    %1509 = vmatpush1.bf16.msra.mxu0 0
    %1510 = vmatprep.subr.bf16.mxu0 0
    %1511 = vmatpush1.bf16.msra.mxu0 0
    %1512 = vmatprep.subr.bf16.mxu0 0
    %1513 = vmatpush1.bf16.msra.mxu0 0
    %1514 = vmatprep.subr.bf16.mxu0 0
    %1515 = vmatpush1.bf16.msra.mxu0 0
    %1516 = vmatprep.subr.bf16.mxu0 0
    %1517 = vmatpush1.bf16.msra.mxu0 0
    %1518 = vmatprep.subr.bf16.mxu0 0
    %1519 = vmatpush1.bf16.msra.mxu0 0
    %1520 = vmatprep.subr.bf16.mxu0 0
    %1521 = vmatpush1.bf16.msra.mxu0 0
    %1522 = vmatprep.subr.bf16.mxu0 0
    %1523 = vmatpush1.bf16.msra.mxu0 0
    %1524 = vmatprep.subr.bf16.mxu0 0
    %1525 = vmatpush1.bf16.msra.mxu0 0
    %1526 = vmatprep.subr.bf16.mxu0 0
    %1527 = vmatpush1.bf16.msra.mxu0 0
    %1528 = vmatprep.subr.bf16.mxu0 0
    %1529 = vmatpush1.bf16.msra.mxu0 0
    %1530 = vmatprep.subr.bf16.mxu0 0
    %1531 = vmatpush1.bf16.msra.mxu0 0
    %1532 = vmatprep.subr.bf16.mxu0 0
    %1533 = vmatpush1.bf16.msra.mxu0 0
    %1534 = vmatprep.mubr.bf16.mxu0 0
    %1535 = vmatmul.mubr.bf16.gmra.mrb[0].mxu0 %v1500
    %v1536 = vpop.f32.mrb[0].mxu0
    %v1537 = vadd.f32 %v796, %v1536
    %v1538 = vpop.f32.mrb[0].mxu0
    %v1539 = vpop.f32.mrb[0].mxu0
    %v1540 = vpop.f32.mrb[0].mxu0
    %1541 = vdwg.mxu0
    %v1542 = vsel %vm162, %v1537, -inf
    %1543 = vmax.xlane.f32.xlu0 %v1542
    %v1544 = vpop.xlane.xlu0 %1543
    %v1545 = vsub.f32 %v1537, %v1544
    %v1546 = vmul.f32 %v1545, 1.442695
    %v1547 = vpow.pop %v1546
    %v1548 = vsel %vm162, %v1547, 0.0
    %1549 = vadd.xlane.f32.xlu0 %v1548
    %v1550 = vpop.xlane.xlu0 %1549
    %v1551 = vlog2.pop %v1550
    %v1552 = vmul.f32 %v1551, 0.6931472
    %v1553 = vsub.f32 %v1545, %v1552
    %s1554 = scalar_lea.vmem [#allocation2], 8
    %1555 = vst.msk [vmem:[%s1554] sm:$0xff] %vm162, %v1553
    %vm1556 = vcmp.ge.f32.partialorder %v1537, %v1544
    %v1557 = vsel %vm1556, %v798, 32
    %v1558 = vsel %vm162, %v1557, 2147483647
    %v1559 = vand.u32 %v1558, 65535
    %v1560 = vshra.s32 %v1558, 16
    %v1561 = vcvt.s32.f32 %v1559
    %v1562 = vcvt.s32.f32 %v1560
    %1563 = vmin.xlane.f32.xlu0 %v1562
    %v1564 = vpop.xlane.xlu0 %1563
    %vm1565 = vcmp.eq.f32.partialorder %v1562, %v1564
    %v1566 = vsel %vm1565, %v1561, inf
    %1567 = vmin.xlane.f32.xlu0 %v1566
    %v1568 = vpop.xlane.xlu0 %1567
    %v1569 = vcvt.f32.s32 %v1568
    %v1570 = vcvt.f32.s32 %v1564
    %v1571 = vshll.u32 %v1570, 16
    %v1572 = vadd.s32 %v1571, %v1569
    %vm1573 = vcmp.eq.s32.totalorder %v798, %v1572
    %v1574 = vsel %vm1573, 1, 0
    %v1575 = vcvt.s32.f32 %v1574
    %v1576 = vpack.c.bf16 %v1575, %v1575
    %v1578 = vsel %vm162, %v1576, 0
    %1580 = vmatprep.subr.bf16.mxu0 0
    %1581 = vmatpush1.bf16.msra.mxu0 %v820
    %1582 = vmatprep.subr.bf16.mxu0 0
    %1583 = vmatpush1.bf16.msra.mxu0 %v821
    %1584 = vmatprep.subr.bf16.mxu0 0
    %1585 = vmatpush1.bf16.msra.mxu0 0
    %1586 = vmatprep.subr.bf16.mxu0 0
    %1587 = vmatpush1.bf16.msra.mxu0 0
    %1588 = vmatprep.subr.bf16.mxu0 0
    %1589 = vmatpush1.bf16.msra.mxu0 0
    %1590 = vmatprep.subr.bf16.mxu0 0
    %1591 = vmatpush1.bf16.msra.mxu0 0
    %1592 = vmatprep.subr.bf16.mxu0 0
    %1593 = vmatpush1.bf16.msra.mxu0 0
    %1594 = vmatprep.subr.bf16.mxu0 0
    %1595 = vmatpush1.bf16.msra.mxu0 0
    %1596 = vmatprep.subr.bf16.mxu0 0
    %1597 = vmatpush1.bf16.msra.mxu0 0
    %1598 = vmatprep.subr.bf16.mxu0 0
    %1599 = vmatpush1.bf16.msra.mxu0 0
    %1600 = vmatprep.subr.bf16.mxu0 0
    %1601 = vmatpush1.bf16.msra.mxu0 0
    %1602 = vmatprep.subr.bf16.mxu0 0
    %1603 = vmatpush1.bf16.msra.mxu0 0
    %1604 = vmatprep.subr.bf16.mxu0 0
    %1605 = vmatpush1.bf16.msra.mxu0 0
    %1606 = vmatprep.subr.bf16.mxu0 0
    %1607 = vmatpush1.bf16.msra.mxu0 0
    %1608 = vmatprep.subr.bf16.mxu0 0
    %1609 = vmatpush1.bf16.msra.mxu0 0
    %1610 = vmatprep.subr.bf16.mxu0 0
    %1611 = vmatpush1.bf16.msra.mxu0 0
    %1612 = vmatprep.mubr.bf16.mxu0 0
    %1613 = vmatmul.mubr.bf16.gmra.mrb[0].mxu0 %v1578
    %v1614 = vpop.f32.mrb[0].mxu0
    %v1615 = vadd.f32 0.0, %v1614
    %v1616 = vpop.f32.mrb[0].mxu0
    %v1617 = vpop.f32.mrb[0].mxu0
    %v1618 = vpop.f32.mrb[0].mxu0
    %1619 = vdwg.mxu0
    %1620 = vmatprep.subr.bf16.mxu0 0
    %1621 = vmatpush1.bf16.msra.mxu0 %v877
    %1622 = vmatprep.subr.bf16.mxu0 0
    %1623 = vmatpush1.bf16.msra.mxu0 %v878
    %1624 = vmatprep.subr.bf16.mxu0 0
    %1625 = vmatpush1.bf16.msra.mxu0 0
    %1626 = vmatprep.subr.bf16.mxu0 0
    %1627 = vmatpush1.bf16.msra.mxu0 0
    %1628 = vmatprep.subr.bf16.mxu0 0
    %1629 = vmatpush1.bf16.msra.mxu0 0
    %1630 = vmatprep.subr.bf16.mxu0 0
    %1631 = vmatpush1.bf16.msra.mxu0 0
    %1632 = vmatprep.subr.bf16.mxu0 0
    %1633 = vmatpush1.bf16.msra.mxu0 0
    %1634 = vmatprep.subr.bf16.mxu0 0
    %1635 = vmatpush1.bf16.msra.mxu0 0
    %1636 = vmatprep.subr.bf16.mxu0 0
    %1637 = vmatpush1.bf16.msra.mxu0 0
    %1638 = vmatprep.subr.bf16.mxu0 0
    %1639 = vmatpush1.bf16.msra.mxu0 0
    %1640 = vmatprep.subr.bf16.mxu0 0
    %1641 = vmatpush1.bf16.msra.mxu0 0
    %1642 = vmatprep.subr.bf16.mxu0 0
    %1643 = vmatpush1.bf16.msra.mxu0 0
    %1644 = vmatprep.subr.bf16.mxu0 0
    %1645 = vmatpush1.bf16.msra.mxu0 0
    %1646 = vmatprep.subr.bf16.mxu0 0
    %1647 = vmatpush1.bf16.msra.mxu0 0
    %1648 = vmatprep.subr.bf16.mxu0 0
    %1649 = vmatpush1.bf16.msra.mxu0 0
    %1650 = vmatprep.subr.bf16.mxu0 0
    %1651 = vmatpush1.bf16.msra.mxu0 0
    %1652 = vmatprep.mubr.bf16.mxu0 0
    %1653 = vmatmul.mubr.bf16.gmra.mrb[0].mxu0 %v1355
    %v1654 = vpop.f32.mrb[0].mxu0
    %v1655 = vadd.f32 %v786, %v1654
    %v1656 = vpop.f32.mrb[0].mxu0
    %v1657 = vpop.f32.mrb[0].mxu0
    %v1658 = vpop.f32.mrb[0].mxu0
    %1659 = vdwg.mxu0
    %v1660 = vadd.f32 %v1615, %v1655
    %v1661 = vxor.u32 %v1660, 2147483648
    %v1662 = vmul.f32 %v1661, 1.442695
    %v1663 = vpow.pop %v1662
    %v1664 = vadd.f32 %v1663, 1.0
    %v1665 = vrcp.pop %v1664
    %v1666 = vmul.f32 1.0, %v1665
    %1668 = vrot.lane.b32.xlu0 %v1655, 64
    %v1669 = vpop.permute.xlu0 %1668
    %v1671 = vmul.f32 %v1666, %v1669
    %1673 = vrot.lane.b32.xlu0 %v1671, 64
    %v1674 = vpop.permute.xlu0 %1673
    %v1676 = vadd.f32 %v1615, %v1674
    %v1677 = vtanh.pop %v1676
    %v1678 = vsub.f32 1.0, %v1666
    %1680 = vrot.lane.b32.xlu0 %v1677, 96
    %v1681 = vpop.permute.xlu0 %1680
    %v1683 = vmul.f32 %v1678, %v1681
    %v1684 = vmul.f32 %v1666, %v1349
    %v1685 = vadd.f32 %v1683, %v1684
    %v1686 = vpack.c.bf16 %v1685, %v1685
    %1688 = vrot.lane.b32.xlu0 %v1686, 96
    %v1689 = vpop.permute.xlu0 %1688
    %v1691 = vsel %vm162, %v1689, 0
    %1693 = vmatprep.subr.bf16.mxu0 0
    %1694 = vmatpush1.bf16.xpose.msra.mxu0 %v970
    %1695 = vmatprep.subr.bf16.mxu0 0
    %1696 = vmatpush1.bf16.xpose.msra.mxu0 %v973
    %1697 = vmatprep.subr.bf16.mxu0 0
    %1698 = vmatpush1.bf16.xpose.msra.mxu0 %v976
    %1699 = vmatprep.subr.bf16.mxu0 0
    %1700 = vmatpush1.bf16.xpose.msra.mxu0 %v979
    %1701 = vmatprep.subr.bf16.mxu0 0
    %1702 = vmatpush1.bf16.xpose.msra.mxu0 0
    %1703 = vmatprep.subr.bf16.mxu0 0
    %1704 = vmatpush1.bf16.xpose.msra.mxu0 0
    %1705 = vmatprep.subr.bf16.mxu0 0
    %1706 = vmatpush1.bf16.xpose.msra.mxu0 0
    %1707 = vmatprep.subr.bf16.mxu0 0
    %1708 = vmatpush1.bf16.xpose.msra.mxu0 0
    %1709 = vmatprep.subr.bf16.mxu0 0
    %1710 = vmatpush1.bf16.xpose.msra.mxu0 0
    %1711 = vmatprep.subr.bf16.mxu0 0
    %1712 = vmatpush1.bf16.xpose.msra.mxu0 0
    %1713 = vmatprep.subr.bf16.mxu0 0
    %1714 = vmatpush1.bf16.xpose.msra.mxu0 0
    %1715 = vmatprep.subr.bf16.mxu0 0
    %1716 = vmatpush1.bf16.xpose.msra.mxu0 0
    %1717 = vmatprep.subr.bf16.mxu0 0
    %1718 = vmatpush1.bf16.xpose.msra.mxu0 0
    %1719 = vmatprep.subr.bf16.mxu0 0
    %1720 = vmatpush1.bf16.xpose.msra.mxu0 0
    %1721 = vmatprep.subr.bf16.mxu0 0
    %1722 = vmatpush1.bf16.xpose.msra.mxu0 0
    %1723 = vmatprep.subr.bf16.mxu0 0
    %1724 = vmatpush1.bf16.xpose.msra.mxu0 0
    %1725 = vmatprep.mubr.bf16.mxu0 0
    %1726 = vmatmul.mubr.bf16.gmra.mrb[0].mxu0 %v1691
    %v1727 = vpop.f32.mrb[0].mxu0
    %v1728 = vadd.f32 %v803, %v1727
    %v1729 = vpop.f32.mrb[0].mxu0
    %v1730 = vpop.f32.mrb[0].mxu0
    %v1731 = vpop.f32.mrb[0].mxu0
    %1732 = vdwg.mxu0
    %v1733 = vsel %vm1021, %v1728, -inf
    %1734 = vmax.xlane.f32.xlu0 %v1733
    %v1735 = vpop.xlane.xlu0 %1734
    %v1736 = vsub.f32 %v1728, %v1735
    %v1737 = vmul.f32 %v1736, 1.442695
    %v1738 = vpow.pop %v1737
    %v1739 = vsel %vm1021, %v1738, 0.0
    %1740 = vadd.xlane.f32.xlu0 %v1739
    %v1741 = vpop.xlane.xlu0 %1740
    %v1742 = vrcp.pop %v1741
    %v1743 = vmul.f32 %v1738, %v1742
    %v1744 = vpack.c.bf16 %v1743, %v1743
    %v1746 = vsel %vm1021, %v1744, 0
    %1748 = vmatprep.subr.bf16.mxu0 0
    %1749 = vmatpush1.bf16.msra.mxu0 %v959
    %1750 = vmatprep.subr.bf16.mxu0 0
    %1751 = vmatpush1.bf16.msra.mxu0 %v961
    %1752 = vmatprep.subr.bf16.mxu0 0
    %1753 = vmatpush1.bf16.msra.mxu0 %v963
    %1754 = vmatprep.subr.bf16.mxu0 0
    %1755 = vmatpush1.bf16.msra.mxu0 %v965
    %1756 = vmatprep.subr.bf16.mxu0 0
    %1757 = vmatpush1.bf16.msra.mxu0 0
    %1758 = vmatprep.subr.bf16.mxu0 0
    %1759 = vmatpush1.bf16.msra.mxu0 0
    %1760 = vmatprep.subr.bf16.mxu0 0
    %1761 = vmatpush1.bf16.msra.mxu0 0
    %1762 = vmatprep.subr.bf16.mxu0 0
    %1763 = vmatpush1.bf16.msra.mxu0 0
    %1764 = vmatprep.subr.bf16.mxu0 0
    %1765 = vmatpush1.bf16.msra.mxu0 0
    %1766 = vmatprep.subr.bf16.mxu0 0
    %1767 = vmatpush1.bf16.msra.mxu0 0
    %1768 = vmatprep.subr.bf16.mxu0 0
    %1769 = vmatpush1.bf16.msra.mxu0 0
    %1770 = vmatprep.subr.bf16.mxu0 0
    %1771 = vmatpush1.bf16.msra.mxu0 0
    %1772 = vmatprep.subr.bf16.mxu0 0
    %1773 = vmatpush1.bf16.msra.mxu0 0
    %1774 = vmatprep.subr.bf16.mxu0 0
    %1775 = vmatpush1.bf16.msra.mxu0 0
    %1776 = vmatprep.subr.bf16.mxu0 0
    %1777 = vmatpush1.bf16.msra.mxu0 0
    %1778 = vmatprep.subr.bf16.mxu0 0
    %1779 = vmatpush1.bf16.msra.mxu0 0
    %1780 = vmatprep.mubr.bf16.mxu0 0
    %1781 = vmatmul.mubr.bf16.gmra.mrb[0].mxu0 %v1746
    %v1782 = vpop.f32.mrb[0].mxu0
    %v1783 = vadd.f32 0.0, %v1782
    %v1784 = vpop.f32.mrb[0].mxu0
    %v1785 = vpop.f32.mrb[0].mxu0
    %v1786 = vpop.f32.mrb[0].mxu0
    %1787 = vdwg.mxu0
    %v1788 = vsel %vm162, %v1783, %v1685
    %v1789 = vpack.c.bf16 %v1788, %v1788
    %v1791 = vsel %vm1021, %v1789, 0
    %1793 = vmatprep.subr.bf16.mxu0 0
    %1794 = vmatpush1.bf16.msra.mxu0 %v1099
    %1795 = vmatprep.subr.bf16.mxu0 0
    %1796 = vmatpush1.bf16.msra.mxu0 %v1100
    %1797 = vmatprep.subr.bf16.mxu0 0
    %1798 = vmatpush1.bf16.msra.mxu0 %v1101
    %1799 = vmatprep.subr.bf16.mxu0 0
    %1800 = vmatpush1.bf16.msra.mxu0 %v1102
    %1801 = vmatprep.subr.bf16.mxu0 0
    %1802 = vmatpush1.bf16.msra.mxu0 0
    %1803 = vmatprep.subr.bf16.mxu0 0
    %1804 = vmatpush1.bf16.msra.mxu0 0
    %1805 = vmatprep.subr.bf16.mxu0 0
    %1806 = vmatpush1.bf16.msra.mxu0 0
    %1807 = vmatprep.subr.bf16.mxu0 0
    %1808 = vmatpush1.bf16.msra.mxu0 0
    %1809 = vmatprep.subr.bf16.mxu0 0
    %1810 = vmatpush1.bf16.msra.mxu0 0
    %1811 = vmatprep.subr.bf16.mxu0 0
    %1812 = vmatpush1.bf16.msra.mxu0 0
    %1813 = vmatprep.subr.bf16.mxu0 0
    %1814 = vmatpush1.bf16.msra.mxu0 0
    %1815 = vmatprep.subr.bf16.mxu0 0
    %1816 = vmatpush1.bf16.msra.mxu0 0
    %1817 = vmatprep.subr.bf16.mxu0 0
    %1818 = vmatpush1.bf16.msra.mxu0 0
    %1819 = vmatprep.subr.bf16.mxu0 0
    %1820 = vmatpush1.bf16.msra.mxu0 0
    %1821 = vmatprep.subr.bf16.mxu0 0
    %1822 = vmatpush1.bf16.msra.mxu0 0
    %1823 = vmatprep.subr.bf16.mxu0 0
    %1824 = vmatpush1.bf16.msra.mxu0 0
    %1825 = vmatprep.mubr.bf16.mxu0 0
    %1826 = vmatmul.mubr.bf16.gmra.mrb[0].mxu0 %v1791
    %v1827 = vpop.f32.mrb[0].mxu0
    %v1828 = vadd.f32 %v791, %v1827
    %v1829 = vpop.f32.mrb[0].mxu0
    %v1830 = vpop.f32.mrb[0].mxu0
    %v1831 = vpop.f32.mrb[0].mxu0
    %1832 = vdwg.mxu0
    %v1833 = vtanh.pop %v1828
    %v1834 = vpack.c.bf16 %v1833, %v1833
    %v1836 = vsel %vm162, %v1834, 0
    %1838 = vmatprep.subr.bf16.mxu0 0
    %1839 = vmatpush1.bf16.msra.mxu0 %v1160
    %1840 = vmatprep.subr.bf16.mxu0 0
    %1841 = vmatpush1.bf16.msra.mxu0 %v1161
    %1842 = vmatprep.subr.bf16.mxu0 0
    %1843 = vmatpush1.bf16.msra.mxu0 0
    %1844 = vmatprep.subr.bf16.mxu0 0
    %1845 = vmatpush1.bf16.msra.mxu0 0
    %1846 = vmatprep.subr.bf16.mxu0 0
    %1847 = vmatpush1.bf16.msra.mxu0 0
    %1848 = vmatprep.subr.bf16.mxu0 0
    %1849 = vmatpush1.bf16.msra.mxu0 0
    %1850 = vmatprep.subr.bf16.mxu0 0
    %1851 = vmatpush1.bf16.msra.mxu0 0
    %1852 = vmatprep.subr.bf16.mxu0 0
    %1853 = vmatpush1.bf16.msra.mxu0 0
    %1854 = vmatprep.subr.bf16.mxu0 0
    %1855 = vmatpush1.bf16.msra.mxu0 0
    %1856 = vmatprep.subr.bf16.mxu0 0
    %1857 = vmatpush1.bf16.msra.mxu0 0
    %1858 = vmatprep.subr.bf16.mxu0 0
    %1859 = vmatpush1.bf16.msra.mxu0 0
    %1860 = vmatprep.subr.bf16.mxu0 0
    %1861 = vmatpush1.bf16.msra.mxu0 0
    %1862 = vmatprep.subr.bf16.mxu0 0
    %1863 = vmatpush1.bf16.msra.mxu0 0
    %1864 = vmatprep.subr.bf16.mxu0 0
    %1865 = vmatpush1.bf16.msra.mxu0 0
    %1866 = vmatprep.subr.bf16.mxu0 0
    %1867 = vmatpush1.bf16.msra.mxu0 0
    %1868 = vmatprep.subr.bf16.mxu0 0
    %1869 = vmatpush1.bf16.msra.mxu0 0
    %1870 = vmatprep.mubr.bf16.mxu0 0
    %1871 = vmatmul.mubr.bf16.gmra.mrb[0].mxu0 %v1836
    %v1872 = vpop.f32.mrb[0].mxu0
    %v1873 = vadd.f32 %v796, %v1872
    %v1874 = vpop.f32.mrb[0].mxu0
    %v1875 = vpop.f32.mrb[0].mxu0
    %v1876 = vpop.f32.mrb[0].mxu0
    %1877 = vdwg.mxu0
    %v1878 = vsel %vm162, %v1873, -inf
    %1879 = vmax.xlane.f32.xlu0 %v1878
    %v1880 = vpop.xlane.xlu0 %1879
    %v1881 = vsub.f32 %v1873, %v1880
    %v1882 = vmul.f32 %v1881, 1.442695
    %v1883 = vpow.pop %v1882
    %v1884 = vsel %vm162, %v1883, 0.0
    %1885 = vadd.xlane.f32.xlu0 %v1884
    %v1886 = vpop.xlane.xlu0 %1885
    %v1887 = vlog2.pop %v1886
    %v1888 = vmul.f32 %v1887, 0.6931472
    %v1889 = vsub.f32 %v1881, %v1888
    %s1890 = scalar_lea.vmem [#allocation2], 16
    %1891 = vst.msk [vmem:[%s1890] sm:$0xff] %vm162, %v1889
    %vm1892 = vcmp.ge.f32.partialorder %v1873, %v1880
    %v1893 = vsel %vm1892, %v798, 32
    %v1894 = vsel %vm162, %v1893, 2147483647
    %v1895 = vand.u32 %v1894, 65535
    %v1896 = vshra.s32 %v1894, 16
    %v1897 = vcvt.s32.f32 %v1895
    %v1898 = vcvt.s32.f32 %v1896
    %1899 = vmin.xlane.f32.xlu0 %v1898
    %v1900 = vpop.xlane.xlu0 %1899
    %vm1901 = vcmp.eq.f32.partialorder %v1898, %v1900
    %v1902 = vsel %vm1901, %v1897, inf
    %1903 = vmin.xlane.f32.xlu0 %v1902
    %v1904 = vpop.xlane.xlu0 %1903
    %v1905 = vcvt.f32.s32 %v1904
    %v1906 = vcvt.f32.s32 %v1900
    %v1907 = vshll.u32 %v1906, 16
    %v1908 = vadd.s32 %v1907, %v1905
    %vm1909 = vcmp.eq.s32.totalorder %v798, %v1908
    %v1910 = vsel %vm1909, 1, 0
    %v1911 = vcvt.s32.f32 %v1910
    %v1912 = vpack.c.bf16 %v1911, %v1911
    %v1914 = vsel %vm162, %v1912, 0
    %1916 = vmatprep.subr.bf16.mxu0 0
    %1917 = vmatpush1.bf16.msra.mxu0 %v820
    %1918 = vmatprep.subr.bf16.mxu0 0
    %1919 = vmatpush1.bf16.msra.mxu0 %v821
    %1920 = vmatprep.subr.bf16.mxu0 0
    %1921 = vmatpush1.bf16.msra.mxu0 0
    %1922 = vmatprep.subr.bf16.mxu0 0
    %1923 = vmatpush1.bf16.msra.mxu0 0
    %1924 = vmatprep.subr.bf16.mxu0 0
    %1925 = vmatpush1.bf16.msra.mxu0 0
    %1926 = vmatprep.subr.bf16.mxu0 0
    %1927 = vmatpush1.bf16.msra.mxu0 0
    %1928 = vmatprep.subr.bf16.mxu0 0
    %1929 = vmatpush1.bf16.msra.mxu0 0
    %1930 = vmatprep.subr.bf16.mxu0 0
    %1931 = vmatpush1.bf16.msra.mxu0 0
    %1932 = vmatprep.subr.bf16.mxu0 0
    %1933 = vmatpush1.bf16.msra.mxu0 0
    %1934 = vmatprep.subr.bf16.mxu0 0
    %1935 = vmatpush1.bf16.msra.mxu0 0
    %1936 = vmatprep.subr.bf16.mxu0 0
    %1937 = vmatpush1.bf16.msra.mxu0 0
    %1938 = vmatprep.subr.bf16.mxu0 0
    %1939 = vmatpush1.bf16.msra.mxu0 0
    %1940 = vmatprep.subr.bf16.mxu0 0
    %1941 = vmatpush1.bf16.msra.mxu0 0
    %1942 = vmatprep.subr.bf16.mxu0 0
    %1943 = vmatpush1.bf16.msra.mxu0 0
    %1944 = vmatprep.subr.bf16.mxu0 0
    %1945 = vmatpush1.bf16.msra.mxu0 0
    %1946 = vmatprep.subr.bf16.mxu0 0
    %1947 = vmatpush1.bf16.msra.mxu0 0
    %1948 = vmatprep.mubr.bf16.mxu0 0
    %1949 = vmatmul.mubr.bf16.gmra.mrb[0].mxu0 %v1914
    %v1950 = vpop.f32.mrb[0].mxu0
    %v1951 = vadd.f32 0.0, %v1950
    %v1952 = vpop.f32.mrb[0].mxu0
    %v1953 = vpop.f32.mrb[0].mxu0
    %v1954 = vpop.f32.mrb[0].mxu0
    %1955 = vdwg.mxu0
    %1956 = vmatprep.subr.bf16.mxu0 0
    %1957 = vmatpush1.bf16.msra.mxu0 %v877
    %1958 = vmatprep.subr.bf16.mxu0 0
    %1959 = vmatpush1.bf16.msra.mxu0 %v878
    %1960 = vmatprep.subr.bf16.mxu0 0
    %1961 = vmatpush1.bf16.msra.mxu0 0
    %1962 = vmatprep.subr.bf16.mxu0 0
    %1963 = vmatpush1.bf16.msra.mxu0 0
    %1964 = vmatprep.subr.bf16.mxu0 0
    %1965 = vmatpush1.bf16.msra.mxu0 0
    %1966 = vmatprep.subr.bf16.mxu0 0
    %1967 = vmatpush1.bf16.msra.mxu0 0
    %1968 = vmatprep.subr.bf16.mxu0 0
    %1969 = vmatpush1.bf16.msra.mxu0 0
    %1970 = vmatprep.subr.bf16.mxu0 0
    %1971 = vmatpush1.bf16.msra.mxu0 0
    %1972 = vmatprep.subr.bf16.mxu0 0
    %1973 = vmatpush1.bf16.msra.mxu0 0
    %1974 = vmatprep.subr.bf16.mxu0 0
    %1975 = vmatpush1.bf16.msra.mxu0 0
    %1976 = vmatprep.subr.bf16.mxu0 0
    %1977 = vmatpush1.bf16.msra.mxu0 0
    %1978 = vmatprep.subr.bf16.mxu0 0
    %1979 = vmatpush1.bf16.msra.mxu0 0
    %1980 = vmatprep.subr.bf16.mxu0 0
    %1981 = vmatpush1.bf16.msra.mxu0 0
    %1982 = vmatprep.subr.bf16.mxu0 0
    %1983 = vmatpush1.bf16.msra.mxu0 0
    %1984 = vmatprep.subr.bf16.mxu0 0
    %1985 = vmatpush1.bf16.msra.mxu0 0
    %1986 = vmatprep.subr.bf16.mxu0 0
    %1987 = vmatpush1.bf16.msra.mxu0 0
    %1988 = vmatprep.mubr.bf16.mxu0 0
    %1989 = vmatmul.mubr.bf16.gmra.mrb[0].mxu0 %v1691
    %v1990 = vpop.f32.mrb[0].mxu0
    %v1991 = vadd.f32 %v786, %v1990
    %v1992 = vpop.f32.mrb[0].mxu0
    %v1993 = vpop.f32.mrb[0].mxu0
    %v1994 = vpop.f32.mrb[0].mxu0
    %1995 = vdwg.mxu0
    %v1996 = vadd.f32 %v1951, %v1991
    %v1997 = vxor.u32 %v1996, 2147483648
    %v1998 = vmul.f32 %v1997, 1.442695
    %v1999 = vpow.pop %v1998
    %v2000 = vadd.f32 %v1999, 1.0
    %v2001 = vrcp.pop %v2000
    %v2002 = vmul.f32 1.0, %v2001
    %2004 = vrot.lane.b32.xlu0 %v1991, 64
    %v2005 = vpop.permute.xlu0 %2004
    %v2007 = vmul.f32 %v2002, %v2005
    %2009 = vrot.lane.b32.xlu0 %v2007, 64
    %v2010 = vpop.permute.xlu0 %2009
    %v2012 = vadd.f32 %v1951, %v2010
    %v2013 = vtanh.pop %v2012
    %v2014 = vsub.f32 1.0, %v2002
    %2016 = vrot.lane.b32.xlu0 %v2013, 96
    %v2017 = vpop.permute.xlu0 %2016
    %v2019 = vmul.f32 %v2014, %v2017
    %v2020 = vmul.f32 %v2002, %v1685
    %v2021 = vadd.f32 %v2019, %v2020
    %v2022 = vpack.c.bf16 %v2021, %v2021
    %2024 = vrot.lane.b32.xlu0 %v2022, 96
    %v2025 = vpop.permute.xlu0 %2024
    %v2027 = vsel %vm162, %v2025, 0
    %2029 = vmatprep.subr.bf16.mxu0 0
    %2030 = vmatpush1.bf16.xpose.msra.mxu0 %v970
    %2031 = vmatprep.subr.bf16.mxu0 0
    %2032 = vmatpush1.bf16.xpose.msra.mxu0 %v973
    %2033 = vmatprep.subr.bf16.mxu0 0
    %2034 = vmatpush1.bf16.xpose.msra.mxu0 %v976
    %2035 = vmatprep.subr.bf16.mxu0 0
    %2036 = vmatpush1.bf16.xpose.msra.mxu0 %v979
    %2037 = vmatprep.subr.bf16.mxu0 0
    %2038 = vmatpush1.bf16.xpose.msra.mxu0 0
    %2039 = vmatprep.subr.bf16.mxu0 0
    %2040 = vmatpush1.bf16.xpose.msra.mxu0 0
    %2041 = vmatprep.subr.bf16.mxu0 0
    %2042 = vmatpush1.bf16.xpose.msra.mxu0 0
    %2043 = vmatprep.subr.bf16.mxu0 0
    %2044 = vmatpush1.bf16.xpose.msra.mxu0 0
    %2045 = vmatprep.subr.bf16.mxu0 0
    %2046 = vmatpush1.bf16.xpose.msra.mxu0 0
    %2047 = vmatprep.subr.bf16.mxu0 0
    %2048 = vmatpush1.bf16.xpose.msra.mxu0 0
    %2049 = vmatprep.subr.bf16.mxu0 0
    %2050 = vmatpush1.bf16.xpose.msra.mxu0 0
    %2051 = vmatprep.subr.bf16.mxu0 0
    %2052 = vmatpush1.bf16.xpose.msra.mxu0 0
    %2053 = vmatprep.subr.bf16.mxu0 0
    %2054 = vmatpush1.bf16.xpose.msra.mxu0 0
    %2055 = vmatprep.subr.bf16.mxu0 0
    %2056 = vmatpush1.bf16.xpose.msra.mxu0 0
    %2057 = vmatprep.subr.bf16.mxu0 0
    %2058 = vmatpush1.bf16.xpose.msra.mxu0 0
    %2059 = vmatprep.subr.bf16.mxu0 0
    %2060 = vmatpush1.bf16.xpose.msra.mxu0 0
    %2061 = vmatprep.mubr.bf16.mxu0 0
    %2062 = vmatmul.mubr.bf16.gmra.mrb[0].mxu0 %v2027
    %v2063 = vpop.f32.mrb[0].mxu0
    %v2064 = vadd.f32 %v803, %v2063
    %v2065 = vpop.f32.mrb[0].mxu0
    %v2066 = vpop.f32.mrb[0].mxu0
    %v2067 = vpop.f32.mrb[0].mxu0
    %2068 = vdwg.mxu0
    %v2069 = vsel %vm1021, %v2064, -inf
    %2070 = vmax.xlane.f32.xlu0 %v2069
    %v2071 = vpop.xlane.xlu0 %2070
    %v2072 = vsub.f32 %v2064, %v2071
    %v2073 = vmul.f32 %v2072, 1.442695
    %v2074 = vpow.pop %v2073
    %v2075 = vsel %vm1021, %v2074, 0.0
    %2076 = vadd.xlane.f32.xlu0 %v2075
    %v2077 = vpop.xlane.xlu0 %2076
    %v2078 = vrcp.pop %v2077
    %v2079 = vmul.f32 %v2074, %v2078
    %v2080 = vpack.c.bf16 %v2079, %v2079
    %v2082 = vsel %vm1021, %v2080, 0
    %2084 = vmatprep.subr.bf16.mxu0 0
    %2085 = vmatpush1.bf16.msra.mxu0 %v959
    %2086 = vmatprep.subr.bf16.mxu0 0
    %2087 = vmatpush1.bf16.msra.mxu0 %v961
    %2088 = vmatprep.subr.bf16.mxu0 0
    %2089 = vmatpush1.bf16.msra.mxu0 %v963
    %2090 = vmatprep.subr.bf16.mxu0 0
    %2091 = vmatpush1.bf16.msra.mxu0 %v965
    %2092 = vmatprep.subr.bf16.mxu0 0
    %2093 = vmatpush1.bf16.msra.mxu0 0
    %2094 = vmatprep.subr.bf16.mxu0 0
    %2095 = vmatpush1.bf16.msra.mxu0 0
    %2096 = vmatprep.subr.bf16.mxu0 0
    %2097 = vmatpush1.bf16.msra.mxu0 0
    %2098 = vmatprep.subr.bf16.mxu0 0
    %2099 = vmatpush1.bf16.msra.mxu0 0
    %2100 = vmatprep.subr.bf16.mxu0 0
    %2101 = vmatpush1.bf16.msra.mxu0 0
    %2102 = vmatprep.subr.bf16.mxu0 0
    %2103 = vmatpush1.bf16.msra.mxu0 0
    %2104 = vmatprep.subr.bf16.mxu0 0
    %2105 = vmatpush1.bf16.msra.mxu0 0
    %2106 = vmatprep.subr.bf16.mxu0 0
    %2107 = vmatpush1.bf16.msra.mxu0 0
    %2108 = vmatprep.subr.bf16.mxu0 0
    %2109 = vmatpush1.bf16.msra.mxu0 0
    %2110 = vmatprep.subr.bf16.mxu0 0
    %2111 = vmatpush1.bf16.msra.mxu0 0
    %2112 = vmatprep.subr.bf16.mxu0 0
    %2113 = vmatpush1.bf16.msra.mxu0 0
    %2114 = vmatprep.subr.bf16.mxu0 0
    %2115 = vmatpush1.bf16.msra.mxu0 0
    %2116 = vmatprep.mubr.bf16.mxu0 0
    %2117 = vmatmul.mubr.bf16.gmra.mrb[0].mxu0 %v2082
    %v2118 = vpop.f32.mrb[0].mxu0
    %v2119 = vadd.f32 0.0, %v2118
    %v2120 = vpop.f32.mrb[0].mxu0
    %v2121 = vpop.f32.mrb[0].mxu0
    %v2122 = vpop.f32.mrb[0].mxu0
    %2123 = vdwg.mxu0
    %v2124 = vsel %vm162, %v2119, %v2021
    %v2125 = vpack.c.bf16 %v2124, %v2124
    %v2127 = vsel %vm1021, %v2125, 0
    %2129 = vmatprep.subr.bf16.mxu0 0
    %2130 = vmatpush1.bf16.msra.mxu0 %v1099
    %2131 = vmatprep.subr.bf16.mxu0 0
    %2132 = vmatpush1.bf16.msra.mxu0 %v1100
    %2133 = vmatprep.subr.bf16.mxu0 0
    %2134 = vmatpush1.bf16.msra.mxu0 %v1101
    %2135 = vmatprep.subr.bf16.mxu0 0
    %2136 = vmatpush1.bf16.msra.mxu0 %v1102
    %2137 = vmatprep.subr.bf16.mxu0 0
    %2138 = vmatpush1.bf16.msra.mxu0 0
    %2139 = vmatprep.subr.bf16.mxu0 0
    %2140 = vmatpush1.bf16.msra.mxu0 0
    %2141 = vmatprep.subr.bf16.mxu0 0
    %2142 = vmatpush1.bf16.msra.mxu0 0
    %2143 = vmatprep.subr.bf16.mxu0 0
    %2144 = vmatpush1.bf16.msra.mxu0 0
    %2145 = vmatprep.subr.bf16.mxu0 0
    %2146 = vmatpush1.bf16.msra.mxu0 0
    %2147 = vmatprep.subr.bf16.mxu0 0
    %2148 = vmatpush1.bf16.msra.mxu0 0
    %2149 = vmatprep.subr.bf16.mxu0 0
    %2150 = vmatpush1.bf16.msra.mxu0 0
    %2151 = vmatprep.subr.bf16.mxu0 0
    %2152 = vmatpush1.bf16.msra.mxu0 0
    %2153 = vmatprep.subr.bf16.mxu0 0
    %2154 = vmatpush1.bf16.msra.mxu0 0
    %2155 = vmatprep.subr.bf16.mxu0 0
    %2156 = vmatpush1.bf16.msra.mxu0 0
    %2157 = vmatprep.subr.bf16.mxu0 0
    %2158 = vmatpush1.bf16.msra.mxu0 0
    %2159 = vmatprep.subr.bf16.mxu0 0
    %2160 = vmatpush1.bf16.msra.mxu0 0
    %2161 = vmatprep.mubr.bf16.mxu0 0
    %2162 = vmatmul.mubr.bf16.gmra.mrb[0].mxu0 %v2127
    %v2163 = vpop.f32.mrb[0].mxu0
    %v2164 = vadd.f32 %v791, %v2163
    %v2165 = vpop.f32.mrb[0].mxu0
    %v2166 = vpop.f32.mrb[0].mxu0
    %v2167 = vpop.f32.mrb[0].mxu0
    %2168 = vdwg.mxu0
    %v2169 = vtanh.pop %v2164
    %v2170 = vpack.c.bf16 %v2169, %v2169
    %v2172 = vsel %vm162, %v2170, 0
    %2174 = vmatprep.subr.bf16.mxu0 0
    %2175 = vmatpush1.bf16.msra.mxu0 %v1160
    %2176 = vmatprep.subr.bf16.mxu0 0
    %2177 = vmatpush1.bf16.msra.mxu0 %v1161
    %2178 = vmatprep.subr.bf16.mxu0 0
    %2179 = vmatpush1.bf16.msra.mxu0 0
    %2180 = vmatprep.subr.bf16.mxu0 0
    %2181 = vmatpush1.bf16.msra.mxu0 0
    %2182 = vmatprep.subr.bf16.mxu0 0
    %2183 = vmatpush1.bf16.msra.mxu0 0
    %2184 = vmatprep.subr.bf16.mxu0 0
    %2185 = vmatpush1.bf16.msra.mxu0 0
    %2186 = vmatprep.subr.bf16.mxu0 0
    %2187 = vmatpush1.bf16.msra.mxu0 0
    %2188 = vmatprep.subr.bf16.mxu0 0
    %2189 = vmatpush1.bf16.msra.mxu0 0
    %2190 = vmatprep.subr.bf16.mxu0 0
    %2191 = vmatpush1.bf16.msra.mxu0 0
    %2192 = vmatprep.subr.bf16.mxu0 0
    %2193 = vmatpush1.bf16.msra.mxu0 0
    %2194 = vmatprep.subr.bf16.mxu0 0
    %2195 = vmatpush1.bf16.msra.mxu0 0
    %2196 = vmatprep.subr.bf16.mxu0 0
    %2197 = vmatpush1.bf16.msra.mxu0 0
    %2198 = vmatprep.subr.bf16.mxu0 0
    %2199 = vmatpush1.bf16.msra.mxu0 0
    %2200 = vmatprep.subr.bf16.mxu0 0
    %2201 = vmatpush1.bf16.msra.mxu0 0
    %2202 = vmatprep.subr.bf16.mxu0 0
    %2203 = vmatpush1.bf16.msra.mxu0 0
    %2204 = vmatprep.subr.bf16.mxu0 0
    %2205 = vmatpush1.bf16.msra.mxu0 0
    %2206 = vmatprep.mubr.bf16.mxu0 0
    %2207 = vmatmul.mubr.bf16.gmra.mrb[0].mxu0 %v2172
    %v2208 = vpop.f32.mrb[0].mxu0
    %v2209 = vadd.f32 %v796, %v2208
    %v2210 = vpop.f32.mrb[0].mxu0
    %v2211 = vpop.f32.mrb[0].mxu0
    %v2212 = vpop.f32.mrb[0].mxu0
    %2213 = vdwg.mxu0
    %v2214 = vsel %vm162, %v2209, -inf
    %2215 = vmax.xlane.f32.xlu0 %v2214
    %v2216 = vpop.xlane.xlu0 %2215
    %v2217 = vsub.f32 %v2209, %v2216
    %v2218 = vmul.f32 %v2217, 1.442695
    %v2219 = vpow.pop %v2218
    %v2220 = vsel %vm162, %v2219, 0.0
    %2221 = vadd.xlane.f32.xlu0 %v2220
    %v2222 = vpop.xlane.xlu0 %2221
    %v2223 = vlog2.pop %v2222
    %v2224 = vmul.f32 %v2223, 0.6931472
    %v2225 = vsub.f32 %v2217, %v2224
    %s2226 = scalar_lea.vmem [#allocation2], 24
    %2227 = vst.msk [vmem:[%s2226] sm:$0xff] %vm162, %v2225
    %vm2228 = vcmp.ge.f32.partialorder %v2209, %v2216
    %v2229 = vsel %vm2228, %v798, 32
    %v2230 = vsel %vm162, %v2229, 2147483647
    %v2231 = vand.u32 %v2230, 65535
    %v2232 = vshra.s32 %v2230, 16
    %v2233 = vcvt.s32.f32 %v2231
    %v2234 = vcvt.s32.f32 %v2232
    %2235 = vmin.xlane.f32.xlu0 %v2234
    %v2236 = vpop.xlane.xlu0 %2235
    %vm2237 = vcmp.eq.f32.partialorder %v2234, %v2236
    %v2238 = vsel %vm2237, %v2233, inf
    %2239 = vmin.xlane.f32.xlu0 %v2238
    %v2240 = vpop.xlane.xlu0 %2239
    %v2241 = vcvt.f32.s32 %v2240
    %v2242 = vcvt.f32.s32 %v2236
    %v2243 = vshll.u32 %v2242, 16
    %v2244 = vadd.s32 %v2243, %v2241
    %vm2245 = vcmp.eq.s32.totalorder %v798, %v2244
    %v2246 = vsel %vm2245, 1, 0
    %v2247 = vcvt.s32.f32 %v2246
    %v2248 = vpack.c.bf16 %v2247, %v2247
    %v2250 = vsel %vm162, %v2248, 0
    %2252 = vmatprep.subr.bf16.mxu0 0
    %2253 = vmatpush1.bf16.msra.mxu0 %v820
    %2254 = vmatprep.subr.bf16.mxu0 0
    %2255 = vmatpush1.bf16.msra.mxu0 %v821
    %2256 = vmatprep.subr.bf16.mxu0 0
    %2257 = vmatpush1.bf16.msra.mxu0 0
    %2258 = vmatprep.subr.bf16.mxu0 0
    %2259 = vmatpush1.bf16.msra.mxu0 0
    %2260 = vmatprep.subr.bf16.mxu0 0
    %2261 = vmatpush1.bf16.msra.mxu0 0
    %2262 = vmatprep.subr.bf16.mxu0 0
    %2263 = vmatpush1.bf16.msra.mxu0 0
    %2264 = vmatprep.subr.bf16.mxu0 0
    %2265 = vmatpush1.bf16.msra.mxu0 0
    %2266 = vmatprep.subr.bf16.mxu0 0
    %2267 = vmatpush1.bf16.msra.mxu0 0
    %2268 = vmatprep.subr.bf16.mxu0 0
    %2269 = vmatpush1.bf16.msra.mxu0 0
    %2270 = vmatprep.subr.bf16.mxu0 0
    %2271 = vmatpush1.bf16.msra.mxu0 0
    %2272 = vmatprep.subr.bf16.mxu0 0
    %2273 = vmatpush1.bf16.msra.mxu0 0
    %2274 = vmatprep.subr.bf16.mxu0 0
    %2275 = vmatpush1.bf16.msra.mxu0 0
    %2276 = vmatprep.subr.bf16.mxu0 0
    %2277 = vmatpush1.bf16.msra.mxu0 0
    %2278 = vmatprep.subr.bf16.mxu0 0
    %2279 = vmatpush1.bf16.msra.mxu0 0
    %2280 = vmatprep.subr.bf16.mxu0 0
    %2281 = vmatpush1.bf16.msra.mxu0 0
    %2282 = vmatprep.subr.bf16.mxu0 0
    %2283 = vmatpush1.bf16.msra.mxu0 0
    %2284 = vmatprep.mubr.bf16.mxu0 0
    %2285 = vmatmul.mubr.bf16.gmra.mrb[0].mxu0 %v2250
    %v2286 = vpop.f32.mrb[0].mxu0
    %v2287 = vadd.f32 0.0, %v2286
    %v2288 = vpop.f32.mrb[0].mxu0
    %v2289 = vpop.f32.mrb[0].mxu0
    %v2290 = vpop.f32.mrb[0].mxu0
    %2291 = vdwg.mxu0
    %2292 = vmatprep.subr.bf16.mxu0 0
    %2293 = vmatpush1.bf16.msra.mxu0 %v877
    %2294 = vmatprep.subr.bf16.mxu0 0
    %2295 = vmatpush1.bf16.msra.mxu0 %v878
    %2296 = vmatprep.subr.bf16.mxu0 0
    %2297 = vmatpush1.bf16.msra.mxu0 0
    %2298 = vmatprep.subr.bf16.mxu0 0
    %2299 = vmatpush1.bf16.msra.mxu0 0
    %2300 = vmatprep.subr.bf16.mxu0 0
    %2301 = vmatpush1.bf16.msra.mxu0 0
    %2302 = vmatprep.subr.bf16.mxu0 0
    %2303 = vmatpush1.bf16.msra.mxu0 0
    %2304 = vmatprep.subr.bf16.mxu0 0
    %2305 = vmatpush1.bf16.msra.mxu0 0
    %2306 = vmatprep.subr.bf16.mxu0 0
    %2307 = vmatpush1.bf16.msra.mxu0 0
    %2308 = vmatprep.subr.bf16.mxu0 0
    %2309 = vmatpush1.bf16.msra.mxu0 0
    %2310 = vmatprep.subr.bf16.mxu0 0
    %2311 = vmatpush1.bf16.msra.mxu0 0
    %2312 = vmatprep.subr.bf16.mxu0 0
    %2313 = vmatpush1.bf16.msra.mxu0 0
    %2314 = vmatprep.subr.bf16.mxu0 0
    %2315 = vmatpush1.bf16.msra.mxu0 0
    %2316 = vmatprep.subr.bf16.mxu0 0
    %2317 = vmatpush1.bf16.msra.mxu0 0
    %2318 = vmatprep.subr.bf16.mxu0 0
    %2319 = vmatpush1.bf16.msra.mxu0 0
    %2320 = vmatprep.subr.bf16.mxu0 0
    %2321 = vmatpush1.bf16.msra.mxu0 0
    %2322 = vmatprep.subr.bf16.mxu0 0
    %2323 = vmatpush1.bf16.msra.mxu0 0
    %2324 = vmatprep.mubr.bf16.mxu0 0
    %2325 = vmatmul.mubr.bf16.gmra.mrb[0].mxu0 %v2027
    %v2326 = vpop.f32.mrb[0].mxu0
    %v2327 = vadd.f32 %v786, %v2326
    %v2328 = vpop.f32.mrb[0].mxu0
    %v2329 = vpop.f32.mrb[0].mxu0
    %v2330 = vpop.f32.mrb[0].mxu0
    %2331 = vdwg.mxu0
    %v2332 = vadd.f32 %v2287, %v2327
    %v2333 = vxor.u32 %v2332, 2147483648
    %v2334 = vmul.f32 %v2333, 1.442695
    %v2335 = vpow.pop %v2334
    %v2336 = vadd.f32 %v2335, 1.0
    %v2337 = vrcp.pop %v2336
    %v2338 = vmul.f32 1.0, %v2337
    %2340 = vrot.lane.b32.xlu0 %v2327, 64
    %v2341 = vpop.permute.xlu0 %2340
    %v2343 = vmul.f32 %v2338, %v2341
    %2345 = vrot.lane.b32.xlu0 %v2343, 64
    %v2346 = vpop.permute.xlu0 %2345
    %v2348 = vadd.f32 %v2287, %v2346
    %v2349 = vtanh.pop %v2348
    %v2350 = vsub.f32 1.0, %v2338
    %2352 = vrot.lane.b32.xlu0 %v2349, 96
    %v2353 = vpop.permute.xlu0 %2352
    %v2355 = vmul.f32 %v2350, %v2353
    %v2356 = vmul.f32 %v2338, %v2021
    %v2357 = vadd.f32 %v2355, %v2356
    %v2358 = vpack.c.bf16 %v2357, %v2357
    %2360 = vrot.lane.b32.xlu0 %v2358, 96
    %v2361 = vpop.permute.xlu0 %2360
    %v2363 = vsel %vm162, %v2361, 0
    %2365 = vmatprep.subr.bf16.mxu0 0
    %2366 = vmatpush1.bf16.xpose.msra.mxu0 %v970
    %2367 = vmatprep.subr.bf16.mxu0 0
    %2368 = vmatpush1.bf16.xpose.msra.mxu0 %v973
    %2369 = vmatprep.subr.bf16.mxu0 0
    %2370 = vmatpush1.bf16.xpose.msra.mxu0 %v976
    %2371 = vmatprep.subr.bf16.mxu0 0
    %2372 = vmatpush1.bf16.xpose.msra.mxu0 %v979
    %2373 = vmatprep.subr.bf16.mxu0 0
    %2374 = vmatpush1.bf16.xpose.msra.mxu0 0
    %2375 = vmatprep.subr.bf16.mxu0 0
    %2376 = vmatpush1.bf16.xpose.msra.mxu0 0
    %2377 = vmatprep.subr.bf16.mxu0 0
    %2378 = vmatpush1.bf16.xpose.msra.mxu0 0
    %2379 = vmatprep.subr.bf16.mxu0 0
    %2380 = vmatpush1.bf16.xpose.msra.mxu0 0
    %2381 = vmatprep.subr.bf16.mxu0 0
    %2382 = vmatpush1.bf16.xpose.msra.mxu0 0
    %2383 = vmatprep.subr.bf16.mxu0 0
    %2384 = vmatpush1.bf16.xpose.msra.mxu0 0
    %2385 = vmatprep.subr.bf16.mxu0 0
    %2386 = vmatpush1.bf16.xpose.msra.mxu0 0
    %2387 = vmatprep.subr.bf16.mxu0 0
    %2388 = vmatpush1.bf16.xpose.msra.mxu0 0
    %2389 = vmatprep.subr.bf16.mxu0 0
    %2390 = vmatpush1.bf16.xpose.msra.mxu0 0
    %2391 = vmatprep.subr.bf16.mxu0 0
    %2392 = vmatpush1.bf16.xpose.msra.mxu0 0
    %2393 = vmatprep.subr.bf16.mxu0 0
    %2394 = vmatpush1.bf16.xpose.msra.mxu0 0
    %2395 = vmatprep.subr.bf16.mxu0 0
    %2396 = vmatpush1.bf16.xpose.msra.mxu0 0
    %2397 = vmatprep.mubr.bf16.mxu0 0
    %2398 = vmatmul.mubr.bf16.gmra.mrb[0].mxu0 %v2363
    %v2399 = vpop.f32.mrb[0].mxu0
    %v2400 = vadd.f32 %v803, %v2399
    %v2401 = vpop.f32.mrb[0].mxu0
    %v2402 = vpop.f32.mrb[0].mxu0
    %v2403 = vpop.f32.mrb[0].mxu0
    %2404 = vdwg.mxu0
    %v2405 = vsel %vm1021, %v2400, -inf
    %2406 = vmax.xlane.f32.xlu0 %v2405
    %v2407 = vpop.xlane.xlu0 %2406
    %v2408 = vsub.f32 %v2400, %v2407
    %v2409 = vmul.f32 %v2408, 1.442695
    %v2410 = vpow.pop %v2409
    %v2411 = vsel %vm1021, %v2410, 0.0
    %2412 = vadd.xlane.f32.xlu0 %v2411
    %v2413 = vpop.xlane.xlu0 %2412
    %v2414 = vrcp.pop %v2413
    %v2415 = vmul.f32 %v2410, %v2414
    %v2416 = vpack.c.bf16 %v2415, %v2415
    %v2418 = vsel %vm1021, %v2416, 0
    %2420 = vmatprep.subr.bf16.mxu0 0
    %2421 = vmatpush1.bf16.msra.mxu0 %v959
    %2422 = vmatprep.subr.bf16.mxu0 0
    %2423 = vmatpush1.bf16.msra.mxu0 %v961
    %2424 = vmatprep.subr.bf16.mxu0 0
    %2425 = vmatpush1.bf16.msra.mxu0 %v963
    %2426 = vmatprep.subr.bf16.mxu0 0
    %2427 = vmatpush1.bf16.msra.mxu0 %v965
    %2428 = vmatprep.subr.bf16.mxu0 0
    %2429 = vmatpush1.bf16.msra.mxu0 0
    %2430 = vmatprep.subr.bf16.mxu0 0
    %2431 = vmatpush1.bf16.msra.mxu0 0
    %2432 = vmatprep.subr.bf16.mxu0 0
    %2433 = vmatpush1.bf16.msra.mxu0 0
    %2434 = vmatprep.subr.bf16.mxu0 0
    %2435 = vmatpush1.bf16.msra.mxu0 0
    %2436 = vmatprep.subr.bf16.mxu0 0
    %2437 = vmatpush1.bf16.msra.mxu0 0
    %2438 = vmatprep.subr.bf16.mxu0 0
    %2439 = vmatpush1.bf16.msra.mxu0 0
    %2440 = vmatprep.subr.bf16.mxu0 0
    %2441 = vmatpush1.bf16.msra.mxu0 0
    %2442 = vmatprep.subr.bf16.mxu0 0
    %2443 = vmatpush1.bf16.msra.mxu0 0
    %2444 = vmatprep.subr.bf16.mxu0 0
    %2445 = vmatpush1.bf16.msra.mxu0 0
    %2446 = vmatprep.subr.bf16.mxu0 0
    %2447 = vmatpush1.bf16.msra.mxu0 0
    %2448 = vmatprep.subr.bf16.mxu0 0
    %2449 = vmatpush1.bf16.msra.mxu0 0
    %2450 = vmatprep.subr.bf16.mxu0 0
    %2451 = vmatpush1.bf16.msra.mxu0 0
    %2452 = vmatprep.mubr.bf16.mxu0 0
    %2453 = vmatmul.mubr.bf16.gmra.mrb[0].mxu0 %v2418
    %v2454 = vpop.f32.mrb[0].mxu0
    %v2455 = vadd.f32 0.0, %v2454
    %v2456 = vpop.f32.mrb[0].mxu0
    %v2457 = vpop.f32.mrb[0].mxu0
    %v2458 = vpop.f32.mrb[0].mxu0
    %2459 = vdwg.mxu0
    %v2460 = vsel %vm162, %v2455, %v2357
    %v2461 = vpack.c.bf16 %v2460, %v2460
    %v2463 = vsel %vm1021, %v2461, 0
    %2465 = vmatprep.subr.bf16.mxu0 0
    %2466 = vmatpush1.bf16.msra.mxu0 %v1099
    %2467 = vmatprep.subr.bf16.mxu0 0
    %2468 = vmatpush1.bf16.msra.mxu0 %v1100
    %2469 = vmatprep.subr.bf16.mxu0 0
    %2470 = vmatpush1.bf16.msra.mxu0 %v1101
    %2471 = vmatprep.subr.bf16.mxu0 0
    %2472 = vmatpush1.bf16.msra.mxu0 %v1102
    %2473 = vmatprep.subr.bf16.mxu0 0
    %2474 = vmatpush1.bf16.msra.mxu0 0
    %2475 = vmatprep.subr.bf16.mxu0 0
    %2476 = vmatpush1.bf16.msra.mxu0 0
    %2477 = vmatprep.subr.bf16.mxu0 0
    %2478 = vmatpush1.bf16.msra.mxu0 0
    %2479 = vmatprep.subr.bf16.mxu0 0
    %2480 = vmatpush1.bf16.msra.mxu0 0
    %2481 = vmatprep.subr.bf16.mxu0 0
    %2482 = vmatpush1.bf16.msra.mxu0 0
    %2483 = vmatprep.subr.bf16.mxu0 0
    %2484 = vmatpush1.bf16.msra.mxu0 0
    %2485 = vmatprep.subr.bf16.mxu0 0
    %2486 = vmatpush1.bf16.msra.mxu0 0
    %2487 = vmatprep.subr.bf16.mxu0 0
    %2488 = vmatpush1.bf16.msra.mxu0 0
    %2489 = vmatprep.subr.bf16.mxu0 0
    %2490 = vmatpush1.bf16.msra.mxu0 0
    %2491 = vmatprep.subr.bf16.mxu0 0
    %2492 = vmatpush1.bf16.msra.mxu0 0
    %2493 = vmatprep.subr.bf16.mxu0 0
    %2494 = vmatpush1.bf16.msra.mxu0 0
    %2495 = vmatprep.subr.bf16.mxu0 0
    %2496 = vmatpush1.bf16.msra.mxu0 0
    %2497 = vmatprep.mubr.bf16.mxu0 0
    %2498 = vmatmul.mubr.bf16.gmra.mrb[0].mxu0 %v2463
    %v2499 = vpop.f32.mrb[0].mxu0
    %v2500 = vadd.f32 %v791, %v2499
    %v2501 = vpop.f32.mrb[0].mxu0
    %v2502 = vpop.f32.mrb[0].mxu0
    %v2503 = vpop.f32.mrb[0].mxu0
    %2504 = vdwg.mxu0
    %v2505 = vtanh.pop %v2500
    %v2506 = vpack.c.bf16 %v2505, %v2505
    %v2508 = vsel %vm162, %v2506, 0
    %2510 = vmatprep.subr.bf16.mxu0 0
    %2511 = vmatpush1.bf16.msra.mxu0 %v1160
    %2512 = vmatprep.subr.bf16.mxu0 0
    %2513 = vmatpush1.bf16.msra.mxu0 %v1161
    %2514 = vmatprep.subr.bf16.mxu0 0
    %2515 = vmatpush1.bf16.msra.mxu0 0
    %2516 = vmatprep.subr.bf16.mxu0 0
    %2517 = vmatpush1.bf16.msra.mxu0 0
    %2518 = vmatprep.subr.bf16.mxu0 0
    %2519 = vmatpush1.bf16.msra.mxu0 0
    %2520 = vmatprep.subr.bf16.mxu0 0
    %2521 = vmatpush1.bf16.msra.mxu0 0
    %2522 = vmatprep.subr.bf16.mxu0 0
    %2523 = vmatpush1.bf16.msra.mxu0 0
    %2524 = vmatprep.subr.bf16.mxu0 0
    %2525 = vmatpush1.bf16.msra.mxu0 0
    %2526 = vmatprep.subr.bf16.mxu0 0
    %2527 = vmatpush1.bf16.msra.mxu0 0
    %2528 = vmatprep.subr.bf16.mxu0 0
    %2529 = vmatpush1.bf16.msra.mxu0 0
    %2530 = vmatprep.subr.bf16.mxu0 0
    %2531 = vmatpush1.bf16.msra.mxu0 0
    %2532 = vmatprep.subr.bf16.mxu0 0
    %2533 = vmatpush1.bf16.msra.mxu0 0
    %2534 = vmatprep.subr.bf16.mxu0 0
    %2535 = vmatpush1.bf16.msra.mxu0 0
    %2536 = vmatprep.subr.bf16.mxu0 0
    %2537 = vmatpush1.bf16.msra.mxu0 0
    %2538 = vmatprep.subr.bf16.mxu0 0
    %2539 = vmatpush1.bf16.msra.mxu0 0
    %2540 = vmatprep.subr.bf16.mxu0 0
    %2541 = vmatpush1.bf16.msra.mxu0 0
    %2542 = vmatprep.mubr.bf16.mxu0 0
    %2543 = vmatmul.mubr.bf16.gmra.mrb[0].mxu0 %v2508
    %v2544 = vpop.f32.mrb[0].mxu0
    %v2545 = vadd.f32 %v796, %v2544
    %v2546 = vpop.f32.mrb[0].mxu0
    %v2547 = vpop.f32.mrb[0].mxu0
    %v2548 = vpop.f32.mrb[0].mxu0
    %2549 = vdwg.mxu0
    %v2550 = vsel %vm162, %v2545, -inf
    %2551 = vmax.xlane.f32.xlu0 %v2550
    %v2552 = vpop.xlane.xlu0 %2551
    %v2553 = vsub.f32 %v2545, %v2552
    %v2554 = vmul.f32 %v2553, 1.442695
    %v2555 = vpow.pop %v2554
    %v2556 = vsel %vm162, %v2555, 0.0
    %2557 = vadd.xlane.f32.xlu0 %v2556
    %v2558 = vpop.xlane.xlu0 %2557
    %v2559 = vlog2.pop %v2558
    %v2560 = vmul.f32 %v2559, 0.6931472
    %v2561 = vsub.f32 %v2553, %v2560
    %s2562 = scalar_lea.vmem [#allocation2], 32
    %2563 = vst.msk [vmem:[%s2562] sm:$0xff] %vm162, %v2561
    %vm2564 = vcmp.ge.f32.partialorder %v2545, %v2552
    %v2565 = vsel %vm2564, %v798, 32
    %v2566 = vsel %vm162, %v2565, 2147483647
    %v2567 = vand.u32 %v2566, 65535
    %v2568 = vshra.s32 %v2566, 16
    %v2569 = vcvt.s32.f32 %v2567
    %v2570 = vcvt.s32.f32 %v2568
    %2571 = vmin.xlane.f32.xlu0 %v2570
    %v2572 = vpop.xlane.xlu0 %2571
    %vm2573 = vcmp.eq.f32.partialorder %v2570, %v2572
    %v2574 = vsel %vm2573, %v2569, inf
    %2575 = vmin.xlane.f32.xlu0 %v2574
    %v2576 = vpop.xlane.xlu0 %2575
    %v2577 = vcvt.f32.s32 %v2576
    %v2578 = vcvt.f32.s32 %v2572
    %v2579 = vshll.u32 %v2578, 16
    %v2580 = vadd.s32 %v2579, %v2577
    %vm2581 = vcmp.eq.s32.totalorder %v798, %v2580
    %v2582 = vsel %vm2581, 1, 0
    %v2583 = vcvt.s32.f32 %v2582
    %v2584 = vpack.c.bf16 %v2583, %v2583
    %v2586 = vsel %vm162, %v2584, 0
    %2588 = vmatprep.subr.bf16.mxu0 0
    %2589 = vmatpush1.bf16.msra.mxu0 %v820
    %2590 = vmatprep.subr.bf16.mxu0 0
    %2591 = vmatpush1.bf16.msra.mxu0 %v821
    %2592 = vmatprep.subr.bf16.mxu0 0
    %2593 = vmatpush1.bf16.msra.mxu0 0
    %2594 = vmatprep.subr.bf16.mxu0 0
    %2595 = vmatpush1.bf16.msra.mxu0 0
    %2596 = vmatprep.subr.bf16.mxu0 0
    %2597 = vmatpush1.bf16.msra.mxu0 0
    %2598 = vmatprep.subr.bf16.mxu0 0
    %2599 = vmatpush1.bf16.msra.mxu0 0
    %2600 = vmatprep.subr.bf16.mxu0 0
    %2601 = vmatpush1.bf16.msra.mxu0 0
    %2602 = vmatprep.subr.bf16.mxu0 0
    %2603 = vmatpush1.bf16.msra.mxu0 0
    %2604 = vmatprep.subr.bf16.mxu0 0
    %2605 = vmatpush1.bf16.msra.mxu0 0
    %2606 = vmatprep.subr.bf16.mxu0 0
    %2607 = vmatpush1.bf16.msra.mxu0 0
    %2608 = vmatprep.subr.bf16.mxu0 0
    %2609 = vmatpush1.bf16.msra.mxu0 0
    %2610 = vmatprep.subr.bf16.mxu0 0
    %2611 = vmatpush1.bf16.msra.mxu0 0
    %2612 = vmatprep.subr.bf16.mxu0 0
    %2613 = vmatpush1.bf16.msra.mxu0 0
    %2614 = vmatprep.subr.bf16.mxu0 0
    %2615 = vmatpush1.bf16.msra.mxu0 0
    %2616 = vmatprep.subr.bf16.mxu0 0
    %2617 = vmatpush1.bf16.msra.mxu0 0
    %2618 = vmatprep.subr.bf16.mxu0 0
    %2619 = vmatpush1.bf16.msra.mxu0 0
    %2620 = vmatprep.mubr.bf16.mxu0 0
    %2621 = vmatmul.mubr.bf16.gmra.mrb[0].mxu0 %v2586
    %v2622 = vpop.f32.mrb[0].mxu0
    %v2623 = vadd.f32 0.0, %v2622
    %v2624 = vpop.f32.mrb[0].mxu0
    %v2625 = vpop.f32.mrb[0].mxu0
    %v2626 = vpop.f32.mrb[0].mxu0
    %2627 = vdwg.mxu0
    %2628 = vmatprep.subr.bf16.mxu0 0
    %2629 = vmatpush1.bf16.msra.mxu0 %v877
    %2630 = vmatprep.subr.bf16.mxu0 0
    %2631 = vmatpush1.bf16.msra.mxu0 %v878
    %2632 = vmatprep.subr.bf16.mxu0 0
    %2633 = vmatpush1.bf16.msra.mxu0 0
    %2634 = vmatprep.subr.bf16.mxu0 0
    %2635 = vmatpush1.bf16.msra.mxu0 0
    %2636 = vmatprep.subr.bf16.mxu0 0
    %2637 = vmatpush1.bf16.msra.mxu0 0
    %2638 = vmatprep.subr.bf16.mxu0 0
    %2639 = vmatpush1.bf16.msra.mxu0 0
    %2640 = vmatprep.subr.bf16.mxu0 0
    %2641 = vmatpush1.bf16.msra.mxu0 0
    %2642 = vmatprep.subr.bf16.mxu0 0
    %2643 = vmatpush1.bf16.msra.mxu0 0
    %2644 = vmatprep.subr.bf16.mxu0 0
    %2645 = vmatpush1.bf16.msra.mxu0 0
    %2646 = vmatprep.subr.bf16.mxu0 0
    %2647 = vmatpush1.bf16.msra.mxu0 0
    %2648 = vmatprep.subr.bf16.mxu0 0
    %2649 = vmatpush1.bf16.msra.mxu0 0
    %2650 = vmatprep.subr.bf16.mxu0 0
    %2651 = vmatpush1.bf16.msra.mxu0 0
    %2652 = vmatprep.subr.bf16.mxu0 0
    %2653 = vmatpush1.bf16.msra.mxu0 0
    %2654 = vmatprep.subr.bf16.mxu0 0
    %2655 = vmatpush1.bf16.msra.mxu0 0
    %2656 = vmatprep.subr.bf16.mxu0 0
    %2657 = vmatpush1.bf16.msra.mxu0 0
    %2658 = vmatprep.subr.bf16.mxu0 0
    %2659 = vmatpush1.bf16.msra.mxu0 0
    %2660 = vmatprep.mubr.bf16.mxu0 0
    %2661 = vmatmul.mubr.bf16.gmra.mrb[0].mxu0 %v2363
    %v2662 = vpop.f32.mrb[0].mxu0
    %v2663 = vadd.f32 %v786, %v2662
    %v2664 = vpop.f32.mrb[0].mxu0
    %v2665 = vpop.f32.mrb[0].mxu0
    %v2666 = vpop.f32.mrb[0].mxu0
    %2667 = vdwg.mxu0
    %v2668 = vadd.f32 %v2623, %v2663
    %v2669 = vxor.u32 %v2668, 2147483648
    %v2670 = vmul.f32 %v2669, 1.442695
    %v2671 = vpow.pop %v2670
    %v2672 = vadd.f32 %v2671, 1.0
    %v2673 = vrcp.pop %v2672
    %v2674 = vmul.f32 1.0, %v2673
    %2676 = vrot.lane.b32.xlu0 %v2663, 64
    %v2677 = vpop.permute.xlu0 %2676
    %v2679 = vmul.f32 %v2674, %v2677
    %2681 = vrot.lane.b32.xlu0 %v2679, 64
    %v2682 = vpop.permute.xlu0 %2681
    %v2684 = vadd.f32 %v2623, %v2682
    %v2685 = vtanh.pop %v2684
    %v2686 = vsub.f32 1.0, %v2674
    %2688 = vrot.lane.b32.xlu0 %v2685, 96
    %v2689 = vpop.permute.xlu0 %2688
    %v2691 = vmul.f32 %v2686, %v2689
    %v2692 = vmul.f32 %v2674, %v2357
    %v2693 = vadd.f32 %v2691, %v2692
    %v2694 = vpack.c.bf16 %v2693, %v2693
    %2696 = vrot.lane.b32.xlu0 %v2694, 96
    %v2697 = vpop.permute.xlu0 %2696
    %v2699 = vsel %vm162, %v2697, 0
    %2701 = vmatprep.subr.bf16.mxu0 0
    %2702 = vmatpush1.bf16.xpose.msra.mxu0 %v970
    %2703 = vmatprep.subr.bf16.mxu0 0
    %2704 = vmatpush1.bf16.xpose.msra.mxu0 %v973
    %2705 = vmatprep.subr.bf16.mxu0 0
    %2706 = vmatpush1.bf16.xpose.msra.mxu0 %v976
    %2707 = vmatprep.subr.bf16.mxu0 0
    %2708 = vmatpush1.bf16.xpose.msra.mxu0 %v979
    %2709 = vmatprep.subr.bf16.mxu0 0
    %2710 = vmatpush1.bf16.xpose.msra.mxu0 0
    %2711 = vmatprep.subr.bf16.mxu0 0
    %2712 = vmatpush1.bf16.xpose.msra.mxu0 0
    %2713 = vmatprep.subr.bf16.mxu0 0
    %2714 = vmatpush1.bf16.xpose.msra.mxu0 0
    %2715 = vmatprep.subr.bf16.mxu0 0
    %2716 = vmatpush1.bf16.xpose.msra.mxu0 0
    %2717 = vmatprep.subr.bf16.mxu0 0
    %2718 = vmatpush1.bf16.xpose.msra.mxu0 0
    %2719 = vmatprep.subr.bf16.mxu0 0
    %2720 = vmatpush1.bf16.xpose.msra.mxu0 0
    %2721 = vmatprep.subr.bf16.mxu0 0
    %2722 = vmatpush1.bf16.xpose.msra.mxu0 0
    %2723 = vmatprep.subr.bf16.mxu0 0
    %2724 = vmatpush1.bf16.xpose.msra.mxu0 0
    %2725 = vmatprep.subr.bf16.mxu0 0
    %2726 = vmatpush1.bf16.xpose.msra.mxu0 0
    %2727 = vmatprep.subr.bf16.mxu0 0
    %2728 = vmatpush1.bf16.xpose.msra.mxu0 0
    %2729 = vmatprep.subr.bf16.mxu0 0
    %2730 = vmatpush1.bf16.xpose.msra.mxu0 0
    %2731 = vmatprep.subr.bf16.mxu0 0
    %2732 = vmatpush1.bf16.xpose.msra.mxu0 0
    %2733 = vmatprep.mubr.bf16.mxu0 0
    %2734 = vmatmul.mubr.bf16.gmra.mrb[0].mxu0 %v2699
    %v2735 = vpop.f32.mrb[0].mxu0
    %v2736 = vadd.f32 %v803, %v2735
    %v2737 = vpop.f32.mrb[0].mxu0
    %v2738 = vpop.f32.mrb[0].mxu0
    %v2739 = vpop.f32.mrb[0].mxu0
    %2740 = vdwg.mxu0
    %v2741 = vsel %vm1021, %v2736, -inf
    %2742 = vmax.xlane.f32.xlu0 %v2741
    %v2743 = vpop.xlane.xlu0 %2742
    %v2744 = vsub.f32 %v2736, %v2743
    %v2745 = vmul.f32 %v2744, 1.442695
    %v2746 = vpow.pop %v2745
    %v2747 = vsel %vm1021, %v2746, 0.0
    %2748 = vadd.xlane.f32.xlu0 %v2747
    %v2749 = vpop.xlane.xlu0 %2748
    %v2750 = vrcp.pop %v2749
    %v2751 = vmul.f32 %v2746, %v2750
    %v2752 = vpack.c.bf16 %v2751, %v2751
    %v2754 = vsel %vm1021, %v2752, 0
    %2756 = vmatprep.subr.bf16.mxu0 0
    %2757 = vmatpush1.bf16.msra.mxu0 %v959
    %2758 = vmatprep.subr.bf16.mxu0 0
    %2759 = vmatpush1.bf16.msra.mxu0 %v961
    %2760 = vmatprep.subr.bf16.mxu0 0
    %2761 = vmatpush1.bf16.msra.mxu0 %v963
    %2762 = vmatprep.subr.bf16.mxu0 0
    %2763 = vmatpush1.bf16.msra.mxu0 %v965
    %2764 = vmatprep.subr.bf16.mxu0 0
    %2765 = vmatpush1.bf16.msra.mxu0 0
    %2766 = vmatprep.subr.bf16.mxu0 0
    %2767 = vmatpush1.bf16.msra.mxu0 0
    %2768 = vmatprep.subr.bf16.mxu0 0
    %2769 = vmatpush1.bf16.msra.mxu0 0
    %2770 = vmatprep.subr.bf16.mxu0 0
    %2771 = vmatpush1.bf16.msra.mxu0 0
    %2772 = vmatprep.subr.bf16.mxu0 0
    %2773 = vmatpush1.bf16.msra.mxu0 0
    %2774 = vmatprep.subr.bf16.mxu0 0
    %2775 = vmatpush1.bf16.msra.mxu0 0
    %2776 = vmatprep.subr.bf16.mxu0 0
    %2777 = vmatpush1.bf16.msra.mxu0 0
    %2778 = vmatprep.subr.bf16.mxu0 0
    %2779 = vmatpush1.bf16.msra.mxu0 0
    %2780 = vmatprep.subr.bf16.mxu0 0
    %2781 = vmatpush1.bf16.msra.mxu0 0
    %2782 = vmatprep.subr.bf16.mxu0 0
    %2783 = vmatpush1.bf16.msra.mxu0 0
    %2784 = vmatprep.subr.bf16.mxu0 0
    %2785 = vmatpush1.bf16.msra.mxu0 0
    %2786 = vmatprep.subr.bf16.mxu0 0
    %2787 = vmatpush1.bf16.msra.mxu0 0
    %2788 = vmatprep.mubr.bf16.mxu0 0
    %2789 = vmatmul.mubr.bf16.gmra.mrb[0].mxu0 %v2754
    %v2790 = vpop.f32.mrb[0].mxu0
    %v2791 = vadd.f32 0.0, %v2790
    %v2792 = vpop.f32.mrb[0].mxu0
    %v2793 = vpop.f32.mrb[0].mxu0
    %v2794 = vpop.f32.mrb[0].mxu0
    %2795 = vdwg.mxu0
    %v2796 = vsel %vm162, %v2791, %v2693
    %v2797 = vpack.c.bf16 %v2796, %v2796
    %v2799 = vsel %vm1021, %v2797, 0
    %2801 = vmatprep.subr.bf16.mxu0 0
    %2802 = vmatpush1.bf16.msra.mxu0 %v1099
    %2803 = vmatprep.subr.bf16.mxu0 0
    %2804 = vmatpush1.bf16.msra.mxu0 %v1100
    %2805 = vmatprep.subr.bf16.mxu0 0
    %2806 = vmatpush1.bf16.msra.mxu0 %v1101
    %2807 = vmatprep.subr.bf16.mxu0 0
    %2808 = vmatpush1.bf16.msra.mxu0 %v1102
    %2809 = vmatprep.subr.bf16.mxu0 0
    %2810 = vmatpush1.bf16.msra.mxu0 0
    %2811 = vmatprep.subr.bf16.mxu0 0
    %2812 = vmatpush1.bf16.msra.mxu0 0
    %2813 = vmatprep.subr.bf16.mxu0 0
    %2814 = vmatpush1.bf16.msra.mxu0 0
    %2815 = vmatprep.subr.bf16.mxu0 0
    %2816 = vmatpush1.bf16.msra.mxu0 0
    %2817 = vmatprep.subr.bf16.mxu0 0
    %2818 = vmatpush1.bf16.msra.mxu0 0
    %2819 = vmatprep.subr.bf16.mxu0 0
    %2820 = vmatpush1.bf16.msra.mxu0 0
    %2821 = vmatprep.subr.bf16.mxu0 0
    %2822 = vmatpush1.bf16.msra.mxu0 0
    %2823 = vmatprep.subr.bf16.mxu0 0
    %2824 = vmatpush1.bf16.msra.mxu0 0
    %2825 = vmatprep.subr.bf16.mxu0 0
    %2826 = vmatpush1.bf16.msra.mxu0 0
    %2827 = vmatprep.subr.bf16.mxu0 0
    %2828 = vmatpush1.bf16.msra.mxu0 0
    %2829 = vmatprep.subr.bf16.mxu0 0
    %2830 = vmatpush1.bf16.msra.mxu0 0
    %2831 = vmatprep.subr.bf16.mxu0 0
    %2832 = vmatpush1.bf16.msra.mxu0 0
    %2833 = vmatprep.mubr.bf16.mxu0 0
    %2834 = vmatmul.mubr.bf16.gmra.mrb[0].mxu0 %v2799
    %v2835 = vpop.f32.mrb[0].mxu0
    %v2836 = vadd.f32 %v791, %v2835
    %v2837 = vpop.f32.mrb[0].mxu0
    %v2838 = vpop.f32.mrb[0].mxu0
    %v2839 = vpop.f32.mrb[0].mxu0
    %2840 = vdwg.mxu0
    %v2841 = vtanh.pop %v2836
    %v2842 = vpack.c.bf16 %v2841, %v2841
    %v2844 = vsel %vm162, %v2842, 0
    %2846 = vmatprep.subr.bf16.mxu0 0
    %2847 = vmatpush1.bf16.msra.mxu0 %v1160
    %2848 = vmatprep.subr.bf16.mxu0 0
    %2849 = vmatpush1.bf16.msra.mxu0 %v1161
    %2850 = vmatprep.subr.bf16.mxu0 0
    %2851 = vmatpush1.bf16.msra.mxu0 0
    %2852 = vmatprep.subr.bf16.mxu0 0
    %2853 = vmatpush1.bf16.msra.mxu0 0
    %2854 = vmatprep.subr.bf16.mxu0 0
    %2855 = vmatpush1.bf16.msra.mxu0 0
    %2856 = vmatprep.subr.bf16.mxu0 0
    %2857 = vmatpush1.bf16.msra.mxu0 0
    %2858 = vmatprep.subr.bf16.mxu0 0
    %2859 = vmatpush1.bf16.msra.mxu0 0
    %2860 = vmatprep.subr.bf16.mxu0 0
    %2861 = vmatpush1.bf16.msra.mxu0 0
    %2862 = vmatprep.subr.bf16.mxu0 0
    %2863 = vmatpush1.bf16.msra.mxu0 0
    %2864 = vmatprep.subr.bf16.mxu0 0
    %2865 = vmatpush1.bf16.msra.mxu0 0
    %2866 = vmatprep.subr.bf16.mxu0 0
    %2867 = vmatpush1.bf16.msra.mxu0 0
    %2868 = vmatprep.subr.bf16.mxu0 0
    %2869 = vmatpush1.bf16.msra.mxu0 0
    %2870 = vmatprep.subr.bf16.mxu0 0
    %2871 = vmatpush1.bf16.msra.mxu0 0
    %2872 = vmatprep.subr.bf16.mxu0 0
    %2873 = vmatpush1.bf16.msra.mxu0 0
    %2874 = vmatprep.subr.bf16.mxu0 0
    %2875 = vmatpush1.bf16.msra.mxu0 0
    %2876 = vmatprep.subr.bf16.mxu0 0
    %2877 = vmatpush1.bf16.msra.mxu0 0
    %2878 = vmatprep.mubr.bf16.mxu0 0
    %2879 = vmatmul.mubr.bf16.gmra.mrb[0].mxu0 %v2844
    %v2880 = vpop.f32.mrb[0].mxu0
    %v2881 = vadd.f32 %v796, %v2880
    %v2882 = vpop.f32.mrb[0].mxu0
    %v2883 = vpop.f32.mrb[0].mxu0
    %v2884 = vpop.f32.mrb[0].mxu0
    %2885 = vdwg.mxu0
    %v2886 = vsel %vm162, %v2881, -inf
    %2887 = vmax.xlane.f32.xlu0 %v2886
    %v2888 = vpop.xlane.xlu0 %2887
    %v2889 = vsub.f32 %v2881, %v2888
    %v2890 = vmul.f32 %v2889, 1.442695
    %v2891 = vpow.pop %v2890
    %v2892 = vsel %vm162, %v2891, 0.0
    %2893 = vadd.xlane.f32.xlu0 %v2892
    %v2894 = vpop.xlane.xlu0 %2893
    %v2895 = vlog2.pop %v2894
    %v2896 = vmul.f32 %v2895, 0.6931472
    %v2897 = vsub.f32 %v2889, %v2896
    %s2898 = scalar_lea.vmem [#allocation2], 40
    %2899 = vst.msk [vmem:[%s2898] sm:$0xff] %vm162, %v2897
    %vm2900 = vcmp.ge.f32.partialorder %v2881, %v2888
    %v2901 = vsel %vm2900, %v798, 32
    %v2902 = vsel %vm162, %v2901, 2147483647
    %v2903 = vand.u32 %v2902, 65535
    %v2904 = vshra.s32 %v2902, 16
    %v2905 = vcvt.s32.f32 %v2903
    %v2906 = vcvt.s32.f32 %v2904
    %2907 = vmin.xlane.f32.xlu0 %v2906
    %v2908 = vpop.xlane.xlu0 %2907
    %vm2909 = vcmp.eq.f32.partialorder %v2906, %v2908
    %v2910 = vsel %vm2909, %v2905, inf
    %2911 = vmin.xlane.f32.xlu0 %v2910
    %v2912 = vpop.xlane.xlu0 %2911
    %v2913 = vcvt.f32.s32 %v2912
    %v2914 = vcvt.f32.s32 %v2908
    %v2915 = vshll.u32 %v2914, 16
    %v2916 = vadd.s32 %v2915, %v2913
    %vm2917 = vcmask 7168
    %v2918 = vsel %vm2917, %v1236, %v1572
    %vm2919 = vcmask 15360
    %v2920 = vsel %vm2919, %v2918, %v1908
    %vm2921 = vcmask 23552
    %v2922 = vsel %vm2921, %v2920, %v2244
    %vm2923 = vcmask 31744
    %v2924 = vsel %vm2923, %v2922, %v2580
    %vm2925 = vcmask 39936
    %v2926 = vsel %vm2925, %v2924, %v2916
    %vm2927 = vcmask 48128
    %2928 = vst.msk [vmem:[#allocation4] sm:$0xff] %vm2927, %v2926
    // Predicated region
    $region18: #{seq2seq_forward.1} parent=1 // pred_check
      _
    $region19: #{seq2seq_forward.1} parent=1 // pred_check_branch
      %2930 = sbr.rel (0) target = $region21
    $region20: #{seq2seq_forward.1} parent=1 // pred_region
      %s2932 = ssub.s32 768, 768
      %2933 = vsyncadd [#allocation3], %s2932
      %s2934 = sshll.u32 [#allocation2], 4
      %s2935 = int_to_ptr.vmem [resolvable:$true] %s2934
      %2940 = dma.vmem_to_hbm [thread:$0]  %s2935, 768, %s4, [#allocation3], 128, 128, 8
    $region21: #{seq2seq_forward.1} parent=1 // pred_fallthru
      _
    // Predicated region
    $region22: #{seq2seq_forward.1} parent=1 // pred_check
      _
    $region23: #{seq2seq_forward.1} parent=1 // pred_check_branch
      %2942 = sbr.rel (0) target = $region25
    $region24: #{seq2seq_forward.1} parent=1 // pred_region
      %s2944 = ssub.s32 128, 128
      %2945 = vsyncadd [#allocation5], %s2944
      %s2947 = sshll.u32 [#allocation4], 4
      %s2948 = int_to_ptr.vmem [resolvable:$true] %s2947
      %2950 = dma.vmem_to_hbm [thread:$0]  %s2948, 128, %s5, [#allocation5]
    $region25: #{seq2seq_forward.1} parent=1 // pred_fallthru
      _
    // Predicated region
    $region26: #{seq2seq_forward.1} parent=1 // pred_check
      _
    $region27: #{seq2seq_forward.1} parent=1 // pred_check_branch
      %2952 = sbr.rel (0) target = $region29
    $region28: #{seq2seq_forward.1} parent=1 // pred_region
      %2953 = dma.done [#allocation3], 768
    $region29: #{seq2seq_forward.1} parent=1 // pred_fallthru
      _
    // Predicated region
    $region30: #{seq2seq_forward.1} parent=1 // pred_check
      _
    $region31: #{seq2seq_forward.1} parent=1 // pred_check_branch
      %2955 = sbr.rel (0) target = $region33
    $region32: #{seq2seq_forward.1} parent=1 // pred_region
      %2956 = dma.done [#allocation5], 128
    $region33: #{seq2seq_forward.1} parent=1 // pred_fallthru
      _
    %2957 = vsyncpa [#allocation3], 1
    %2958 = vsyncpa [#allocation5], 1

</llo_original>
